<compile_context>
chip_gen: v5e
topology: v5e:2x2
jax: 0.10.0
libtpu: 0.0.40
codegen_flags: <defaults>
</compile_context>

<pallas_src>
import jax
import jax.numpy as jnp
from jax.experimental import pallas as pl
from jax.experimental.pallas import tpu as pltpu

PAD_PRE = 8  # sublane-aligned leading halo in the padded conv-input scratch


# ------------------------------ kernel factory --------------------------------

def _make_speaker_encoder_kernel(prepared, T):
    frame_convs = prepared["frame_convs"]
    ds_convs = prepared["ds_convs"]
    dtype = prepared["dtype"]
    n_conv = len(frame_convs) + len(ds_convs)
    n_params = 4 * n_conv + 4  # (w, b, scale, shift) per conv + two linears (w, b)

    def kernel(*refs):
        lens_ref = refs[0]                      # (B,) int32 in SMEM (scalar prefetch)
        x_ref = refs[1]                         # (1, T, in_dim) f32
        p_refs = refs[2:2 + n_params]
        o_ref = refs[2 + n_params]              # (1, 1, out_dim) f32
        scratch = refs[3 + n_params:]

        conv_refs = [p_refs[4 * i:4 * i + 4] for i in range(n_conv)]
        fl_w, fl_b, dl_w, dl_b = p_refs[4 * n_conv:]

        # scratch: [frame pads...] + [ds pad, ds pool] * n_ds
        s_idx = 0
        frame_pads = []
        for _ in frame_convs:
            frame_pads.append(scratch[s_idx]); s_idx += 1
        ds_pads, ds_pool_sc = [], []
        for _ in ds_convs:
            ds_pads.append(scratch[s_idx]); ds_pool_sc.append(scratch[s_idx + 1]); s_idx += 2

        # Zero the padded scratch buffers once: the halo rows are never written
        # again; the interiors are rewritten on every grid step.
        @pl.when(pl.program_id(0) == 0)
        def _init():
            for pr in frame_pads + ds_pads:
                pr[...] = jnp.zeros_like(pr)

        def conv_relu_bn(h, pad_ref, w_ref, b_ref, sc_ref, sh_ref, K, P, t_len):
            # h: (t_len, Cin) f32 value.  One im2col matmul on the MXU.
            pad_ref[PAD_PRE:PAD_PRE + t_len, :] = h.astype(jnp.float32)
            hp = pad_ref[...]                               # (PAD_PRE + t_len + P, Cin)
            start = PAD_PRE - P
            cols = [hp[start + k:start + k + t_len, :].astype(dtype) for k in range(K)]
            slab = jnp.concatenate(cols, axis=-1)           # (t_len, K*Cin) bf16
            acc = jnp.dot(slab, w_ref[...], preferred_element_type=jnp.float32)
            acc = acc + b_ref[...]                          # conv bias
            acc = jnp.maximum(acc, 0.0)                     # ReLU
            return acc * sc_ref[...] + sh_ref[...]          # BatchNorm1d (inference)

        # ---------------- NormalEncoder: (conv->relu->bn->dropout[id]) x2 -> linear
        h = x_ref[0]                                        # (T, in_dim) f32
        ci = 0
        for li, layer in enumerate(frame_convs):
            w_r, b_r, sc_r, sh_r = conv_refs[ci]; ci += 1
            h = conv_relu_bn(h, frame_pads[li], w_r, b_r, sc_r, sh_r,
                             layer["k"], layer["p"], T)
            # TODO(synk): nn.Dropout(0.2) omitted - inference identity.
        h = jnp.dot(h.astype(dtype), fl_w[...],
                    preferred_element_type=jnp.float32) + fl_b[...]   # (T, D1) f32

        # ---------------- DownsampleEncoder: (conv->relu->bn->dropout[id]->pool2) x4
        t_cur = T
        for li, layer in enumerate(ds_convs):
            w_r, b_r, sc_r, sh_r = conv_refs[ci]; ci += 1
            acc = conv_relu_bn(h, ds_pads[li], w_r, b_r, sc_r, sh_r,
                               layer["k"], layer["p"], t_cur)
            # AvgPool1d(kernel=2, stride=2) via sublane-strided VMEM reads.
            pool = ds_pool_sc[li]
            pool[...] = acc
            half = t_cur // 2
            even = pool[pl.ds(0, half, stride=2), :]
            odd = pool[pl.ds(1, half, stride=2), :]
            h = (even + odd) * 0.5
            t_cur = half

        y = jnp.tanh(jnp.dot(h.astype(dtype), dl_w[...],
                             preferred_element_type=jnp.float32) + dl_b[...])  # (T/16, D2)

        # ---------------- SpeakerEncoder: mean over valid frames (t < out_len)
        n_valid = lens_ref[pl.program_id(0)]
        t_idx = jax.lax.broadcasted_iota(jnp.int32, y.shape, 0)
        valid = (t_idx < n_valid).astype(jnp.float32)
        summed = jnp.sum(y * valid, axis=0, keepdims=True)          # (1, D2)
        o_ref[0] = summed / n_valid.astype(jnp.float32)

    return kernel


# ------------------------------- forward wrapper -------------------------------

def speaker_encoder_forward(prepared, x, input_lens):
    B, T, cin0 = x.shape
    assert cin0 == prepared["in_dim"]
    frame_convs = prepared["frame_convs"]
    ds_convs = prepared["ds_convs"]
    dtype = prepared["dtype"]
    d_out = prepared["ds_lin"]["w"].shape[1]
    ds_factor = 2 ** len(ds_convs)                # == 16 with module defaults
    assert T % ds_factor == 0, "T must be divisible by the total pooling factor"

    out_lens = (input_lens // ds_factor).astype(jnp.int32)

    # Flat parameter list (all prepared/hoisted: im2col bf16 weights, folded BN).
    flat_params = []
    for layer in frame_convs + ds_convs:
        flat_params += [layer["w"], layer["b"], layer["scale"], layer["shift"]]
    flat_params += [prepared["frame_lin"]["w"], prepared["frame_lin"]["b"],
                    prepared["ds_lin"]["w"], prepared["ds_lin"]["b"]]

    def _rep(a):  # whole (small) array resident in VMEM, same block every step
        return pl.BlockSpec(a.shape, lambda b, lens: (0, 0))

    in_specs = [pl.BlockSpec((1, T, cin0), lambda b, lens: (b, 0, 0))]
    in_specs += [_rep(a) for a in flat_params]

    # VMEM scratch: one zero-haloed conv-input buffer per conv layer,
    # plus one pooling buffer per DownsampleEncoder layer.
    scratch_shapes = []
    for layer in frame_convs:
        scratch_shapes.append(
            pltpu.VMEM((PAD_PRE + T + layer["p"], layer["cin"]), jnp.float32))
    t_cur = T
    for layer in ds_convs:
        scratch_shapes.append(
            pltpu.VMEM((PAD_PRE + t_cur + layer["p"], layer["cin"]), jnp.float32))
        scratch_shapes.append(pltpu.VMEM((t_cur, layer["cout"]), jnp.float32))
        t_cur //= 2

    kernel = _make_speaker_encoder_kernel(prepared, T)

    out = pl.pallas_call(
        kernel,
        out_shape=jax.ShapeDtypeStruct((B, 1, d_out), jnp.float32),
        grid_spec=pltpu.PrefetchScalarGridSpec(
            num_scalar_prefetch=1,
            grid=(B,),
            in_specs=in_specs,
            out_specs=pl.BlockSpec((1, 1, d_out), lambda b, lens: (b, 0, 0)),
            scratch_shapes=scratch_shapes,
        ),
        compiler_params=pltpu.CompilerParams(dimension_semantics=("parallel",)),
    )(out_lens, x, *flat_params)
    return out[:, 0, :]


# ------------------------ one-time (hoisted) parameter prep --------------------

def prepare_params(params, *, eps=1e-5, compute_dtype=jnp.bfloat16):
    def prep_conv(conv_p, bn_p):
        w = conv_p["w"]                                    # PyTorch (Cout, Cin, K)
        cout, cin, k = w.shape
        w_flat = jnp.transpose(w, (2, 1, 0)).reshape(k * cin, cout).astype(compute_dtype)
        scale = bn_p["gamma"] / jnp.sqrt(bn_p["var"] + eps)
        shift = bn_p["beta"] - bn_p["mean"] * scale
        return {"w": w_flat,
                "b": conv_p["b"].reshape(1, cout).astype(jnp.float32),
                "scale": scale.reshape(1, cout).astype(jnp.float32),
                "shift": shift.reshape(1, cout).astype(jnp.float32),
                "k": k, "p": (k - 1) // 2, "cin": cin, "cout": cout}

    fe, de = params["frame"], params["ds"]
    return {
        "frame_convs": [prep_conv(c, b) for c, b in zip(fe["convs"], fe["bns"])],
        "ds_convs": [prep_conv(c, b) for c, b in zip(de["convs"], de["bns"])],
        "frame_lin": {"w": fe["out_w"].T.astype(compute_dtype),
                      "b": fe["out_b"].reshape(1, -1).astype(jnp.float32)},
        "ds_lin": {"w": de["out_w"].T.astype(compute_dtype),
                   "b": de["out_b"].reshape(1, -1).astype(jnp.float32)},
        "dtype": compute_dtype,
        "in_dim": fe["convs"][0]["w"].shape[1],
    }


# --------------------------------- parameter init ------------------------------

def init_params(key, *, in_dim, frame_channels, frame_kernel, frame_out,
                ds_channels, ds_kernel, ds_out):
    def conv_init(k, cin, cout, ks):
        k1, k2 = jax.random.split(k)
        bound = 1.0 / (cin * ks) ** 0.5
        return {"w": jax.random.uniform(k1, (cout, cin, ks), jnp.float32, -bound, bound),
                "b": jax.random.uniform(k2, (cout,), jnp.float32, -bound, bound)}

    def bn_init(k, c):
        k1, k2 = jax.random.split(k)
        return {"gamma": jax.random.uniform(k1, (c,), jnp.float32, 0.5, 1.5),
                "beta": jax.random.uniform(k2, (c,), jnp.float32, -0.5, 0.5),
                "mean": jnp.zeros((c,), jnp.float32),
                "var": jnp.ones((c,), jnp.float32)}

    def lin_init(k, cin, cout):
        k1, k2 = jax.random.split(k)
        bound = 1.0 / cin ** 0.5
        return {"w": jax.random.uniform(k1, (cout, cin), jnp.float32, -bound, bound),
                "b": jax.random.uniform(k2, (cout,), jnp.float32, -bound, bound)}

    def encoder_init(k, cin, channels, ks, out_dim):
        filters = [cin] + list(channels)
        convs, bns = [], []
        for i in range(len(channels)):
            k, kc, kb = jax.random.split(k, 3)
            convs.append(conv_init(kc, filters[i], filters[i + 1], ks))
            bns.append(bn_init(kb, filters[i + 1]))
        k, kl = jax.random.split(k)
        lin = lin_init(kl, channels[-1], out_dim)
        return {"convs": convs, "bns": bns, "out_w": lin["w"], "out_b": lin["b"]}

    kf, kd = jax.random.split(key)
    frame = encoder_init(kf, in_dim, frame_channels, frame_kernel, frame_out)
    ds = encoder_init(kd, frame_out, ds_channels, ds_kernel, ds_out)
    return {"frame": frame, "ds": ds}


# --------------------------------- pure-JAX reference --------------------------

def reference_forward(params, x, input_lens, *, eps=1e-5):
    hi = jax.lax.Precision.HIGHEST

    def conv_block(out, conv_p, bn_p):
        p = (conv_p["w"].shape[2] - 1) // 2
        out = jax.lax.conv_general_dilated(
            out, conv_p["w"], window_strides=(1,), padding=[(p, p)],
            dimension_numbers=("NCH", "OIH", "NCH"), precision=hi)
        out = out + conv_p["b"][None, :, None]
        out = jnp.maximum(out, 0.0)
        scale = bn_p["gamma"] / jnp.sqrt(bn_p["var"] + eps)
        shift = bn_p["beta"] - bn_p["mean"] * scale
        return out * scale[None, :, None] + shift[None, :, None]

    fe, de = params["frame"], params["ds"]
    out = jnp.transpose(x, (0, 2, 1))                        # (B, C, T)
    for conv_p, bn_p in zip(fe["convs"], fe["bns"]):
        out = conv_block(out, conv_p, bn_p)
    out = jnp.transpose(out, (0, 2, 1))
    out = jnp.dot(out, fe["out_w"].T, precision=hi) + fe["out_b"]

    out = jnp.transpose(out, (0, 2, 1))                      # (B, C, T)
    for conv_p, bn_p in zip(de["convs"], de["bns"]):
        out = conv_block(out, conv_p, bn_p)
        Bq, Cq, Tq = out.shape
        out = out[:, :, :(Tq // 2) * 2].reshape(Bq, Cq, Tq // 2, 2).mean(axis=-1)
    out = jnp.transpose(out, (0, 2, 1))                      # (B, T/16, C)
    out = jnp.tanh(jnp.dot(out, de["out_w"].T, precision=hi) + de["out_b"])

    t16 = out.shape[1]
    out_lens = input_lens // (2 ** len(de["convs"]))
    valid = (jnp.arange(t16)[None, :] < out_lens[:, None]).astype(jnp.float32)
    summed = jnp.sum(out * valid[:, :, None], axis=1)
    return summed / out_lens[:, None].astype(jnp.float32)


# ------------------------------------- main -------------------------------------

if __name__ == "__main__":
    # Small shapes, same structure as SpeakerEncoder (dims scaled down).
    B, T = 2, 64
    in_dim = 32
    frame_channels, frame_kernel, frame_out = (64, 64), 5, 64
    ds_channels, ds_kernel, ds_out = (32, 64, 128, 128), 3, 64

    key = jax.random.PRNGKey(0)
    kp, kx = jax.random.split(key)
    params = init_params(kp, in_dim=in_dim, frame_channels=frame_channels,
                         frame_kernel=frame_kernel, frame_out=frame_out,
                         ds_channels=ds_channels, ds_kernel=ds_kernel, ds_out=ds_out)
    x = jax.random.normal(kx, (B, T, in_dim), jnp.float32)
    input_lens = jnp.array([T, T - 16], jnp.int32)

    prepared = prepare_params(params)                       # hoisted one-time prep
    out = jax.block_until_ready(speaker_encoder_forward(prepared, x, input_lens))

    ref = jax.block_until_ready(reference_forward(params, x, input_lens))
    assert out.shape == (B, ds_out), out.shape
    max_err = float(jnp.max(jnp.abs(out - ref)))
    assert jnp.allclose(out, ref, rtol=5e-2, atol=5e-2), max_err  # bf16 matmuls, f32 acc
    print("KERNEL_OK")
</pallas_src>

<mosaic_0001>
module attributes {stable_mosaic.version = 11 : i64} {
  func.func @kernel(%arg0: i32, %arg1: memref<2xi32, #tpu.memory_space<smem>>, %arg2: memref<1x64x32xf32, #tpu.memory_space<vmem>>, %arg3: memref<160x64xbf16, #tpu.memory_space<vmem>>, %arg4: memref<1x64xf32, #tpu.memory_space<vmem>>, %arg5: memref<1x64xf32, #tpu.memory_space<vmem>>, %arg6: memref<1x64xf32, #tpu.memory_space<vmem>>, %arg7: memref<320x64xbf16, #tpu.memory_space<vmem>>, %arg8: memref<1x64xf32, #tpu.memory_space<vmem>>, %arg9: memref<1x64xf32, #tpu.memory_space<vmem>>, %arg10: memref<1x64xf32, #tpu.memory_space<vmem>>, %arg11: memref<192x32xbf16, #tpu.memory_space<vmem>>, %arg12: memref<1x32xf32, #tpu.memory_space<vmem>>, %arg13: memref<1x32xf32, #tpu.memory_space<vmem>>, %arg14: memref<1x32xf32, #tpu.memory_space<vmem>>, %arg15: memref<96x64xbf16, #tpu.memory_space<vmem>>, %arg16: memref<1x64xf32, #tpu.memory_space<vmem>>, %arg17: memref<1x64xf32, #tpu.memory_space<vmem>>, %arg18: memref<1x64xf32, #tpu.memory_space<vmem>>, %arg19: memref<192x128xbf16, #tpu.memory_space<vmem>>, %arg20: memref<1x128xf32, #tpu.memory_space<vmem>>, %arg21: memref<1x128xf32, #tpu.memory_space<vmem>>, %arg22: memref<1x128xf32, #tpu.memory_space<vmem>>, %arg23: memref<384x128xbf16, #tpu.memory_space<vmem>>, %arg24: memref<1x128xf32, #tpu.memory_space<vmem>>, %arg25: memref<1x128xf32, #tpu.memory_space<vmem>>, %arg26: memref<1x128xf32, #tpu.memory_space<vmem>>, %arg27: memref<64x64xbf16, #tpu.memory_space<vmem>>, %arg28: memref<1x64xf32, #tpu.memory_space<vmem>>, %arg29: memref<128x64xbf16, #tpu.memory_space<vmem>>, %arg30: memref<1x64xf32, #tpu.memory_space<vmem>>, %arg31: memref<1x1x64xf32, #tpu.memory_space<vmem>>, %arg32: memref<74x32xf32, #tpu.memory_space<vmem>>, %arg33: memref<74x64xf32, #tpu.memory_space<vmem>>, %arg34: memref<73x64xf32, #tpu.memory_space<vmem>>, %arg35: memref<64x32xf32, #tpu.memory_space<vmem>>, %arg36: memref<41x32xf32, #tpu.memory_space<vmem>>, %arg37: memref<32x64xf32, #tpu.memory_space<vmem>>, %arg38: memref<25x64xf32, #tpu.memory_space<vmem>>, %arg39: memref<16x128xf32, #tpu.memory_space<vmem>>, %arg40: memref<17x128xf32, #tpu.memory_space<vmem>>, %arg41: memref<8x128xf32, #tpu.memory_space<vmem>>) attributes {dimension_semantics = [#tpu.dimension_semantics<parallel>], iteration_bounds = array<i64: 2>, scalar_prefetch = 1 : i64, scratch_operands = 10 : i64, tpu.core_type = #tpu.core_type<tc>, window_params = [{transform_indices = @transform_0, window_bounds = array<i64: 1, 64, 32>}, {pipeline_mode = #tpu.pipeline_mode<synchronous>, transform_indices = @transform_1, window_bounds = array<i64: 160, 64>}, {pipeline_mode = #tpu.pipeline_mode<synchronous>, transform_indices = @transform_2, window_bounds = array<i64: 1, 64>}, {pipeline_mode = #tpu.pipeline_mode<synchronous>, transform_indices = @transform_3, window_bounds = array<i64: 1, 64>}, {pipeline_mode = #tpu.pipeline_mode<synchronous>, transform_indices = @transform_4, window_bounds = array<i64: 1, 64>}, {pipeline_mode = #tpu.pipeline_mode<synchronous>, transform_indices = @transform_5, window_bounds = array<i64: 320, 64>}, {pipeline_mode = #tpu.pipeline_mode<synchronous>, transform_indices = @transform_6, window_bounds = array<i64: 1, 64>}, {pipeline_mode = #tpu.pipeline_mode<synchronous>, transform_indices = @transform_7, window_bounds = array<i64: 1, 64>}, {pipeline_mode = #tpu.pipeline_mode<synchronous>, transform_indices = @transform_8, window_bounds = array<i64: 1, 64>}, {pipeline_mode = #tpu.pipeline_mode<synchronous>, transform_indices = @transform_9, window_bounds = array<i64: 192, 32>}, {pipeline_mode = #tpu.pipeline_mode<synchronous>, transform_indices = @transform_10, window_bounds = array<i64: 1, 32>}, {pipeline_mode = #tpu.pipeline_mode<synchronous>, transform_indices = @transform_11, window_bounds = array<i64: 1, 32>}, {pipeline_mode = #tpu.pipeline_mode<synchronous>, transform_indices = @transform_12, window_bounds = array<i64: 1, 32>}, {pipeline_mode = #tpu.pipeline_mode<synchronous>, transform_indices = @transform_13, window_bounds = array<i64: 96, 64>}, {pipeline_mode = #tpu.pipeline_mode<synchronous>, transform_indices = @transform_14, window_bounds = array<i64: 1, 64>}, {pipeline_mode = #tpu.pipeline_mode<synchronous>, transform_indices = @transform_15, window_bounds = array<i64: 1, 64>}, {pipeline_mode = #tpu.pipeline_mode<synchronous>, transform_indices = @transform_16, window_bounds = array<i64: 1, 64>}, {pipeline_mode = #tpu.pipeline_mode<synchronous>, transform_indices = @transform_17, window_bounds = array<i64: 192, 128>}, {pipeline_mode = #tpu.pipeline_mode<synchronous>, transform_indices = @transform_18, window_bounds = array<i64: 1, 128>}, {pipeline_mode = #tpu.pipeline_mode<synchronous>, transform_indices = @transform_19, window_bounds = array<i64: 1, 128>}, {pipeline_mode = #tpu.pipeline_mode<synchronous>, transform_indices = @transform_20, window_bounds = array<i64: 1, 128>}, {pipeline_mode = #tpu.pipeline_mode<synchronous>, transform_indices = @transform_21, window_bounds = array<i64: 384, 128>}, {pipeline_mode = #tpu.pipeline_mode<synchronous>, transform_indices = @transform_22, window_bounds = array<i64: 1, 128>}, {pipeline_mode = #tpu.pipeline_mode<synchronous>, transform_indices = @transform_23, window_bounds = array<i64: 1, 128>}, {pipeline_mode = #tpu.pipeline_mode<synchronous>, transform_indices = @transform_24, window_bounds = array<i64: 1, 128>}, {pipeline_mode = #tpu.pipeline_mode<synchronous>, transform_indices = @transform_25, window_bounds = array<i64: 64, 64>}, {pipeline_mode = #tpu.pipeline_mode<synchronous>, transform_indices = @transform_26, window_bounds = array<i64: 1, 64>}, {pipeline_mode = #tpu.pipeline_mode<synchronous>, transform_indices = @transform_27, window_bounds = array<i64: 128, 64>}, {pipeline_mode = #tpu.pipeline_mode<synchronous>, transform_indices = @transform_28, window_bounds = array<i64: 1, 64>}, {transform_indices = @transform_29, window_bounds = array<i64: 1, 1, 64>}]} {
    %c0_i32 = arith.constant 0 : i32
    %0 = arith.cmpi eq, %arg0, %c0_i32 : i32
    %1 = arith.extui %0 : i1 to i32
    %c0_i32_0 = arith.constant 0 : i32
    %2 = arith.cmpi ne, %1, %c0_i32_0 : i32
    scf.if %2 {
      %cst_126 = arith.constant 0.000000e+00 : f32
      %198 = vector.broadcast %cst_126 : f32 to vector<74x32xf32>
      %c0_127 = arith.constant 0 : index
      %c0_128 = arith.constant 0 : index
      %199 = vector.load %arg32[%c0_127, %c0_128] : memref<74x32xf32, #tpu.memory_space<vmem>>, vector<74x32xf32>
      tpu.vector_store %arg32[%c0_127, %c0_128], %198 {strides = array<i32>} : memref<74x32xf32, #tpu.memory_space<vmem>>, vector<74x32xf32>,
      %cst_129 = arith.constant 0.000000e+00 : f32
      %200 = vector.broadcast %cst_129 : f32 to vector<74x64xf32>
      %c0_130 = arith.constant 0 : index
      %c0_131 = arith.constant 0 : index
      %201 = vector.load %arg33[%c0_130, %c0_131] : memref<74x64xf32, #tpu.memory_space<vmem>>, vector<74x64xf32>
      tpu.vector_store %arg33[%c0_130, %c0_131], %200 {strides = array<i32>} : memref<74x64xf32, #tpu.memory_space<vmem>>, vector<74x64xf32>,
      %cst_132 = arith.constant 0.000000e+00 : f32
      %202 = vector.broadcast %cst_132 : f32 to vector<73x64xf32>
      %c0_133 = arith.constant 0 : index
      %c0_134 = arith.constant 0 : index
      %203 = vector.load %arg34[%c0_133, %c0_134] : memref<73x64xf32, #tpu.memory_space<vmem>>, vector<73x64xf32>
      tpu.vector_store %arg34[%c0_133, %c0_134], %202 {strides = array<i32>} : memref<73x64xf32, #tpu.memory_space<vmem>>, vector<73x64xf32>,
      %cst_135 = arith.constant 0.000000e+00 : f32
      %204 = vector.broadcast %cst_135 : f32 to vector<41x32xf32>
      %c0_136 = arith.constant 0 : index
      %c0_137 = arith.constant 0 : index
      %205 = vector.load %arg36[%c0_136, %c0_137] : memref<41x32xf32, #tpu.memory_space<vmem>>, vector<41x32xf32>
      tpu.vector_store %arg36[%c0_136, %c0_137], %204 {strides = array<i32>} : memref<41x32xf32, #tpu.memory_space<vmem>>, vector<41x32xf32>,
      %cst_138 = arith.constant 0.000000e+00 : f32
      %206 = vector.broadcast %cst_138 : f32 to vector<25x64xf32>
      %c0_139 = arith.constant 0 : index
      %c0_140 = arith.constant 0 : index
      %207 = vector.load %arg38[%c0_139, %c0_140] : memref<25x64xf32, #tpu.memory_space<vmem>>, vector<25x64xf32>
      tpu.vector_store %arg38[%c0_139, %c0_140], %206 {strides = array<i32>} : memref<25x64xf32, #tpu.memory_space<vmem>>, vector<25x64xf32>,
      %cst_141 = arith.constant 0.000000e+00 : f32
      %208 = vector.broadcast %cst_141 : f32 to vector<17x128xf32>
      %c0_142 = arith.constant 0 : index
      %c0_143 = arith.constant 0 : index
      %209 = vector.load %arg40[%c0_142, %c0_143] : memref<17x128xf32, #tpu.memory_space<vmem>>, vector<17x128xf32>
      tpu.vector_store %arg40[%c0_142, %c0_143], %208 {strides = array<i32>} : memref<17x128xf32, #tpu.memory_space<vmem>>, vector<17x128xf32>,
    } else {
    }
    %c0 = arith.constant 0 : index
    %c0_1 = arith.constant 0 : index
    %c0_2 = arith.constant 0 : index
    %3 = vector.load %arg2[%c0, %c0_1, %c0_2] : memref<1x64x32xf32, #tpu.memory_space<vmem>>, vector<1x64x32xf32>
    %4 = vector.shape_cast %3 : vector<1x64x32xf32> to vector<64x32xf32>
    %c8 = arith.constant 8 : index
    %c0_3 = arith.constant 0 : index
    %5 = vector.load %arg32[%c8, %c0_3] : memref<74x32xf32, #tpu.memory_space<vmem>>, vector<64x32xf32>
    tpu.vector_store %arg32[%c8, %c0_3], %4 {strides = array<i32>} : memref<74x32xf32, #tpu.memory_space<vmem>>, vector<64x32xf32>,
    %c0_4 = arith.constant 0 : index
    %c0_5 = arith.constant 0 : index
    %6 = vector.load %arg32[%c0_4, %c0_5] : memref<74x32xf32, #tpu.memory_space<vmem>>, vector<74x32xf32>
    %7 = vector.extract_strided_slice %6 {offsets = [6, 0], sizes = [64, 32], strides = [1, 1]} : vector<74x32xf32> to vector<64x32xf32>
    %8 = arith.truncf %7 : vector<64x32xf32> to vector<64x32xbf16>
    %9 = vector.extract_strided_slice %6 {offsets = [7, 0], sizes = [64, 32], strides = [1, 1]} : vector<74x32xf32> to vector<64x32xf32>
    %10 = arith.truncf %9 : vector<64x32xf32> to vector<64x32xbf16>
    %11 = vector.extract_strided_slice %6 {offsets = [8, 0], sizes = [64, 32], strides = [1, 1]} : vector<74x32xf32> to vector<64x32xf32>
    %12 = arith.truncf %11 : vector<64x32xf32> to vector<64x32xbf16>
    %13 = vector.extract_strided_slice %6 {offsets = [9, 0], sizes = [64, 32], strides = [1, 1]} : vector<74x32xf32> to vector<64x32xf32>
    %14 = arith.truncf %13 : vector<64x32xf32> to vector<64x32xbf16>
    %15 = vector.extract_strided_slice %6 {offsets = [10, 0], sizes = [64, 32], strides = [1, 1]} : vector<74x32xf32> to vector<64x32xf32>
    %16 = arith.truncf %15 : vector<64x32xf32> to vector<64x32xbf16>
    %17 = tpu.concatenate %8, %10, %12, %14, %16 in 1 : vector<64x32xbf16>, vector<64x32xbf16>, vector<64x32xbf16>, vector<64x32xbf16>, vector<64x32xbf16> -> vector<64x160xbf16>
    %c0_6 = arith.constant 0 : index
    %c0_7 = arith.constant 0 : index
    %18 = vector.load %arg3[%c0_6, %c0_7] : memref<160x64xbf16, #tpu.memory_space<vmem>>, vector<160x64xbf16>
    %cst = arith.constant dense<0.000000e+00> : vector<64x64xf32>
    %19 = tpu.matmul %17, %18, %cst {dimension_numbers = #tpu.dot_dimension_numbers<[1], [0], [0], [1], [0, 0, 1, 1], [], []>} : vector<64x160xbf16>, vector<160x64xbf16>, vector<64x64xf32> -> vector<64x64xf32>
    %c0_8 = arith.constant 0 : index
    %c0_9 = arith.constant 0 : index
    %20 = vector.load %arg4[%c0_8, %c0_9] : memref<1x64xf32, #tpu.memory_space<vmem>>, vector<1x64xf32>
    %21 = vector.broadcast %20 : vector<1x64xf32> to vector<64x64xf32>
    %22 = arith.addf %19, %21 : vector<64x64xf32>
    %cst_10 = arith.constant 0.000000e+00 : f32
    %23 = vector.broadcast %cst_10 : f32 to vector<64x64xf32>
    %24 = arith.maximumf %22, %23 : vector<64x64xf32>
    %c0_11 = arith.constant 0 : index
    %c0_12 = arith.constant 0 : index
    %25 = vector.load %arg5[%c0_11, %c0_12] : memref<1x64xf32, #tpu.memory_space<vmem>>, vector<1x64xf32>
    %26 = vector.broadcast %25 : vector<1x64xf32> to vector<64x64xf32>
    %27 = arith.mulf %24, %26 : vector<64x64xf32>
    %c0_13 = arith.constant 0 : index
    %c0_14 = arith.constant 0 : index
    %28 = vector.load %arg6[%c0_13, %c0_14] : memref<1x64xf32, #tpu.memory_space<vmem>>, vector<1x64xf32>
    %29 = vector.broadcast %28 : vector<1x64xf32> to vector<64x64xf32>
    %30 = arith.addf %27, %29 : vector<64x64xf32>
    %c8_15 = arith.constant 8 : index
    %c0_16 = arith.constant 0 : index
    %31 = vector.load %arg33[%c8_15, %c0_16] : memref<74x64xf32, #tpu.memory_space<vmem>>, vector<64x64xf32>
    tpu.vector_store %arg33[%c8_15, %c0_16], %30 {strides = array<i32>} : memref<74x64xf32, #tpu.memory_space<vmem>>, vector<64x64xf32>,
    %c0_17 = arith.constant 0 : index
    %c0_18 = arith.constant 0 : index
    %32 = vector.load %arg33[%c0_17, %c0_18] : memref<74x64xf32, #tpu.memory_space<vmem>>, vector<74x64xf32>
    %33 = vector.extract_strided_slice %32 {offsets = [6, 0], sizes = [64, 64], strides = [1, 1]} : vector<74x64xf32> to vector<64x64xf32>
    %34 = arith.truncf %33 : vector<64x64xf32> to vector<64x64xbf16>
    %35 = vector.extract_strided_slice %32 {offsets = [7, 0], sizes = [64, 64], strides = [1, 1]} : vector<74x64xf32> to vector<64x64xf32>
    %36 = arith.truncf %35 : vector<64x64xf32> to vector<64x64xbf16>
    %37 = vector.extract_strided_slice %32 {offsets = [8, 0], sizes = [64, 64], strides = [1, 1]} : vector<74x64xf32> to vector<64x64xf32>
    %38 = arith.truncf %37 : vector<64x64xf32> to vector<64x64xbf16>
    %39 = vector.extract_strided_slice %32 {offsets = [9, 0], sizes = [64, 64], strides = [1, 1]} : vector<74x64xf32> to vector<64x64xf32>
    %40 = arith.truncf %39 : vector<64x64xf32> to vector<64x64xbf16>
    %41 = vector.extract_strided_slice %32 {offsets = [10, 0], sizes = [64, 64], strides = [1, 1]} : vector<74x64xf32> to vector<64x64xf32>
    %42 = arith.truncf %41 : vector<64x64xf32> to vector<64x64xbf16>
    %43 = tpu.concatenate %34, %36, %38, %40, %42 in 1 : vector<64x64xbf16>, vector<64x64xbf16>, vector<64x64xbf16>, vector<64x64xbf16>, vector<64x64xbf16> -> vector<64x320xbf16>
    %c0_19 = arith.constant 0 : index
    %c0_20 = arith.constant 0 : index
    %44 = vector.load %arg7[%c0_19, %c0_20] : memref<320x64xbf16, #tpu.memory_space<vmem>>, vector<320x64xbf16>
    %cst_21 = arith.constant dense<0.000000e+00> : vector<64x64xf32>
    %45 = tpu.matmul %43, %44, %cst_21 {dimension_numbers = #tpu.dot_dimension_numbers<[1], [0], [0], [1], [0, 0, 1, 1], [], []>} : vector<64x320xbf16>, vector<320x64xbf16>, vector<64x64xf32> -> vector<64x64xf32>
    %c0_22 = arith.constant 0 : index
    %c0_23 = arith.constant 0 : index
    %46 = vector.load %arg8[%c0_22, %c0_23] : memref<1x64xf32, #tpu.memory_space<vmem>>, vector<1x64xf32>
    %47 = vector.broadcast %46 : vector<1x64xf32> to vector<64x64xf32>
    %48 = arith.addf %45, %47 : vector<64x64xf32>
    %cst_24 = arith.constant 0.000000e+00 : f32
    %49 = vector.broadcast %cst_24 : f32 to vector<64x64xf32>
    %50 = arith.maximumf %48, %49 : vector<64x64xf32>
    %c0_25 = arith.constant 0 : index
    %c0_26 = arith.constant 0 : index
    %51 = vector.load %arg9[%c0_25, %c0_26] : memref<1x64xf32, #tpu.memory_space<vmem>>, vector<1x64xf32>
    %52 = vector.broadcast %51 : vector<1x64xf32> to vector<64x64xf32>
    %53 = arith.mulf %50, %52 : vector<64x64xf32>
    %c0_27 = arith.constant 0 : index
    %c0_28 = arith.constant 0 : index
    %54 = vector.load %arg10[%c0_27, %c0_28] : memref<1x64xf32, #tpu.memory_space<vmem>>, vector<1x64xf32>
    %55 = vector.broadcast %54 : vector<1x64xf32> to vector<64x64xf32>
    %56 = arith.addf %53, %55 : vector<64x64xf32>
    %57 = arith.truncf %56 : vector<64x64xf32> to vector<64x64xbf16>
    %c0_29 = arith.constant 0 : index
    %c0_30 = arith.constant 0 : index
    %58 = vector.load %arg27[%c0_29, %c0_30] : memref<64x64xbf16, #tpu.memory_space<vmem>>, vector<64x64xbf16>
    %cst_31 = arith.constant dense<0.000000e+00> : vector<64x64xf32>
    %59 = tpu.matmul %57, %58, %cst_31 {dimension_numbers = #tpu.dot_dimension_numbers<[1], [0], [0], [1], [0, 0, 1, 1], [], []>} : vector<64x64xbf16>, vector<64x64xbf16>, vector<64x64xf32> -> vector<64x64xf32>
    %c0_32 = arith.constant 0 : index
    %c0_33 = arith.constant 0 : index
    %60 = vector.load %arg28[%c0_32, %c0_33] : memref<1x64xf32, #tpu.memory_space<vmem>>, vector<1x64xf32>
    %61 = vector.broadcast %60 : vector<1x64xf32> to vector<64x64xf32>
    %62 = arith.addf %59, %61 : vector<64x64xf32>
    %c8_34 = arith.constant 8 : index
    %c0_35 = arith.constant 0 : index
    %63 = vector.load %arg34[%c8_34, %c0_35] : memref<73x64xf32, #tpu.memory_space<vmem>>, vector<64x64xf32>
    tpu.vector_store %arg34[%c8_34, %c0_35], %62 {strides = array<i32>} : memref<73x64xf32, #tpu.memory_space<vmem>>, vector<64x64xf32>,
    %c0_36 = arith.constant 0 : index
    %c0_37 = arith.constant 0 : index
    %64 = vector.load %arg34[%c0_36, %c0_37] : memref<73x64xf32, #tpu.memory_space<vmem>>, vector<73x64xf32>
    %65 = vector.extract_strided_slice %64 {offsets = [7, 0], sizes = [64, 64], strides = [1, 1]} : vector<73x64xf32> to vector<64x64xf32>
    %66 = arith.truncf %65 : vector<64x64xf32> to vector<64x64xbf16>
    %67 = vector.extract_strided_slice %64 {offsets = [8, 0], sizes = [64, 64], strides = [1, 1]} : vector<73x64xf32> to vector<64x64xf32>
    %68 = arith.truncf %67 : vector<64x64xf32> to vector<64x64xbf16>
    %69 = vector.extract_strided_slice %64 {offsets = [9, 0], sizes = [64, 64], strides = [1, 1]} : vector<73x64xf32> to vector<64x64xf32>
    %70 = arith.truncf %69 : vector<64x64xf32> to vector<64x64xbf16>
    %71 = tpu.concatenate %66, %68, %70 in 1 : vector<64x64xbf16>, vector<64x64xbf16>, vector<64x64xbf16> -> vector<64x192xbf16>
    %c0_38 = arith.constant 0 : index
    %c0_39 = arith.constant 0 : index
    %72 = vector.load %arg11[%c0_38, %c0_39] : memref<192x32xbf16, #tpu.memory_space<vmem>>, vector<192x32xbf16>
    %cst_40 = arith.constant dense<0.000000e+00> : vector<64x32xf32>
    %73 = tpu.matmul %71, %72, %cst_40 {dimension_numbers = #tpu.dot_dimension_numbers<[1], [0], [0], [1], [0, 0, 1, 1], [], []>} : vector<64x192xbf16>, vector<192x32xbf16>, vector<64x32xf32> -> vector<64x32xf32>
    %c0_41 = arith.constant 0 : index
    %c0_42 = arith.constant 0 : index
    %74 = vector.load %arg12[%c0_41, %c0_42] : memref<1x32xf32, #tpu.memory_space<vmem>>, vector<1x32xf32>
    %75 = vector.broadcast %74 : vector<1x32xf32> to vector<64x32xf32>
    %76 = arith.addf %73, %75 : vector<64x32xf32>
    %cst_43 = arith.constant 0.000000e+00 : f32
    %77 = vector.broadcast %cst_43 : f32 to vector<64x32xf32>
    %78 = arith.maximumf %76, %77 : vector<64x32xf32>
    %c0_44 = arith.constant 0 : index
    %c0_45 = arith.constant 0 : index
    %79 = vector.load %arg13[%c0_44, %c0_45] : memref<1x32xf32, #tpu.memory_space<vmem>>, vector<1x32xf32>
    %80 = vector.broadcast %79 : vector<1x32xf32> to vector<64x32xf32>
    %81 = arith.mulf %78, %80 : vector<64x32xf32>
    %c0_46 = arith.constant 0 : index
    %c0_47 = arith.constant 0 : index
    %82 = vector.load %arg14[%c0_46, %c0_47] : memref<1x32xf32, #tpu.memory_space<vmem>>, vector<1x32xf32>
    %83 = vector.broadcast %82 : vector<1x32xf32> to vector<64x32xf32>
    %84 = arith.addf %81, %83 : vector<64x32xf32>
    %c0_48 = arith.constant 0 : index
    %c0_49 = arith.constant 0 : index
    %85 = vector.load %arg35[%c0_48, %c0_49] : memref<64x32xf32, #tpu.memory_space<vmem>>, vector<64x32xf32>
    tpu.vector_store %arg35[%c0_48, %c0_49], %84 {strides = array<i32>} : memref<64x32xf32, #tpu.memory_space<vmem>>, vector<64x32xf32>,
    %c0_50 = arith.constant 0 : index
    %c0_51 = arith.constant 0 : index
    %86 = tpu.strided_load %arg35[%c0_50, %c0_51] {strides = array<i32: 2, 1>} : memref<64x32xf32, #tpu.memory_space<vmem>>, vector<32x32xf32>
    %c1 = arith.constant 1 : index
    %c0_52 = arith.constant 0 : index
    %87 = tpu.strided_load %arg35[%c1, %c0_52] {strides = array<i32: 2, 1>} : memref<64x32xf32, #tpu.memory_space<vmem>>, vector<32x32xf32>
    %88 = arith.addf %86, %87 : vector<32x32xf32>
    %cst_53 = arith.constant 5.000000e-01 : f32
    %89 = vector.broadcast %cst_53 : f32 to vector<32x32xf32>
    %90 = arith.mulf %88, %89 : vector<32x32xf32>
    %c8_54 = arith.constant 8 : index
    %c0_55 = arith.constant 0 : index
    %91 = vector.load %arg36[%c8_54, %c0_55] : memref<41x32xf32, #tpu.memory_space<vmem>>, vector<32x32xf32>
    tpu.vector_store %arg36[%c8_54, %c0_55], %90 {strides = array<i32>} : memref<41x32xf32, #tpu.memory_space<vmem>>, vector<32x32xf32>,
    %c0_56 = arith.constant 0 : index
    %c0_57 = arith.constant 0 : index
    %92 = vector.load %arg36[%c0_56, %c0_57] : memref<41x32xf32, #tpu.memory_space<vmem>>, vector<41x32xf32>
    %93 = vector.extract_strided_slice %92 {offsets = [7, 0], sizes = [32, 32], strides = [1, 1]} : vector<41x32xf32> to vector<32x32xf32>
    %94 = arith.truncf %93 : vector<32x32xf32> to vector<32x32xbf16>
    %95 = vector.extract_strided_slice %92 {offsets = [8, 0], sizes = [32, 32], strides = [1, 1]} : vector<41x32xf32> to vector<32x32xf32>
    %96 = arith.truncf %95 : vector<32x32xf32> to vector<32x32xbf16>
    %97 = vector.extract_strided_slice %92 {offsets = [9, 0], sizes = [32, 32], strides = [1, 1]} : vector<41x32xf32> to vector<32x32xf32>
    %98 = arith.truncf %97 : vector<32x32xf32> to vector<32x32xbf16>
    %99 = tpu.concatenate %94, %96, %98 in 1 : vector<32x32xbf16>, vector<32x32xbf16>, vector<32x32xbf16> -> vector<32x96xbf16>
    %c0_58 = arith.constant 0 : index
    %c0_59 = arith.constant 0 : index
    %100 = vector.load %arg15[%c0_58, %c0_59] : memref<96x64xbf16, #tpu.memory_space<vmem>>, vector<96x64xbf16>
    %cst_60 = arith.constant dense<0.000000e+00> : vector<32x64xf32>
    %101 = tpu.matmul %99, %100, %cst_60 {dimension_numbers = #tpu.dot_dimension_numbers<[1], [0], [0], [1], [0, 0, 1, 1], [], []>} : vector<32x96xbf16>, vector<96x64xbf16>, vector<32x64xf32> -> vector<32x64xf32>
    %c0_61 = arith.constant 0 : index
    %c0_62 = arith.constant 0 : index
    %102 = vector.load %arg16[%c0_61, %c0_62] : memref<1x64xf32, #tpu.memory_space<vmem>>, vector<1x64xf32>
    %103 = vector.broadcast %102 : vector<1x64xf32> to vector<32x64xf32>
    %104 = arith.addf %101, %103 : vector<32x64xf32>
    %cst_63 = arith.constant 0.000000e+00 : f32
    %105 = vector.broadcast %cst_63 : f32 to vector<32x64xf32>
    %106 = arith.maximumf %104, %105 : vector<32x64xf32>
    %c0_64 = arith.constant 0 : index
    %c0_65 = arith.constant 0 : index
    %107 = vector.load %arg17[%c0_64, %c0_65] : memref<1x64xf32, #tpu.memory_space<vmem>>, vector<1x64xf32>
    %108 = vector.broadcast %107 : vector<1x64xf32> to vector<32x64xf32>
    %109 = arith.mulf %106, %108 : vector<32x64xf32>
    %c0_66 = arith.constant 0 : index
    %c0_67 = arith.constant 0 : index
    %110 = vector.load %arg18[%c0_66, %c0_67] : memref<1x64xf32, #tpu.memory_space<vmem>>, vector<1x64xf32>
    %111 = vector.broadcast %110 : vector<1x64xf32> to vector<32x64xf32>
    %112 = arith.addf %109, %111 : vector<32x64xf32>
    %c0_68 = arith.constant 0 : index
    %c0_69 = arith.constant 0 : index
    %113 = vector.load %arg37[%c0_68, %c0_69] : memref<32x64xf32, #tpu.memory_space<vmem>>, vector<32x64xf32>
    tpu.vector_store %arg37[%c0_68, %c0_69], %112 {strides = array<i32>} : memref<32x64xf32, #tpu.memory_space<vmem>>, vector<32x64xf32>,
    %c0_70 = arith.constant 0 : index
    %c0_71 = arith.constant 0 : index
    %114 = tpu.strided_load %arg37[%c0_70, %c0_71] {strides = array<i32: 2, 1>} : memref<32x64xf32, #tpu.memory_space<vmem>>, vector<16x64xf32>
    %c1_72 = arith.constant 1 : index
    %c0_73 = arith.constant 0 : index
    %115 = tpu.strided_load %arg37[%c1_72, %c0_73] {strides = array<i32: 2, 1>} : memref<32x64xf32, #tpu.memory_space<vmem>>, vector<16x64xf32>
    %116 = arith.addf %114, %115 : vector<16x64xf32>
    %cst_74 = arith.constant 5.000000e-01 : f32
    %117 = vector.broadcast %cst_74 : f32 to vector<16x64xf32>
    %118 = arith.mulf %116, %117 : vector<16x64xf32>
    %c8_75 = arith.constant 8 : index
    %c0_76 = arith.constant 0 : index
    %119 = vector.load %arg38[%c8_75, %c0_76] : memref<25x64xf32, #tpu.memory_space<vmem>>, vector<16x64xf32>
    tpu.vector_store %arg38[%c8_75, %c0_76], %118 {strides = array<i32>} : memref<25x64xf32, #tpu.memory_space<vmem>>, vector<16x64xf32>,
    %c0_77 = arith.constant 0 : index
    %c0_78 = arith.constant 0 : index
    %120 = vector.load %arg38[%c0_77, %c0_78] : memref<25x64xf32, #tpu.memory_space<vmem>>, vector<25x64xf32>
    %121 = vector.extract_strided_slice %120 {offsets = [7, 0], sizes = [16, 64], strides = [1, 1]} : vector<25x64xf32> to vector<16x64xf32>
    %122 = arith.truncf %121 : vector<16x64xf32> to vector<16x64xbf16>
    %123 = vector.extract_strided_slice %120 {offsets = [8, 0], sizes = [16, 64], strides = [1, 1]} : vector<25x64xf32> to vector<16x64xf32>
    %124 = arith.truncf %123 : vector<16x64xf32> to vector<16x64xbf16>
    %125 = vector.extract_strided_slice %120 {offsets = [9, 0], sizes = [16, 64], strides = [1, 1]} : vector<25x64xf32> to vector<16x64xf32>
    %126 = arith.truncf %125 : vector<16x64xf32> to vector<16x64xbf16>
    %127 = tpu.concatenate %122, %124, %126 in 1 : vector<16x64xbf16>, vector<16x64xbf16>, vector<16x64xbf16> -> vector<16x192xbf16>
    %c0_79 = arith.constant 0 : index
    %c0_80 = arith.constant 0 : index
    %128 = vector.load %arg19[%c0_79, %c0_80] : memref<192x128xbf16, #tpu.memory_space<vmem>>, vector<192x128xbf16>
    %cst_81 = arith.constant dense<0.000000e+00> : vector<16x128xf32>
    %129 = tpu.matmul %127, %128, %cst_81 {dimension_numbers = #tpu.dot_dimension_numbers<[1], [0], [0], [1], [0, 0, 1, 1], [], []>} : vector<16x192xbf16>, vector<192x128xbf16>, vector<16x128xf32> -> vector<16x128xf32>
    %c0_82 = arith.constant 0 : index
    %c0_83 = arith.constant 0 : index
    %130 = vector.load %arg20[%c0_82, %c0_83] : memref<1x128xf32, #tpu.memory_space<vmem>>, vector<1x128xf32>
    %131 = vector.broadcast %130 : vector<1x128xf32> to vector<16x128xf32>
    %132 = arith.addf %129, %131 : vector<16x128xf32>
    %cst_84 = arith.constant 0.000000e+00 : f32
    %133 = vector.broadcast %cst_84 : f32 to vector<16x128xf32>
    %134 = arith.maximumf %132, %133 : vector<16x128xf32>
    %c0_85 = arith.constant 0 : index
    %c0_86 = arith.constant 0 : index
    %135 = vector.load %arg21[%c0_85, %c0_86] : memref<1x128xf32, #tpu.memory_space<vmem>>, vector<1x128xf32>
    %136 = vector.broadcast %135 : vector<1x128xf32> to vector<16x128xf32>
    %137 = arith.mulf %134, %136 : vector<16x128xf32>
    %c0_87 = arith.constant 0 : index
    %c0_88 = arith.constant 0 : index
    %138 = vector.load %arg22[%c0_87, %c0_88] : memref<1x128xf32, #tpu.memory_space<vmem>>, vector<1x128xf32>
    %139 = vector.broadcast %138 : vector<1x128xf32> to vector<16x128xf32>
    %140 = arith.addf %137, %139 : vector<16x128xf32>
    %c0_89 = arith.constant 0 : index
    %c0_90 = arith.constant 0 : index
    %141 = vector.load %arg39[%c0_89, %c0_90] : memref<16x128xf32, #tpu.memory_space<vmem>>, vector<16x128xf32>
    tpu.vector_store %arg39[%c0_89, %c0_90], %140 {strides = array<i32>} : memref<16x128xf32, #tpu.memory_space<vmem>>, vector<16x128xf32>,
    %c0_91 = arith.constant 0 : index
    %c0_92 = arith.constant 0 : index
    %142 = tpu.strided_load %arg39[%c0_91, %c0_92] {strides = array<i32: 2, 1>} : memref<16x128xf32, #tpu.memory_space<vmem>>, vector<8x128xf32>
    %c1_93 = arith.constant 1 : index
    %c0_94 = arith.constant 0 : index
    %143 = tpu.strided_load %arg39[%c1_93, %c0_94] {strides = array<i32: 2, 1>} : memref<16x128xf32, #tpu.memory_space<vmem>>, vector<8x128xf32>
    %144 = arith.addf %142, %143 : vector<8x128xf32>
    %cst_95 = arith.constant 5.000000e-01 : f32
    %145 = vector.broadcast %cst_95 : f32 to vector<8x128xf32>
    %146 = arith.mulf %144, %145 : vector<8x128xf32>
    %c8_96 = arith.constant 8 : index
    %c0_97 = arith.constant 0 : index
    %147 = vector.load %arg40[%c8_96, %c0_97] : memref<17x128xf32, #tpu.memory_space<vmem>>, vector<8x128xf32>
    tpu.vector_store %arg40[%c8_96, %c0_97], %146 {strides = array<i32>} : memref<17x128xf32, #tpu.memory_space<vmem>>, vector<8x128xf32>,
    %c0_98 = arith.constant 0 : index
    %c0_99 = arith.constant 0 : index
    %148 = vector.load %arg40[%c0_98, %c0_99] : memref<17x128xf32, #tpu.memory_space<vmem>>, vector<17x128xf32>
    %149 = vector.extract_strided_slice %148 {offsets = [7, 0], sizes = [8, 128], strides = [1, 1]} : vector<17x128xf32> to vector<8x128xf32>
    %150 = arith.truncf %149 : vector<8x128xf32> to vector<8x128xbf16>
    %151 = vector.extract_strided_slice %148 {offsets = [8, 0], sizes = [8, 128], strides = [1, 1]} : vector<17x128xf32> to vector<8x128xf32>
    %152 = arith.truncf %151 : vector<8x128xf32> to vector<8x128xbf16>
    %153 = vector.extract_strided_slice %148 {offsets = [9, 0], sizes = [8, 128], strides = [1, 1]} : vector<17x128xf32> to vector<8x128xf32>
    %154 = arith.truncf %153 : vector<8x128xf32> to vector<8x128xbf16>
    %155 = tpu.concatenate %150, %152, %154 in 1 : vector<8x128xbf16>, vector<8x128xbf16>, vector<8x128xbf16> -> vector<8x384xbf16>
    %c0_100 = arith.constant 0 : index
    %c0_101 = arith.constant 0 : index
    %156 = vector.load %arg23[%c0_100, %c0_101] : memref<384x128xbf16, #tpu.memory_space<vmem>>, vector<384x128xbf16>
    %cst_102 = arith.constant dense<0.000000e+00> : vector<8x128xf32>
    %157 = tpu.matmul %155, %156, %cst_102 {dimension_numbers = #tpu.dot_dimension_numbers<[1], [0], [0], [1], [0, 0, 1, 1], [], []>} : vector<8x384xbf16>, vector<384x128xbf16>, vector<8x128xf32> -> vector<8x128xf32>
    %c0_103 = arith.constant 0 : index
    %c0_104 = arith.constant 0 : index
    %158 = vector.load %arg24[%c0_103, %c0_104] : memref<1x128xf32, #tpu.memory_space<vmem>>, vector<1x128xf32>
    %159 = vector.broadcast %158 : vector<1x128xf32> to vector<8x128xf32>
    %160 = arith.addf %157, %159 : vector<8x128xf32>
    %cst_105 = arith.constant 0.000000e+00 : f32
    %161 = vector.broadcast %cst_105 : f32 to vector<8x128xf32>
    %162 = arith.maximumf %160, %161 : vector<8x128xf32>
    %c0_106 = arith.constant 0 : index
    %c0_107 = arith.constant 0 : index
    %163 = vector.load %arg25[%c0_106, %c0_107] : memref<1x128xf32, #tpu.memory_space<vmem>>, vector<1x128xf32>
    %164 = vector.broadcast %163 : vector<1x128xf32> to vector<8x128xf32>
    %165 = arith.mulf %162, %164 : vector<8x128xf32>
    %c0_108 = arith.constant 0 : index
    %c0_109 = arith.constant 0 : index
    %166 = vector.load %arg26[%c0_108, %c0_109] : memref<1x128xf32, #tpu.memory_space<vmem>>, vector<1x128xf32>
    %167 = vector.broadcast %166 : vector<1x128xf32> to vector<8x128xf32>
    %168 = arith.addf %165, %167 : vector<8x128xf32>
    %c0_110 = arith.constant 0 : index
    %c0_111 = arith.constant 0 : index
    %169 = vector.load %arg41[%c0_110, %c0_111] : memref<8x128xf32, #tpu.memory_space<vmem>>, vector<8x128xf32>
    tpu.vector_store %arg41[%c0_110, %c0_111], %168 {strides = array<i32>} : memref<8x128xf32, #tpu.memory_space<vmem>>, vector<8x128xf32>,
    %c0_112 = arith.constant 0 : index
    %c0_113 = arith.constant 0 : index
    %170 = tpu.strided_load %arg41[%c0_112, %c0_113] {strides = array<i32: 2, 1>} : memref<8x128xf32, #tpu.memory_space<vmem>>, vector<4x128xf32>
    %c1_114 = arith.constant 1 : index
    %c0_115 = arith.constant 0 : index
    %171 = tpu.strided_load %arg41[%c1_114, %c0_115] {strides = array<i32: 2, 1>} : memref<8x128xf32, #tpu.memory_space<vmem>>, vector<4x128xf32>
    %172 = arith.addf %170, %171 : vector<4x128xf32>
    %cst_116 = arith.constant 5.000000e-01 : f32
    %173 = vector.broadcast %cst_116 : f32 to vector<4x128xf32>
    %174 = arith.mulf %172, %173 : vector<4x128xf32>
    %175 = arith.truncf %174 : vector<4x128xf32> to vector<4x128xbf16>
    %c0_117 = arith.constant 0 : index
    %c0_118 = arith.constant 0 : index
    %176 = vector.load %arg29[%c0_117, %c0_118] : memref<128x64xbf16, #tpu.memory_space<vmem>>, vector<128x64xbf16>
    %cst_119 = arith.constant dense<0.000000e+00> : vector<4x64xf32>
    %177 = tpu.matmul %175, %176, %cst_119 {dimension_numbers = #tpu.dot_dimension_numbers<[1], [0], [0], [1], [0, 0, 1, 1], [], []>} : vector<4x128xbf16>, vector<128x64xbf16>, vector<4x64xf32> -> vector<4x64xf32>
    %c0_120 = arith.constant 0 : index
    %c0_121 = arith.constant 0 : index
    %178 = vector.load %arg30[%c0_120, %c0_121] : memref<1x64xf32, #tpu.memory_space<vmem>>, vector<1x64xf32>
    %179 = vector.broadcast %178 : vector<1x64xf32> to vector<4x64xf32>
    %180 = arith.addf %177, %179 : vector<4x64xf32>
    %181 = math.tanh %180 : vector<4x64xf32>
    %182 = arith.index_cast %arg0 : i32 to index
    %183 = memref.load %arg1[%182] : memref<2xi32, #tpu.memory_space<smem>>
    %184 = tpu.iota {dimensions = array<i32: 0>} : vector<4x64xi32>
    %185 = vector.broadcast %183 : i32 to vector<4x64xi32>
    %186 = arith.cmpi slt, %184, %185 : vector<4x64xi32>
    %187 = arith.extui %186 : vector<4x64xi1> to vector<4x64xi32>
    %188 = arith.sitofp %187 : vector<4x64xi32> to vector<4x64xf32>
    %189 = arith.mulf %181, %188 : vector<4x64xf32>
    %cst_122 = arith.constant dense<0.000000e+00> : vector<64xf32>
    %190 = vector.multi_reduction <add>, %189, %cst_122 [0] : vector<4x64xf32> to vector<64xf32>
    %191 = vector.shape_cast %190 : vector<64xf32> to vector<1x64xf32>
    %192 = arith.sitofp %183 : i32 to f32
    %193 = vector.broadcast %192 : f32 to vector<1x64xf32>
    %194 = arith.divf %191, %193 : vector<1x64xf32>
    %c0_123 = arith.constant 0 : index
    %c0_124 = arith.constant 0 : index
    %c0_125 = arith.constant 0 : index
    %195 = vector.load %arg31[%c0_123, %c0_124, %c0_125] : memref<1x1x64xf32, #tpu.memory_space<vmem>>, vector<1x1x64xf32>
    %196 = vector.shape_cast %195 : vector<1x1x64xf32> to vector<1x64xf32>
    %197 = vector.shape_cast %194 : vector<1x64xf32> to vector<1x1x64xf32>
    tpu.vector_store %arg31[%c0_123, %c0_124, %c0_125], %197 {strides = array<i32>} : memref<1x1x64xf32, #tpu.memory_space<vmem>>, vector<1x1x64xf32>,
    return
  }
  func.func @transform_0(%arg0: i32, %arg1: memref<2xi32, #tpu.memory_space<smem>>) -> (i32, i32, i32) {
    %c0_i32 = arith.constant 0 : i32
    %c0_i32_0 = arith.constant 0 : i32
    %c0_i32_1 = arith.constant 0 : i32
    return %arg0, %c0_i32, %c0_i32_0 : i32, i32, i32
  }
  func.func @transform_1(%arg0: i32, %arg1: memref<2xi32, #tpu.memory_space<smem>>) -> (i32, i32) {
    %c0_i32 = arith.constant 0 : i32
    %c0_i32_0 = arith.constant 0 : i32
    %c0_i32_1 = arith.constant 0 : i32
    return %c0_i32, %c0_i32_0 : i32, i32
  }
  func.func @transform_2(%arg0: i32, %arg1: memref<2xi32, #tpu.memory_space<smem>>) -> (i32, i32) {
    %c0_i32 = arith.constant 0 : i32
    %c0_i32_0 = arith.constant 0 : i32
    %c0_i32_1 = arith.constant 0 : i32
    return %c0_i32, %c0_i32_0 : i32, i32
  }
  func.func @transform_3(%arg0: i32, %arg1: memref<2xi32, #tpu.memory_space<smem>>) -> (i32, i32) {
    %c0_i32 = arith.constant 0 : i32
    %c0_i32_0 = arith.constant 0 : i32
    %c0_i32_1 = arith.constant 0 : i32
    return %c0_i32, %c0_i32_0 : i32, i32
  }
  func.func @transform_4(%arg0: i32, %arg1: memref<2xi32, #tpu.memory_space<smem>>) -> (i32, i32) {
    %c0_i32 = arith.constant 0 : i32
    %c0_i32_0 = arith.constant 0 : i32
    %c0_i32_1 = arith.constant 0 : i32
    return %c0_i32, %c0_i32_0 : i32, i32
  }
  func.func @transform_5(%arg0: i32, %arg1: memref<2xi32, #tpu.memory_space<smem>>) -> (i32, i32) {
    %c0_i32 = arith.constant 0 : i32
    %c0_i32_0 = arith.constant 0 : i32
    %c0_i32_1 = arith.constant 0 : i32
    return %c0_i32, %c0_i32_0 : i32, i32
  }
  func.func @transform_6(%arg0: i32, %arg1: memref<2xi32, #tpu.memory_space<smem>>) -> (i32, i32) {
    %c0_i32 = arith.constant 0 : i32
    %c0_i32_0 = arith.constant 0 : i32
    %c0_i32_1 = arith.constant 0 : i32
    return %c0_i32, %c0_i32_0 : i32, i32
  }
  func.func @transform_7(%arg0: i32, %arg1: memref<2xi32, #tpu.memory_space<smem>>) -> (i32, i32) {
    %c0_i32 = arith.constant 0 : i32
    %c0_i32_0 = arith.constant 0 : i32
    %c0_i32_1 = arith.constant 0 : i32
    return %c0_i32, %c0_i32_0 : i32, i32
  }
  func.func @transform_8(%arg0: i32, %arg1: memref<2xi32, #tpu.memory_space<smem>>) -> (i32, i32) {
    %c0_i32 = arith.constant 0 : i32
    %c0_i32_0 = arith.constant 0 : i32
    %c0_i32_1 = arith.constant 0 : i32
    return %c0_i32, %c0_i32_0 : i32, i32
  }
  func.func @transform_9(%arg0: i32, %arg1: memref<2xi32, #tpu.memory_space<smem>>) -> (i32, i32) {
    %c0_i32 = arith.constant 0 : i32
    %c0_i32_0 = arith.constant 0 : i32
    %c0_i32_1 = arith.constant 0 : i32
    return %c0_i32, %c0_i32_0 : i32, i32
  }
  func.func @transform_10(%arg0: i32, %arg1: memref<2xi32, #tpu.memory_space<smem>>) -> (i32, i32) {
    %c0_i32 = arith.constant 0 : i32
    %c0_i32_0 = arith.constant 0 : i32
    %c0_i32_1 = arith.constant 0 : i32
    return %c0_i32, %c0_i32_0 : i32, i32
  }
  func.func @transform_11(%arg0: i32, %arg1: memref<2xi32, #tpu.memory_space<smem>>) -> (i32, i32) {
    %c0_i32 = arith.constant 0 : i32
    %c0_i32_0 = arith.constant 0 : i32
    %c0_i32_1 = arith.constant 0 : i32
    return %c0_i32, %c0_i32_0 : i32, i32
  }
  func.func @transform_12(%arg0: i32, %arg1: memref<2xi32, #tpu.memory_space<smem>>) -> (i32, i32) {
    %c0_i32 = arith.constant 0 : i32
    %c0_i32_0 = arith.constant 0 : i32
    %c0_i32_1 = arith.constant 0 : i32
    return %c0_i32, %c0_i32_0 : i32, i32
  }
  func.func @transform_13(%arg0: i32, %arg1: memref<2xi32, #tpu.memory_space<smem>>) -> (i32, i32) {
    %c0_i32 = arith.constant 0 : i32
    %c0_i32_0 = arith.constant 0 : i32
    %c0_i32_1 = arith.constant 0 : i32
    return %c0_i32, %c0_i32_0 : i32, i32
  }
  func.func @transform_14(%arg0: i32, %arg1: memref<2xi32, #tpu.memory_space<smem>>) -> (i32, i32) {
    %c0_i32 = arith.constant 0 : i32
    %c0_i32_0 = arith.constant 0 : i32
    %c0_i32_1 = arith.constant 0 : i32
    return %c0_i32, %c0_i32_0 : i32, i32
  }
  func.func @transform_15(%arg0: i32, %arg1: memref<2xi32, #tpu.memory_space<smem>>) -> (i32, i32) {
    %c0_i32 = arith.constant 0 : i32
    %c0_i32_0 = arith.constant 0 : i32
    %c0_i32_1 = arith.constant 0 : i32
    return %c0_i32, %c0_i32_0 : i32, i32
  }
  func.func @transform_16(%arg0: i32, %arg1: memref<2xi32, #tpu.memory_space<smem>>) -> (i32, i32) {
    %c0_i32 = arith.constant 0 : i32
    %c0_i32_0 = arith.constant 0 : i32
    %c0_i32_1 = arith.constant 0 : i32
    return %c0_i32, %c0_i32_0 : i32, i32
  }
  func.func @transform_17(%arg0: i32, %arg1: memref<2xi32, #tpu.memory_space<smem>>) -> (i32, i32) {
    %c0_i32 = arith.constant 0 : i32
    %c0_i32_0 = arith.constant 0 : i32
    %c0_i32_1 = arith.constant 0 : i32
    return %c0_i32, %c0_i32_0 : i32, i32
  }
  func.func @transform_18(%arg0: i32, %arg1: memref<2xi32, #tpu.memory_space<smem>>) -> (i32, i32) {
    %c0_i32 = arith.constant 0 : i32
    %c0_i32_0 = arith.constant 0 : i32
    %c0_i32_1 = arith.constant 0 : i32
    return %c0_i32, %c0_i32_0 : i32, i32
  }
  func.func @transform_19(%arg0: i32, %arg1: memref<2xi32, #tpu.memory_space<smem>>) -> (i32, i32) {
    %c0_i32 = arith.constant 0 : i32
    %c0_i32_0 = arith.constant 0 : i32
    %c0_i32_1 = arith.constant 0 : i32
    return %c0_i32, %c0_i32_0 : i32, i32
  }
  func.func @transform_20(%arg0: i32, %arg1: memref<2xi32, #tpu.memory_space<smem>>) -> (i32, i32) {
    %c0_i32 = arith.constant 0 : i32
    %c0_i32_0 = arith.constant 0 : i32
    %c0_i32_1 = arith.constant 0 : i32
    return %c0_i32, %c0_i32_0 : i32, i32
  }
  func.func @transform_21(%arg0: i32, %arg1: memref<2xi32, #tpu.memory_space<smem>>) -> (i32, i32) {
    %c0_i32 = arith.constant 0 : i32
    %c0_i32_0 = arith.constant 0 : i32
    %c0_i32_1 = arith.constant 0 : i32
    return %c0_i32, %c0_i32_0 : i32, i32
  }
  func.func @transform_22(%arg0: i32, %arg1: memref<2xi32, #tpu.memory_space<smem>>) -> (i32, i32) {
    %c0_i32 = arith.constant 0 : i32
    %c0_i32_0 = arith.constant 0 : i32
    %c0_i32_1 = arith.constant 0 : i32
    return %c0_i32, %c0_i32_0 : i32, i32
  }
  func.func @transform_23(%arg0: i32, %arg1: memref<2xi32, #tpu.memory_space<smem>>) -> (i32, i32) {
    %c0_i32 = arith.constant 0 : i32
    %c0_i32_0 = arith.constant 0 : i32
    %c0_i32_1 = arith.constant 0 : i32
    return %c0_i32, %c0_i32_0 : i32, i32
  }
  func.func @transform_24(%arg0: i32, %arg1: memref<2xi32, #tpu.memory_space<smem>>) -> (i32, i32) {
    %c0_i32 = arith.constant 0 : i32
    %c0_i32_0 = arith.constant 0 : i32
    %c0_i32_1 = arith.constant 0 : i32
    return %c0_i32, %c0_i32_0 : i32, i32
  }
  func.func @transform_25(%arg0: i32, %arg1: memref<2xi32, #tpu.memory_space<smem>>) -> (i32, i32) {
    %c0_i32 = arith.constant 0 : i32
    %c0_i32_0 = arith.constant 0 : i32
    %c0_i32_1 = arith.constant 0 : i32
    return %c0_i32, %c0_i32_0 : i32, i32
  }
  func.func @transform_26(%arg0: i32, %arg1: memref<2xi32, #tpu.memory_space<smem>>) -> (i32, i32) {
    %c0_i32 = arith.constant 0 : i32
    %c0_i32_0 = arith.constant 0 : i32
    %c0_i32_1 = arith.constant 0 : i32
    return %c0_i32, %c0_i32_0 : i32, i32
  }
  func.func @transform_27(%arg0: i32, %arg1: memref<2xi32, #tpu.memory_space<smem>>) -> (i32, i32) {
    %c0_i32 = arith.constant 0 : i32
    %c0_i32_0 = arith.constant 0 : i32
    %c0_i32_1 = arith.constant 0 : i32
    return %c0_i32, %c0_i32_0 : i32, i32
  }
  func.func @transform_28(%arg0: i32, %arg1: memref<2xi32, #tpu.memory_space<smem>>) -> (i32, i32) {
    %c0_i32 = arith.constant 0 : i32
    %c0_i32_0 = arith.constant 0 : i32
    %c0_i32_1 = arith.constant 0 : i32
    return %c0_i32, %c0_i32_0 : i32, i32
  }
  func.func @transform_29(%arg0: i32, %arg1: memref<2xi32, #tpu.memory_space<smem>>) -> (i32, i32, i32) {
    %c0_i32 = arith.constant 0 : i32
    %c0_i32_0 = arith.constant 0 : i32
    %c0_i32_1 = arith.constant 0 : i32
    return %arg0, %c0_i32, %c0_i32_0 : i32, i32, i32
  }
}

</mosaic_0001>

<llo_original>
// kernel: tpu_custom_call.1
$region0: #{tpu_custom_call.1}
  #allocation0 [shape = 'u32[]', space=smem, size = 0x4, offset = 0x4, fixed_abs, tag = 'smem constant byte address 0x4 - core index']
  #allocation1 [shape = 'u32[72,128]{1,0:T(1,128)}', space=vmem, size = 0x9000, scoped, tag = 'internal scratch']
  #allocation2 [shape = 'f32[74,32]{1,0:T(8,128)}', space=vmem, size = 0xa000, scoped, tag = 'scratch operand']
  #allocation3 [shape = 'f32[74,64]{1,0:T(8,128)}', space=vmem, size = 0xa000, scoped, tag = 'scratch operand']
  #allocation4 [shape = 'f32[73,64]{1,0:T(8,128)}', space=vmem, size = 0xa000, scoped, tag = 'scratch operand']
  #allocation5 [shape = 'f32[64,32]{1,0:T(8,128)}', space=vmem, size = 0x8000, scoped, tag = 'scratch operand']
  #allocation6 [shape = 'f32[41,32]{1,0:T(8,128)}', space=vmem, size = 0x6000, scoped, tag = 'scratch operand']
  #allocation7 [shape = 'f32[32,64]{1,0:T(8,128)}', space=vmem, size = 0x4000, scoped, tag = 'scratch operand']
  #allocation8 [shape = 'f32[25,64]{1,0:T(8,128)}', space=vmem, size = 0x4000, scoped, tag = 'scratch operand']
  #allocation9 [shape = 'f32[16,128]{1,0:T(8,128)}', space=vmem, size = 0x2000, scoped, tag = 'scratch operand']
  #allocation10 [shape = 'f32[17,128]{1,0:T(8,128)}', space=vmem, size = 0x3000, scoped, tag = 'scratch operand']
  #allocation11 [shape = 'f32[8,128]{1,0:T(8,128)}', space=vmem, size = 0x1000, scoped, tag = 'scratch operand']
  #allocation12 [shape = 's32[1]{0}', space=sflag, size = 0x4, scoped, tag = 'scoped memory for tpu_custom_call.1']
  #allocation13 [shape = 'u8[512]{0}', space=smem, size = 0x200, scoped, tag = 'prefetched SMEM operand 0']
  %s0 = inlined_call_operand.smem [shape: u32[31], index: -1, kind: input, shape index: {}]
  %s1 = sld [smem:[%s0]]
  %s2 = scalar_lea.smem %s0, 1
  %s3 = sld [smem:[%s2]]
  %s4 = scalar_lea.smem %s0, 2
  %s5 = sld [smem:[%s4]]
  %s6 = scalar_lea.smem %s0, 3
  %s7 = sld [smem:[%s6]]
  %s8 = scalar_lea.smem %s0, 4
  %s9 = sld [smem:[%s8]]
  %s10 = scalar_lea.smem %s0, 5
  %s11 = sld [smem:[%s10]]
  %s12 = scalar_lea.smem %s0, 6
  %s13 = sld [smem:[%s12]]
  %s14 = scalar_lea.smem %s0, 7
  %s15 = sld [smem:[%s14]]
  %s16 = scalar_lea.smem %s0, 8
  %s17 = sld [smem:[%s16]]
  %s18 = scalar_lea.smem %s0, 9
  %s19 = sld [smem:[%s18]]
  %s20 = scalar_lea.smem %s0, 10
  %s21 = sld [smem:[%s20]]
  %s22 = scalar_lea.smem %s0, 11
  %s23 = sld [smem:[%s22]]
  %s24 = scalar_lea.smem %s0, 12
  %s25 = sld [smem:[%s24]]
  %s26 = scalar_lea.smem %s0, 13
  %s27 = sld [smem:[%s26]]
  %s28 = scalar_lea.smem %s0, 14
  %s29 = sld [smem:[%s28]]
  %s30 = scalar_lea.smem %s0, 15
  %s31 = sld [smem:[%s30]]
  %s32 = scalar_lea.smem %s0, 16
  %s33 = sld [smem:[%s32]]
  %s34 = scalar_lea.smem %s0, 17
  %s35 = sld [smem:[%s34]]
  %s36 = scalar_lea.smem %s0, 18
  %s37 = sld [smem:[%s36]]
  %s38 = scalar_lea.smem %s0, 19
  %s39 = sld [smem:[%s38]]
  %s40 = scalar_lea.smem %s0, 20
  %s41 = sld [smem:[%s40]]
  %s42 = scalar_lea.smem %s0, 21
  %s43 = sld [smem:[%s42]]
  %s44 = scalar_lea.smem %s0, 22
  %s45 = sld [smem:[%s44]]
  %s46 = scalar_lea.smem %s0, 23
  %s47 = sld [smem:[%s46]]
  %s48 = scalar_lea.smem %s0, 24
  %s49 = sld [smem:[%s48]]
  %s50 = scalar_lea.smem %s0, 25
  %s51 = sld [smem:[%s50]]
  %s52 = scalar_lea.smem %s0, 26
  %s53 = sld [smem:[%s52]]
  %s54 = scalar_lea.smem %s0, 27
  %s55 = sld [smem:[%s54]]
  %s56 = scalar_lea.smem %s0, 28
  %s57 = sld [smem:[%s56]]
  %s58 = scalar_lea.smem %s0, 29
  %s59 = sld [smem:[%s58]]
  %s60 = scalar_lea.smem %s0, 30
  %s61 = sld [smem:[%s60]]
  %s62 = sld [smem:[#allocation0]]
  $region153: #{tpu_custom_call.1} parent=0
    _
  %s64 = ssub.s32 1, %s62
  %s65 = scalar_select 0, %s64, %s62
  %s67 = sshll.u32 %s1, 4
  %s68 = int_to_ptr.vmem [resolvable:$true] %s67
  %70 = dma.vmem_to_smem %s68, 16, [#allocation13], [#allocation12]
  %72 = dma.done [#allocation12], 16
  %73 = sfence
  $region1: #{tpu_custom_call.1} parent=0
    #allocation14 [shape = 'u8[1024]{0}', space=vmem, size = 0x400, scoped, tag = 'output window, operand 0']
    #allocation15 [shape = 's32[2]{0}', space=sflag, size = 0x8, scoped, tag = 'scoped memory for tpu_custom_call.1']
    %74 = vsyncpa [#allocation15], 0
    %s75 = scalar_lea.sflag [#allocation15], 1
    %76 = vsyncpa %s75, 0
    loop: start=0, step=1, limit=4
    $region2: #{tpu_custom_call.1} parent=1 // loop_pre_header
      _
    $region3: #{tpu_custom_call.1} parent=1 // loop_header
      %s78 = sphi 0, %s82
      %p79 = scmp.ge.s32.totalorder %s78, 4
      %s88 = sphi 0, %s90
      %s91 = sphi 0, %s88
      %s92 = sphi 0, %s91
      %s108 = sphi 0, %s92
      %s112 = sphi 0, %s112
      %s114 = sphi 0, %s112
      %s115 = sphi 0, %s114
      %s129 = sphi 0, %s115
      %s133 = sphi 0, %s133
      %s135 = sphi 0, %s133
      %s136 = sphi 0, %s135
      %s150 = sphi 0, %s136
      %s154 = sphi 0, %s154
      %s156 = sphi 0, %s154
      %s157 = sphi 0, %s156
      %s171 = sphi 0, %s157
      %s175 = sphi 0, %s175
      %s177 = sphi 0, %s175
      %s178 = sphi 0, %s177
      %s192 = sphi 0, %s178
      %s196 = sphi 0, %s196
      %s198 = sphi 0, %s196
      %s199 = sphi 0, %s198
      %s213 = sphi 0, %s199
      %s217 = sphi 0, %s217
      %s219 = sphi 0, %s217
      %s220 = sphi 0, %s219
      %s234 = sphi 0, %s220
      %s238 = sphi 0, %s238
      %s240 = sphi 0, %s238
      %s241 = sphi 0, %s240
      %s255 = sphi 0, %s241
      %s259 = sphi 0, %s259
      %s261 = sphi 0, %s259
      %s262 = sphi 0, %s261
      %s276 = sphi 0, %s262
      %s280 = sphi 0, %s280
      %s282 = sphi 0, %s280
      %s283 = sphi 0, %s282
      %s297 = sphi 0, %s283
      %s301 = sphi 0, %s301
      %s303 = sphi 0, %s301
      %s304 = sphi 0, %s303
      %s318 = sphi 0, %s304
      %s322 = sphi 0, %s322
      %s324 = sphi 0, %s322
      %s325 = sphi 0, %s324
      %s339 = sphi 0, %s325
      %s343 = sphi 0, %s343
      %s345 = sphi 0, %s343
      %s346 = sphi 0, %s345
      %s360 = sphi 0, %s346
      %s364 = sphi 0, %s364
      %s366 = sphi 0, %s364
      %s367 = sphi 0, %s366
      %s381 = sphi 0, %s367
      %s385 = sphi 0, %s385
      %s387 = sphi 0, %s385
      %s388 = sphi 0, %s387
      %s402 = sphi 0, %s388
      %s406 = sphi 0, %s406
      %s408 = sphi 0, %s406
      %s409 = sphi 0, %s408
      %s423 = sphi 0, %s409
      %s427 = sphi 0, %s427
      %s429 = sphi 0, %s427
      %s430 = sphi 0, %s429
      %s444 = sphi 0, %s430
      %s448 = sphi 0, %s448
      %s450 = sphi 0, %s448
      %s451 = sphi 0, %s450
      %s465 = sphi 0, %s451
      %s469 = sphi 0, %s469
      %s471 = sphi 0, %s469
      %s472 = sphi 0, %s471
      %s486 = sphi 0, %s472
      %s490 = sphi 0, %s490
      %s492 = sphi 0, %s490
      %s493 = sphi 0, %s492
      %s507 = sphi 0, %s493
      %s511 = sphi 0, %s511
      %s513 = sphi 0, %s511
      %s514 = sphi 0, %s513
      %s528 = sphi 0, %s514
      %s532 = sphi 0, %s532
      %s534 = sphi 0, %s532
      %s535 = sphi 0, %s534
      %s549 = sphi 0, %s535
      %s553 = sphi 0, %s553
      %s555 = sphi 0, %s553
      %s556 = sphi 0, %s555
      %s570 = sphi 0, %s556
      %s574 = sphi 0, %s574
      %s576 = sphi 0, %s574
      %s577 = sphi 0, %s576
      %s591 = sphi 0, %s577
      %s595 = sphi 0, %s595
      %s597 = sphi 0, %s595
      %s598 = sphi 0, %s597
      %s612 = sphi 0, %s598
      %s616 = sphi 0, %s616
      %s618 = sphi 0, %s616
      %s619 = sphi 0, %s618
      %s633 = sphi 0, %s619
      %s637 = sphi 0, %s637
      %s639 = sphi 0, %s637
      %s640 = sphi 0, %s639
      %s654 = sphi 0, %s640
      %s658 = sphi 0, %s658
      %s660 = sphi 0, %s658
      %s661 = sphi 0, %s660
      %s675 = sphi 0, %s661
      %s679 = sphi 0, %s679
      %s681 = sphi 0, %s679
      %s682 = sphi 0, %s681
      %s696 = sphi 0, %s682
      %s702 = sphi 0, %s704
      %s705 = sphi 0, %s702
      %s706 = sphi 0, %s705
      %s722 = sphi 0, %s706
    $region4: #{tpu_custom_call.1} parent=1 // loop_header_branch
      %81 = sbr.rel (%p79) target = $region8
    $region5: #{tpu_custom_call.1} parent=1 // loop_body
      %s83 = ssub.s32 %s78, 1
      %s84 = ssub.s32 %s78, 2
      %s85 = sadd.s32 %s78, 1
      %s86 = ssub.s32 %s78, %s85
      %p87 = scmp.eq.s32.totalorder %s86, 0
      %s89 = sadd.s32 %s88, 1
      %s90 = scalar_select %p87, %s88, %s89
      %p93 = pneg %p87
      %p94 = scmp.eq.s32.totalorder %s78, 1
      %p95 = por %p93, %p94
      %p96 = scmp.ne.s32.totalorder %s88, %s91
      %p97 = scmp.eq.s32.totalorder %s78, 0
      %p98 = por %p96, %p97
      %p99 = scmp.ne.s32.totalorder %s88, %s91
      %p100 = scmp.eq.s32.totalorder %s83, 1
      %p101 = por %p99, %p100
      %p102 = scmp.ne.s32.totalorder %s91, %s92
      %p103 = scmp.eq.s32.totalorder %s83, 0
      %p104 = por %p102, %p103
      %p105 = scmp.ne.s32.totalorder %s91, %s92
      %p106 = scmp.eq.s32.totalorder %s84, 1
      %p107 = por %p105, %p106
      %p109 = scmp.ne.s32.totalorder %s92, %s108
      %p110 = scmp.eq.s32.totalorder %s84, 0
      %p111 = por %p109, %p110
      %s113 = sadd.s32 %s112, 1
      %p116 = scmp.eq.s32.totalorder %s78, 1
      %p117 = scmp.ne.s32.totalorder %s112, %s114
      %p118 = scmp.eq.s32.totalorder %s78, 0
      %p119 = por %p117, %p118
      %p120 = scmp.ne.s32.totalorder %s112, %s114
      %p121 = scmp.eq.s32.totalorder %s83, 1
      %p122 = por %p120, %p121
      %p123 = scmp.ne.s32.totalorder %s114, %s115
      %p124 = scmp.eq.s32.totalorder %s83, 0
      %p125 = por %p123, %p124
      %p126 = scmp.ne.s32.totalorder %s114, %s115
      %p127 = scmp.eq.s32.totalorder %s84, 1
      %p128 = por %p126, %p127
      %p130 = scmp.ne.s32.totalorder %s115, %s129
      %p131 = scmp.eq.s32.totalorder %s84, 0
      %p132 = por %p130, %p131
      %s134 = sadd.s32 %s133, 1
      %p137 = scmp.eq.s32.totalorder %s78, 1
      %p138 = scmp.ne.s32.totalorder %s133, %s135
      %p139 = scmp.eq.s32.totalorder %s78, 0
      %p140 = por %p138, %p139
      %p141 = scmp.ne.s32.totalorder %s133, %s135
      %p142 = scmp.eq.s32.totalorder %s83, 1
      %p143 = por %p141, %p142
      %p144 = scmp.ne.s32.totalorder %s135, %s136
      %p145 = scmp.eq.s32.totalorder %s83, 0
      %p146 = por %p144, %p145
      %p147 = scmp.ne.s32.totalorder %s135, %s136
      %p148 = scmp.eq.s32.totalorder %s84, 1
      %p149 = por %p147, %p148
      %p151 = scmp.ne.s32.totalorder %s136, %s150
      %p152 = scmp.eq.s32.totalorder %s84, 0
      %p153 = por %p151, %p152
      %s155 = sadd.s32 %s154, 1
      %p158 = scmp.eq.s32.totalorder %s78, 1
      %p159 = scmp.ne.s32.totalorder %s154, %s156
      %p160 = scmp.eq.s32.totalorder %s78, 0
      %p161 = por %p159, %p160
      %p162 = scmp.ne.s32.totalorder %s154, %s156
      %p163 = scmp.eq.s32.totalorder %s83, 1
      %p164 = por %p162, %p163
      %p165 = scmp.ne.s32.totalorder %s156, %s157
      %p166 = scmp.eq.s32.totalorder %s83, 0
      %p167 = por %p165, %p166
      %p168 = scmp.ne.s32.totalorder %s156, %s157
      %p169 = scmp.eq.s32.totalorder %s84, 1
      %p170 = por %p168, %p169
      %p172 = scmp.ne.s32.totalorder %s157, %s171
      %p173 = scmp.eq.s32.totalorder %s84, 0
      %p174 = por %p172, %p173
      %s176 = sadd.s32 %s175, 1
      %p179 = scmp.eq.s32.totalorder %s78, 1
      %p180 = scmp.ne.s32.totalorder %s175, %s177
      %p181 = scmp.eq.s32.totalorder %s78, 0
      %p182 = por %p180, %p181
      %p183 = scmp.ne.s32.totalorder %s175, %s177
      %p184 = scmp.eq.s32.totalorder %s83, 1
      %p185 = por %p183, %p184
      %p186 = scmp.ne.s32.totalorder %s177, %s178
      %p187 = scmp.eq.s32.totalorder %s83, 0
      %p188 = por %p186, %p187
      %p189 = scmp.ne.s32.totalorder %s177, %s178
      %p190 = scmp.eq.s32.totalorder %s84, 1
      %p191 = por %p189, %p190
      %p193 = scmp.ne.s32.totalorder %s178, %s192
      %p194 = scmp.eq.s32.totalorder %s84, 0
      %p195 = por %p193, %p194
      %s197 = sadd.s32 %s196, 1
      %p200 = scmp.eq.s32.totalorder %s78, 1
      %p201 = scmp.ne.s32.totalorder %s196, %s198
      %p202 = scmp.eq.s32.totalorder %s78, 0
      %p203 = por %p201, %p202
      %p204 = scmp.ne.s32.totalorder %s196, %s198
      %p205 = scmp.eq.s32.totalorder %s83, 1
      %p206 = por %p204, %p205
      %p207 = scmp.ne.s32.totalorder %s198, %s199
      %p208 = scmp.eq.s32.totalorder %s83, 0
      %p209 = por %p207, %p208
      %p210 = scmp.ne.s32.totalorder %s198, %s199
      %p211 = scmp.eq.s32.totalorder %s84, 1
      %p212 = por %p210, %p211
      %p214 = scmp.ne.s32.totalorder %s199, %s213
      %p215 = scmp.eq.s32.totalorder %s84, 0
      %p216 = por %p214, %p215
      %s218 = sadd.s32 %s217, 1
      %p221 = scmp.eq.s32.totalorder %s78, 1
      %p222 = scmp.ne.s32.totalorder %s217, %s219
      %p223 = scmp.eq.s32.totalorder %s78, 0
      %p224 = por %p222, %p223
      %p225 = scmp.ne.s32.totalorder %s217, %s219
      %p226 = scmp.eq.s32.totalorder %s83, 1
      %p227 = por %p225, %p226
      %p228 = scmp.ne.s32.totalorder %s219, %s220
      %p229 = scmp.eq.s32.totalorder %s83, 0
      %p230 = por %p228, %p229
      %p231 = scmp.ne.s32.totalorder %s219, %s220
      %p232 = scmp.eq.s32.totalorder %s84, 1
      %p233 = por %p231, %p232
      %p235 = scmp.ne.s32.totalorder %s220, %s234
      %p236 = scmp.eq.s32.totalorder %s84, 0
      %p237 = por %p235, %p236
      %s239 = sadd.s32 %s238, 1
      %p242 = scmp.eq.s32.totalorder %s78, 1
      %p243 = scmp.ne.s32.totalorder %s238, %s240
      %p244 = scmp.eq.s32.totalorder %s78, 0
      %p245 = por %p243, %p244
      %p246 = scmp.ne.s32.totalorder %s238, %s240
      %p247 = scmp.eq.s32.totalorder %s83, 1
      %p248 = por %p246, %p247
      %p249 = scmp.ne.s32.totalorder %s240, %s241
      %p250 = scmp.eq.s32.totalorder %s83, 0
      %p251 = por %p249, %p250
      %p252 = scmp.ne.s32.totalorder %s240, %s241
      %p253 = scmp.eq.s32.totalorder %s84, 1
      %p254 = por %p252, %p253
      %p256 = scmp.ne.s32.totalorder %s241, %s255
      %p257 = scmp.eq.s32.totalorder %s84, 0
      %p258 = por %p256, %p257
      %s260 = sadd.s32 %s259, 1
      %p263 = scmp.eq.s32.totalorder %s78, 1
      %p264 = scmp.ne.s32.totalorder %s259, %s261
      %p265 = scmp.eq.s32.totalorder %s78, 0
      %p266 = por %p264, %p265
      %p267 = scmp.ne.s32.totalorder %s259, %s261
      %p268 = scmp.eq.s32.totalorder %s83, 1
      %p269 = por %p267, %p268
      %p270 = scmp.ne.s32.totalorder %s261, %s262
      %p271 = scmp.eq.s32.totalorder %s83, 0
      %p272 = por %p270, %p271
      %p273 = scmp.ne.s32.totalorder %s261, %s262
      %p274 = scmp.eq.s32.totalorder %s84, 1
      %p275 = por %p273, %p274
      %p277 = scmp.ne.s32.totalorder %s262, %s276
      %p278 = scmp.eq.s32.totalorder %s84, 0
      %p279 = por %p277, %p278
      %s281 = sadd.s32 %s280, 1
      %p284 = scmp.eq.s32.totalorder %s78, 1
      %p285 = scmp.ne.s32.totalorder %s280, %s282
      %p286 = scmp.eq.s32.totalorder %s78, 0
      %p287 = por %p285, %p286
      %p288 = scmp.ne.s32.totalorder %s280, %s282
      %p289 = scmp.eq.s32.totalorder %s83, 1
      %p290 = por %p288, %p289
      %p291 = scmp.ne.s32.totalorder %s282, %s283
      %p292 = scmp.eq.s32.totalorder %s83, 0
      %p293 = por %p291, %p292
      %p294 = scmp.ne.s32.totalorder %s282, %s283
      %p295 = scmp.eq.s32.totalorder %s84, 1
      %p296 = por %p294, %p295
      %p298 = scmp.ne.s32.totalorder %s283, %s297
      %p299 = scmp.eq.s32.totalorder %s84, 0
      %p300 = por %p298, %p299
      %s302 = sadd.s32 %s301, 1
      %p305 = scmp.eq.s32.totalorder %s78, 1
      %p306 = scmp.ne.s32.totalorder %s301, %s303
      %p307 = scmp.eq.s32.totalorder %s78, 0
      %p308 = por %p306, %p307
      %p309 = scmp.ne.s32.totalorder %s301, %s303
      %p310 = scmp.eq.s32.totalorder %s83, 1
      %p311 = por %p309, %p310
      %p312 = scmp.ne.s32.totalorder %s303, %s304
      %p313 = scmp.eq.s32.totalorder %s83, 0
      %p314 = por %p312, %p313
      %p315 = scmp.ne.s32.totalorder %s303, %s304
      %p316 = scmp.eq.s32.totalorder %s84, 1
      %p317 = por %p315, %p316
      %p319 = scmp.ne.s32.totalorder %s304, %s318
      %p320 = scmp.eq.s32.totalorder %s84, 0
      %p321 = por %p319, %p320
      %s323 = sadd.s32 %s322, 1
      %p326 = scmp.eq.s32.totalorder %s78, 1
      %p327 = scmp.ne.s32.totalorder %s322, %s324
      %p328 = scmp.eq.s32.totalorder %s78, 0
      %p329 = por %p327, %p328
      %p330 = scmp.ne.s32.totalorder %s322, %s324
      %p331 = scmp.eq.s32.totalorder %s83, 1
      %p332 = por %p330, %p331
      %p333 = scmp.ne.s32.totalorder %s324, %s325
      %p334 = scmp.eq.s32.totalorder %s83, 0
      %p335 = por %p333, %p334
      %p336 = scmp.ne.s32.totalorder %s324, %s325
      %p337 = scmp.eq.s32.totalorder %s84, 1
      %p338 = por %p336, %p337
      %p340 = scmp.ne.s32.totalorder %s325, %s339
      %p341 = scmp.eq.s32.totalorder %s84, 0
      %p342 = por %p340, %p341
      %s344 = sadd.s32 %s343, 1
      %p347 = scmp.eq.s32.totalorder %s78, 1
      %p348 = scmp.ne.s32.totalorder %s343, %s345
      %p349 = scmp.eq.s32.totalorder %s78, 0
      %p350 = por %p348, %p349
      %p351 = scmp.ne.s32.totalorder %s343, %s345
      %p352 = scmp.eq.s32.totalorder %s83, 1
      %p353 = por %p351, %p352
      %p354 = scmp.ne.s32.totalorder %s345, %s346
      %p355 = scmp.eq.s32.totalorder %s83, 0
      %p356 = por %p354, %p355
      %p357 = scmp.ne.s32.totalorder %s345, %s346
      %p358 = scmp.eq.s32.totalorder %s84, 1
      %p359 = por %p357, %p358
      %p361 = scmp.ne.s32.totalorder %s346, %s360
      %p362 = scmp.eq.s32.totalorder %s84, 0
      %p363 = por %p361, %p362
      %s365 = sadd.s32 %s364, 1
      %p368 = scmp.eq.s32.totalorder %s78, 1
      %p369 = scmp.ne.s32.totalorder %s364, %s366
      %p370 = scmp.eq.s32.totalorder %s78, 0
      %p371 = por %p369, %p370
      %p372 = scmp.ne.s32.totalorder %s364, %s366
      %p373 = scmp.eq.s32.totalorder %s83, 1
      %p374 = por %p372, %p373
      %p375 = scmp.ne.s32.totalorder %s366, %s367
      %p376 = scmp.eq.s32.totalorder %s83, 0
      %p377 = por %p375, %p376
      %p378 = scmp.ne.s32.totalorder %s366, %s367
      %p379 = scmp.eq.s32.totalorder %s84, 1
      %p380 = por %p378, %p379
      %p382 = scmp.ne.s32.totalorder %s367, %s381
      %p383 = scmp.eq.s32.totalorder %s84, 0
      %p384 = por %p382, %p383
      %s386 = sadd.s32 %s385, 1
      %p389 = scmp.eq.s32.totalorder %s78, 1
      %p390 = scmp.ne.s32.totalorder %s385, %s387
      %p391 = scmp.eq.s32.totalorder %s78, 0
      %p392 = por %p390, %p391
      %p393 = scmp.ne.s32.totalorder %s385, %s387
      %p394 = scmp.eq.s32.totalorder %s83, 1
      %p395 = por %p393, %p394
      %p396 = scmp.ne.s32.totalorder %s387, %s388
      %p397 = scmp.eq.s32.totalorder %s83, 0
      %p398 = por %p396, %p397
      %p399 = scmp.ne.s32.totalorder %s387, %s388
      %p400 = scmp.eq.s32.totalorder %s84, 1
      %p401 = por %p399, %p400
      %p403 = scmp.ne.s32.totalorder %s388, %s402
      %p404 = scmp.eq.s32.totalorder %s84, 0
      %p405 = por %p403, %p404
      %s407 = sadd.s32 %s406, 1
      %p410 = scmp.eq.s32.totalorder %s78, 1
      %p411 = scmp.ne.s32.totalorder %s406, %s408
      %p412 = scmp.eq.s32.totalorder %s78, 0
      %p413 = por %p411, %p412
      %p414 = scmp.ne.s32.totalorder %s406, %s408
      %p415 = scmp.eq.s32.totalorder %s83, 1
      %p416 = por %p414, %p415
      %p417 = scmp.ne.s32.totalorder %s408, %s409
      %p418 = scmp.eq.s32.totalorder %s83, 0
      %p419 = por %p417, %p418
      %p420 = scmp.ne.s32.totalorder %s408, %s409
      %p421 = scmp.eq.s32.totalorder %s84, 1
      %p422 = por %p420, %p421
      %p424 = scmp.ne.s32.totalorder %s409, %s423
      %p425 = scmp.eq.s32.totalorder %s84, 0
      %p426 = por %p424, %p425
      %s428 = sadd.s32 %s427, 1
      %p431 = scmp.eq.s32.totalorder %s78, 1
      %p432 = scmp.ne.s32.totalorder %s427, %s429
      %p433 = scmp.eq.s32.totalorder %s78, 0
      %p434 = por %p432, %p433
      %p435 = scmp.ne.s32.totalorder %s427, %s429
      %p436 = scmp.eq.s32.totalorder %s83, 1
      %p437 = por %p435, %p436
      %p438 = scmp.ne.s32.totalorder %s429, %s430
      %p439 = scmp.eq.s32.totalorder %s83, 0
      %p440 = por %p438, %p439
      %p441 = scmp.ne.s32.totalorder %s429, %s430
      %p442 = scmp.eq.s32.totalorder %s84, 1
      %p443 = por %p441, %p442
      %p445 = scmp.ne.s32.totalorder %s430, %s444
      %p446 = scmp.eq.s32.totalorder %s84, 0
      %p447 = por %p445, %p446
      %s449 = sadd.s32 %s448, 1
      %p452 = scmp.eq.s32.totalorder %s78, 1
      %p453 = scmp.ne.s32.totalorder %s448, %s450
      %p454 = scmp.eq.s32.totalorder %s78, 0
      %p455 = por %p453, %p454
      %p456 = scmp.ne.s32.totalorder %s448, %s450
      %p457 = scmp.eq.s32.totalorder %s83, 1
      %p458 = por %p456, %p457
      %p459 = scmp.ne.s32.totalorder %s450, %s451
      %p460 = scmp.eq.s32.totalorder %s83, 0
      %p461 = por %p459, %p460
      %p462 = scmp.ne.s32.totalorder %s450, %s451
      %p463 = scmp.eq.s32.totalorder %s84, 1
      %p464 = por %p462, %p463
      %p466 = scmp.ne.s32.totalorder %s451, %s465
      %p467 = scmp.eq.s32.totalorder %s84, 0
      %p468 = por %p466, %p467
      %s470 = sadd.s32 %s469, 1
      %p473 = scmp.eq.s32.totalorder %s78, 1
      %p474 = scmp.ne.s32.totalorder %s469, %s471
      %p475 = scmp.eq.s32.totalorder %s78, 0
      %p476 = por %p474, %p475
      %p477 = scmp.ne.s32.totalorder %s469, %s471
      %p478 = scmp.eq.s32.totalorder %s83, 1
      %p479 = por %p477, %p478
      %p480 = scmp.ne.s32.totalorder %s471, %s472
      %p481 = scmp.eq.s32.totalorder %s83, 0
      %p482 = por %p480, %p481
      %p483 = scmp.ne.s32.totalorder %s471, %s472
      %p484 = scmp.eq.s32.totalorder %s84, 1
      %p485 = por %p483, %p484
      %p487 = scmp.ne.s32.totalorder %s472, %s486
      %p488 = scmp.eq.s32.totalorder %s84, 0
      %p489 = por %p487, %p488
      %s491 = sadd.s32 %s490, 1
      %p494 = scmp.eq.s32.totalorder %s78, 1
      %p495 = scmp.ne.s32.totalorder %s490, %s492
      %p496 = scmp.eq.s32.totalorder %s78, 0
      %p497 = por %p495, %p496
      %p498 = scmp.ne.s32.totalorder %s490, %s492
      %p499 = scmp.eq.s32.totalorder %s83, 1
      %p500 = por %p498, %p499
      %p501 = scmp.ne.s32.totalorder %s492, %s493
      %p502 = scmp.eq.s32.totalorder %s83, 0
      %p503 = por %p501, %p502
      %p504 = scmp.ne.s32.totalorder %s492, %s493
      %p505 = scmp.eq.s32.totalorder %s84, 1
      %p506 = por %p504, %p505
      %p508 = scmp.ne.s32.totalorder %s493, %s507
      %p509 = scmp.eq.s32.totalorder %s84, 0
      %p510 = por %p508, %p509
      %s512 = sadd.s32 %s511, 1
      %p515 = scmp.eq.s32.totalorder %s78, 1
      %p516 = scmp.ne.s32.totalorder %s511, %s513
      %p517 = scmp.eq.s32.totalorder %s78, 0
      %p518 = por %p516, %p517
      %p519 = scmp.ne.s32.totalorder %s511, %s513
      %p520 = scmp.eq.s32.totalorder %s83, 1
      %p521 = por %p519, %p520
      %p522 = scmp.ne.s32.totalorder %s513, %s514
      %p523 = scmp.eq.s32.totalorder %s83, 0
      %p524 = por %p522, %p523
      %p525 = scmp.ne.s32.totalorder %s513, %s514
      %p526 = scmp.eq.s32.totalorder %s84, 1
      %p527 = por %p525, %p526
      %p529 = scmp.ne.s32.totalorder %s514, %s528
      %p530 = scmp.eq.s32.totalorder %s84, 0
      %p531 = por %p529, %p530
      %s533 = sadd.s32 %s532, 1
      %p536 = scmp.eq.s32.totalorder %s78, 1
      %p537 = scmp.ne.s32.totalorder %s532, %s534
      %p538 = scmp.eq.s32.totalorder %s78, 0
      %p539 = por %p537, %p538
      %p540 = scmp.ne.s32.totalorder %s532, %s534
      %p541 = scmp.eq.s32.totalorder %s83, 1
      %p542 = por %p540, %p541
      %p543 = scmp.ne.s32.totalorder %s534, %s535
      %p544 = scmp.eq.s32.totalorder %s83, 0
      %p545 = por %p543, %p544
      %p546 = scmp.ne.s32.totalorder %s534, %s535
      %p547 = scmp.eq.s32.totalorder %s84, 1
      %p548 = por %p546, %p547
      %p550 = scmp.ne.s32.totalorder %s535, %s549
      %p551 = scmp.eq.s32.totalorder %s84, 0
      %p552 = por %p550, %p551
      %s554 = sadd.s32 %s553, 1
      %p557 = scmp.eq.s32.totalorder %s78, 1
      %p558 = scmp.ne.s32.totalorder %s553, %s555
      %p559 = scmp.eq.s32.totalorder %s78, 0
      %p560 = por %p558, %p559
      %p561 = scmp.ne.s32.totalorder %s553, %s555
      %p562 = scmp.eq.s32.totalorder %s83, 1
      %p563 = por %p561, %p562
      %p564 = scmp.ne.s32.totalorder %s555, %s556
      %p565 = scmp.eq.s32.totalorder %s83, 0
      %p566 = por %p564, %p565
      %p567 = scmp.ne.s32.totalorder %s555, %s556
      %p568 = scmp.eq.s32.totalorder %s84, 1
      %p569 = por %p567, %p568
      %p571 = scmp.ne.s32.totalorder %s556, %s570
      %p572 = scmp.eq.s32.totalorder %s84, 0
      %p573 = por %p571, %p572
      %s575 = sadd.s32 %s574, 1
      %p578 = scmp.eq.s32.totalorder %s78, 1
      %p579 = scmp.ne.s32.totalorder %s574, %s576
      %p580 = scmp.eq.s32.totalorder %s78, 0
      %p581 = por %p579, %p580
      %p582 = scmp.ne.s32.totalorder %s574, %s576
      %p583 = scmp.eq.s32.totalorder %s83, 1
      %p584 = por %p582, %p583
      %p585 = scmp.ne.s32.totalorder %s576, %s577
      %p586 = scmp.eq.s32.totalorder %s83, 0
      %p587 = por %p585, %p586
      %p588 = scmp.ne.s32.totalorder %s576, %s577
      %p589 = scmp.eq.s32.totalorder %s84, 1
      %p590 = por %p588, %p589
      %p592 = scmp.ne.s32.totalorder %s577, %s591
      %p593 = scmp.eq.s32.totalorder %s84, 0
      %p594 = por %p592, %p593
      %s596 = sadd.s32 %s595, 1
      %p599 = scmp.eq.s32.totalorder %s78, 1
      %p600 = scmp.ne.s32.totalorder %s595, %s597
      %p601 = scmp.eq.s32.totalorder %s78, 0
      %p602 = por %p600, %p601
      %p603 = scmp.ne.s32.totalorder %s595, %s597
      %p604 = scmp.eq.s32.totalorder %s83, 1
      %p605 = por %p603, %p604
      %p606 = scmp.ne.s32.totalorder %s597, %s598
      %p607 = scmp.eq.s32.totalorder %s83, 0
      %p608 = por %p606, %p607
      %p609 = scmp.ne.s32.totalorder %s597, %s598
      %p610 = scmp.eq.s32.totalorder %s84, 1
      %p611 = por %p609, %p610
      %p613 = scmp.ne.s32.totalorder %s598, %s612
      %p614 = scmp.eq.s32.totalorder %s84, 0
      %p615 = por %p613, %p614
      %s617 = sadd.s32 %s616, 1
      %p620 = scmp.eq.s32.totalorder %s78, 1
      %p621 = scmp.ne.s32.totalorder %s616, %s618
      %p622 = scmp.eq.s32.totalorder %s78, 0
      %p623 = por %p621, %p622
      %p624 = scmp.ne.s32.totalorder %s616, %s618
      %p625 = scmp.eq.s32.totalorder %s83, 1
      %p626 = por %p624, %p625
      %p627 = scmp.ne.s32.totalorder %s618, %s619
      %p628 = scmp.eq.s32.totalorder %s83, 0
      %p629 = por %p627, %p628
      %p630 = scmp.ne.s32.totalorder %s618, %s619
      %p631 = scmp.eq.s32.totalorder %s84, 1
      %p632 = por %p630, %p631
      %p634 = scmp.ne.s32.totalorder %s619, %s633
      %p635 = scmp.eq.s32.totalorder %s84, 0
      %p636 = por %p634, %p635
      %s638 = sadd.s32 %s637, 1
      %p641 = scmp.eq.s32.totalorder %s78, 1
      %p642 = scmp.ne.s32.totalorder %s637, %s639
      %p643 = scmp.eq.s32.totalorder %s78, 0
      %p644 = por %p642, %p643
      %p645 = scmp.ne.s32.totalorder %s637, %s639
      %p646 = scmp.eq.s32.totalorder %s83, 1
      %p647 = por %p645, %p646
      %p648 = scmp.ne.s32.totalorder %s639, %s640
      %p649 = scmp.eq.s32.totalorder %s83, 0
      %p650 = por %p648, %p649
      %p651 = scmp.ne.s32.totalorder %s639, %s640
      %p652 = scmp.eq.s32.totalorder %s84, 1
      %p653 = por %p651, %p652
      %p655 = scmp.ne.s32.totalorder %s640, %s654
      %p656 = scmp.eq.s32.totalorder %s84, 0
      %p657 = por %p655, %p656
      %s659 = sadd.s32 %s658, 1
      %p662 = scmp.eq.s32.totalorder %s78, 1
      %p663 = scmp.ne.s32.totalorder %s658, %s660
      %p664 = scmp.eq.s32.totalorder %s78, 0
      %p665 = por %p663, %p664
      %p666 = scmp.ne.s32.totalorder %s658, %s660
      %p667 = scmp.eq.s32.totalorder %s83, 1
      %p668 = por %p666, %p667
      %p669 = scmp.ne.s32.totalorder %s660, %s661
      %p670 = scmp.eq.s32.totalorder %s83, 0
      %p671 = por %p669, %p670
      %p672 = scmp.ne.s32.totalorder %s660, %s661
      %p673 = scmp.eq.s32.totalorder %s84, 1
      %p674 = por %p672, %p673
      %p676 = scmp.ne.s32.totalorder %s661, %s675
      %p677 = scmp.eq.s32.totalorder %s84, 0
      %p678 = por %p676, %p677
      %s680 = sadd.s32 %s679, 1
      %p683 = scmp.eq.s32.totalorder %s78, 1
      %p684 = scmp.ne.s32.totalorder %s679, %s681
      %p685 = scmp.eq.s32.totalorder %s78, 0
      %p686 = por %p684, %p685
      %p687 = scmp.ne.s32.totalorder %s679, %s681
      %p688 = scmp.eq.s32.totalorder %s83, 1
      %p689 = por %p687, %p688
      %p690 = scmp.ne.s32.totalorder %s681, %s682
      %p691 = scmp.eq.s32.totalorder %s83, 0
      %p692 = por %p690, %p691
      %p693 = scmp.ne.s32.totalorder %s681, %s682
      %p694 = scmp.eq.s32.totalorder %s84, 1
      %p695 = por %p693, %p694
      %p697 = scmp.ne.s32.totalorder %s682, %s696
      %p698 = scmp.eq.s32.totalorder %s84, 0
      %p699 = por %p697, %p698
      %s700 = ssub.s32 %s78, %s85
      %p701 = scmp.eq.s32.totalorder %s700, 0
      %s703 = sadd.s32 %s702, 1
      %s704 = scalar_select %p701, %s702, %s703
      %p707 = pneg %p701
      %p708 = scmp.eq.s32.totalorder %s78, 1
      %p709 = por %p707, %p708
      %p710 = scmp.ne.s32.totalorder %s702, %s705
      %p711 = scmp.eq.s32.totalorder %s78, 0
      %p712 = por %p710, %p711
      %p713 = scmp.ne.s32.totalorder %s702, %s705
      %p714 = scmp.eq.s32.totalorder %s83, 1
      %p715 = por %p713, %p714
      %p716 = scmp.ne.s32.totalorder %s705, %s706
      %p717 = scmp.eq.s32.totalorder %s83, 0
      %p718 = por %p716, %p717
      %p719 = scmp.ne.s32.totalorder %s705, %s706
      %p720 = scmp.eq.s32.totalorder %s84, 1
      %p721 = por %p719, %p720
      %p723 = scmp.ne.s32.totalorder %s706, %s722
      %p724 = scmp.eq.s32.totalorder %s84, 0
      %p725 = por %p723, %p724
      %p726 = scmp.le.s32.totalorder 1, %s78
      %p727 = scmp.lt.s32.totalorder %s78, 3
      %p728 = pnand %p726, %p727
      %p729 = pneg %p728
      // Predicated region
      $region9: #{tpu_custom_call.1} parent=5 // pred_check
        _
      $region10: #{tpu_custom_call.1} parent=5 // pred_check_branch
        %731 = sbr.rel (%p728) target = $region12
      $region11: #{tpu_custom_call.1} parent=5 // pred_region
        %s732 = ssub.s32 %s78, 1
        // Predicated region
        $region13: #{tpu_custom_call.1} parent=11 // pred_check
          %p733 = pneg %p125
        $region14: #{tpu_custom_call.1} parent=11 // pred_check_branch
          %735 = sbr.rel (%p733) target = $region16
        $region15: #{tpu_custom_call.1} parent=11 // pred_region
          _
        $region16: #{tpu_custom_call.1} parent=11 // pred_fallthru
          _
        // Predicated region
        $region17: #{tpu_custom_call.1} parent=11 // pred_check
          %p736 = pneg %p146
        $region18: #{tpu_custom_call.1} parent=11 // pred_check_branch
          %738 = sbr.rel (%p736) target = $region20
        $region19: #{tpu_custom_call.1} parent=11 // pred_region
          _
        $region20: #{tpu_custom_call.1} parent=11 // pred_fallthru
          _
        // Predicated region
        $region21: #{tpu_custom_call.1} parent=11 // pred_check
          %p739 = pneg %p167
        $region22: #{tpu_custom_call.1} parent=11 // pred_check_branch
          %741 = sbr.rel (%p739) target = $region24
        $region23: #{tpu_custom_call.1} parent=11 // pred_region
          _
        $region24: #{tpu_custom_call.1} parent=11 // pred_fallthru
          _
        // Predicated region
        $region25: #{tpu_custom_call.1} parent=11 // pred_check
          %p742 = pneg %p188
        $region26: #{tpu_custom_call.1} parent=11 // pred_check_branch
          %744 = sbr.rel (%p742) target = $region28
        $region27: #{tpu_custom_call.1} parent=11 // pred_region
          _
        $region28: #{tpu_custom_call.1} parent=11 // pred_fallthru
          _
        // Predicated region
        $region29: #{tpu_custom_call.1} parent=11 // pred_check
          %p745 = pneg %p209
        $region30: #{tpu_custom_call.1} parent=11 // pred_check_branch
          %747 = sbr.rel (%p745) target = $region32
        $region31: #{tpu_custom_call.1} parent=11 // pred_region
          _
        $region32: #{tpu_custom_call.1} parent=11 // pred_fallthru
          _
        // Predicated region
        $region33: #{tpu_custom_call.1} parent=11 // pred_check
          %p748 = pneg %p230
        $region34: #{tpu_custom_call.1} parent=11 // pred_check_branch
          %750 = sbr.rel (%p748) target = $region36
        $region35: #{tpu_custom_call.1} parent=11 // pred_region
          _
        $region36: #{tpu_custom_call.1} parent=11 // pred_fallthru
          _
        // Predicated region
        $region37: #{tpu_custom_call.1} parent=11 // pred_check
          %p751 = pneg %p251
        $region38: #{tpu_custom_call.1} parent=11 // pred_check_branch
          %753 = sbr.rel (%p751) target = $region40
        $region39: #{tpu_custom_call.1} parent=11 // pred_region
          _
        $region40: #{tpu_custom_call.1} parent=11 // pred_fallthru
          _
        // Predicated region
        $region41: #{tpu_custom_call.1} parent=11 // pred_check
          %p754 = pneg %p272
        $region42: #{tpu_custom_call.1} parent=11 // pred_check_branch
          %756 = sbr.rel (%p754) target = $region44
        $region43: #{tpu_custom_call.1} parent=11 // pred_region
          _
        $region44: #{tpu_custom_call.1} parent=11 // pred_fallthru
          _
        // Predicated region
        $region45: #{tpu_custom_call.1} parent=11 // pred_check
          %p757 = pneg %p293
        $region46: #{tpu_custom_call.1} parent=11 // pred_check_branch
          %759 = sbr.rel (%p757) target = $region48
        $region47: #{tpu_custom_call.1} parent=11 // pred_region
          _
        $region48: #{tpu_custom_call.1} parent=11 // pred_fallthru
          _
        // Predicated region
        $region49: #{tpu_custom_call.1} parent=11 // pred_check
          %p760 = pneg %p314
        $region50: #{tpu_custom_call.1} parent=11 // pred_check_branch
          %762 = sbr.rel (%p760) target = $region52
        $region51: #{tpu_custom_call.1} parent=11 // pred_region
          _
        $region52: #{tpu_custom_call.1} parent=11 // pred_fallthru
          _
        // Predicated region
        $region53: #{tpu_custom_call.1} parent=11 // pred_check
          %p763 = pneg %p335
        $region54: #{tpu_custom_call.1} parent=11 // pred_check_branch
          %765 = sbr.rel (%p763) target = $region56
        $region55: #{tpu_custom_call.1} parent=11 // pred_region
          _
        $region56: #{tpu_custom_call.1} parent=11 // pred_fallthru
          _
        // Predicated region
        $region57: #{tpu_custom_call.1} parent=11 // pred_check
          %p766 = pneg %p356
        $region58: #{tpu_custom_call.1} parent=11 // pred_check_branch
          %768 = sbr.rel (%p766) target = $region60
        $region59: #{tpu_custom_call.1} parent=11 // pred_region
          _
        $region60: #{tpu_custom_call.1} parent=11 // pred_fallthru
          _
        // Predicated region
        $region61: #{tpu_custom_call.1} parent=11 // pred_check
          %p769 = pneg %p377
        $region62: #{tpu_custom_call.1} parent=11 // pred_check_branch
          %771 = sbr.rel (%p769) target = $region64
        $region63: #{tpu_custom_call.1} parent=11 // pred_region
          _
        $region64: #{tpu_custom_call.1} parent=11 // pred_fallthru
          _
        // Predicated region
        $region65: #{tpu_custom_call.1} parent=11 // pred_check
          %p772 = pneg %p398
        $region66: #{tpu_custom_call.1} parent=11 // pred_check_branch
          %774 = sbr.rel (%p772) target = $region68
        $region67: #{tpu_custom_call.1} parent=11 // pred_region
          _
        $region68: #{tpu_custom_call.1} parent=11 // pred_fallthru
          _
        // Predicated region
        $region69: #{tpu_custom_call.1} parent=11 // pred_check
          %p775 = pneg %p419
        $region70: #{tpu_custom_call.1} parent=11 // pred_check_branch
          %777 = sbr.rel (%p775) target = $region72
        $region71: #{tpu_custom_call.1} parent=11 // pred_region
          _
        $region72: #{tpu_custom_call.1} parent=11 // pred_fallthru
          _
        // Predicated region
        $region73: #{tpu_custom_call.1} parent=11 // pred_check
          %p778 = pneg %p440
        $region74: #{tpu_custom_call.1} parent=11 // pred_check_branch
          %780 = sbr.rel (%p778) target = $region76
        $region75: #{tpu_custom_call.1} parent=11 // pred_region
          _
        $region76: #{tpu_custom_call.1} parent=11 // pred_fallthru
          _
        // Predicated region
        $region77: #{tpu_custom_call.1} parent=11 // pred_check
          %p781 = pneg %p461
        $region78: #{tpu_custom_call.1} parent=11 // pred_check_branch
          %783 = sbr.rel (%p781) target = $region80
        $region79: #{tpu_custom_call.1} parent=11 // pred_region
          _
        $region80: #{tpu_custom_call.1} parent=11 // pred_fallthru
          _
        // Predicated region
        $region81: #{tpu_custom_call.1} parent=11 // pred_check
          %p784 = pneg %p482
        $region82: #{tpu_custom_call.1} parent=11 // pred_check_branch
          %786 = sbr.rel (%p784) target = $region84
        $region83: #{tpu_custom_call.1} parent=11 // pred_region
          _
        $region84: #{tpu_custom_call.1} parent=11 // pred_fallthru
          _
        // Predicated region
        $region85: #{tpu_custom_call.1} parent=11 // pred_check
          %p787 = pneg %p503
        $region86: #{tpu_custom_call.1} parent=11 // pred_check_branch
          %789 = sbr.rel (%p787) target = $region88
        $region87: #{tpu_custom_call.1} parent=11 // pred_region
          _
        $region88: #{tpu_custom_call.1} parent=11 // pred_fallthru
          _
        // Predicated region
        $region89: #{tpu_custom_call.1} parent=11 // pred_check
          %p790 = pneg %p524
        $region90: #{tpu_custom_call.1} parent=11 // pred_check_branch
          %792 = sbr.rel (%p790) target = $region92
        $region91: #{tpu_custom_call.1} parent=11 // pred_region
          _
        $region92: #{tpu_custom_call.1} parent=11 // pred_fallthru
          _
        // Predicated region
        $region93: #{tpu_custom_call.1} parent=11 // pred_check
          %p793 = pneg %p545
        $region94: #{tpu_custom_call.1} parent=11 // pred_check_branch
          %795 = sbr.rel (%p793) target = $region96
        $region95: #{tpu_custom_call.1} parent=11 // pred_region
          _
        $region96: #{tpu_custom_call.1} parent=11 // pred_fallthru
          _
        // Predicated region
        $region97: #{tpu_custom_call.1} parent=11 // pred_check
          %p796 = pneg %p566
        $region98: #{tpu_custom_call.1} parent=11 // pred_check_branch
          %798 = sbr.rel (%p796) target = $region100
        $region99: #{tpu_custom_call.1} parent=11 // pred_region
          _
        $region100: #{tpu_custom_call.1} parent=11 // pred_fallthru
          _
        // Predicated region
        $region101: #{tpu_custom_call.1} parent=11 // pred_check
          %p799 = pneg %p587
        $region102: #{tpu_custom_call.1} parent=11 // pred_check_branch
          %801 = sbr.rel (%p799) target = $region104
        $region103: #{tpu_custom_call.1} parent=11 // pred_region
          _
        $region104: #{tpu_custom_call.1} parent=11 // pred_fallthru
          _
        // Predicated region
        $region105: #{tpu_custom_call.1} parent=11 // pred_check
          %p802 = pneg %p608
        $region106: #{tpu_custom_call.1} parent=11 // pred_check_branch
          %804 = sbr.rel (%p802) target = $region108
        $region107: #{tpu_custom_call.1} parent=11 // pred_region
          _
        $region108: #{tpu_custom_call.1} parent=11 // pred_fallthru
          _
        // Predicated region
        $region109: #{tpu_custom_call.1} parent=11 // pred_check
          %p805 = pneg %p629
        $region110: #{tpu_custom_call.1} parent=11 // pred_check_branch
          %807 = sbr.rel (%p805) target = $region112
        $region111: #{tpu_custom_call.1} parent=11 // pred_region
          _
        $region112: #{tpu_custom_call.1} parent=11 // pred_fallthru
          _
        // Predicated region
        $region113: #{tpu_custom_call.1} parent=11 // pred_check
          %p808 = pneg %p650
        $region114: #{tpu_custom_call.1} parent=11 // pred_check_branch
          %810 = sbr.rel (%p808) target = $region116
        $region115: #{tpu_custom_call.1} parent=11 // pred_region
          _
        $region116: #{tpu_custom_call.1} parent=11 // pred_fallthru
          _
        // Predicated region
        $region117: #{tpu_custom_call.1} parent=11 // pred_check
          %p811 = pneg %p671
        $region118: #{tpu_custom_call.1} parent=11 // pred_check_branch
          %813 = sbr.rel (%p811) target = $region120
        $region119: #{tpu_custom_call.1} parent=11 // pred_region
          _
        $region120: #{tpu_custom_call.1} parent=11 // pred_fallthru
          _
        // Predicated region
        $region121: #{tpu_custom_call.1} parent=11 // pred_check
          %p814 = pneg %p692
        $region122: #{tpu_custom_call.1} parent=11 // pred_check_branch
          %816 = sbr.rel (%p814) target = $region124
        $region123: #{tpu_custom_call.1} parent=11 // pred_region
          _
        $region124: #{tpu_custom_call.1} parent=11 // pred_fallthru
          _
      $region12: #{tpu_custom_call.1} parent=5 // pred_fallthru
        _
      %p817 = scmp.lt.s32.totalorder %s78, 2
      // Predicated region
      $region125: #{tpu_custom_call.1} parent=5 // pred_check
        %p818 = pneg %p817
      $region126: #{tpu_custom_call.1} parent=5 // pred_check_branch
        %820 = sbr.rel (%p818) target = $region128
      $region127: #{tpu_custom_call.1} parent=5 // pred_region
        // Predicated region
        $region129: #{tpu_custom_call.1} parent=127 // pred_check
          %p821 = pneg %p98
        $region130: #{tpu_custom_call.1} parent=127 // pred_check_branch
          %823 = sbr.rel (%p821) target = $region132
        $region131: #{tpu_custom_call.1} parent=127 // pred_region
          %p824 = scmp.lt.s32.totalorder %s78, 1
          %s825 = scalar_select %p824, %s78, 1
          %s826 = smul.addr %s825, 8
          %s827 = smul.addr %s826, 8
          %s828 = scalar_lea.vmem %s3, %s827
        $region132: #{tpu_custom_call.1} parent=127 // pred_fallthru
          _
      $region128: #{tpu_custom_call.1} parent=5 // pred_fallthru
        _
      %p829 = scmp.le.s32.totalorder 1, %s78
      %p830 = scmp.lt.s32.totalorder %s78, 3
      %p831 = pnand %p829, %p830
      %p832 = pneg %p831
      // Predicated region
      $region133: #{tpu_custom_call.1} parent=5 // pred_check
        _
      $region134: #{tpu_custom_call.1} parent=5 // pred_check_branch
        %834 = sbr.rel (%p831) target = $region136
      $region135: #{tpu_custom_call.1} parent=5 // pred_region
        %s835 = ssub.s32 %s78, 1
        %p836 = scmp.lt.s32.totalorder %s83, 1
        %s837 = scalar_select %p836, %s83, 1
        %s838 = smul.addr %s837, 8
        %s839 = smul.addr %s838, 8
        %s840 = scalar_lea.vmem %s3, %s839
        %p841 = pneg %p104
        %p842 = pneg %p101
        %p843 = pneg %p125
        %p844 = pneg %p122
        %p845 = pneg %p146
        %p846 = pneg %p143
        %p847 = pneg %p167
        %p848 = pneg %p164
        %p849 = pneg %p188
        %p850 = pneg %p185
        %p851 = pneg %p209
        %p852 = pneg %p206
        %p853 = pneg %p230
        %p854 = pneg %p227
        %p855 = pneg %p251
        %p856 = pneg %p248
        %p857 = pneg %p272
        %p858 = pneg %p269
        %p859 = pneg %p293
        %p860 = pneg %p290
        %p861 = pneg %p314
        %p862 = pneg %p311
        %p863 = pneg %p335
        %p864 = pneg %p332
        %p865 = pneg %p356
        %p866 = pneg %p353
        %p867 = pneg %p377
        %p868 = pneg %p374
        %p869 = pneg %p398
        %p870 = pneg %p395
        %p871 = pneg %p419
        %p872 = pneg %p416
        %p873 = pneg %p440
        %p874 = pneg %p437
        %p875 = pneg %p461
        %p876 = pneg %p458
        %p877 = pneg %p482
        %p878 = pneg %p479
        %p879 = pneg %p503
        %p880 = pneg %p500
        %p881 = pneg %p524
        %p882 = pneg %p521
        %p883 = pneg %p545
        %p884 = pneg %p542
        %p885 = pneg %p566
        %p886 = pneg %p563
        %p887 = pneg %p587
        %p888 = pneg %p584
        %p889 = pneg %p608
        %p890 = pneg %p605
        %p891 = pneg %p629
        %p892 = pneg %p626
        %p893 = pneg %p650
        %p894 = pneg %p647
        %p895 = pneg %p671
        %p896 = pneg %p668
        %p897 = pneg %p692
        %p898 = pneg %p689
        %p899 = pneg %p718
        %p900 = pneg %p715
        %s901 = sand.u32 %s705, 1
        %s902 = scalar_lea.sflag [#allocation15], %s901
        %s903 = sand.u32 %s705, 1
        %s904 = scalar_lea.vmem [#allocation14], %s903
        %p905 = scmp.lt.s32.totalorder %s83, 1
        %s906 = scalar_select %p905, %s83, 1
        %s907 = smul.addr %s906, 8
        %s908 = smul.addr %s907, 8
        %s909 = scalar_lea.vmem %s3, %s908
        %p911 = scmp.eq.s32.totalorder %s83, 0
        // Predicated region
        $region137: #{tpu_custom_call.1} parent=135 // pred_check
          %p912 = pneg %p911
        $region138: #{tpu_custom_call.1} parent=135 // pred_check_branch
          %914 = sbr.rel (%p912) target = $region140
        $region139: #{tpu_custom_call.1} parent=135 // pred_region
          %vm915 = vcmask 261120
          %916 = vst.msk [vmem:[#allocation2] sm:$0xff] %vm915, 0.0
          %917 = vst.msk [vmem:[#allocation2 + $0x8] sm:$0xff] %vm915, 0.0
          %918 = vst.msk [vmem:[#allocation2 + $0x10] sm:$0xff] %vm915, 0.0
          %919 = vst.msk [vmem:[#allocation2 + $0x18] sm:$0xff] %vm915, 0.0
          %920 = vst.msk [vmem:[#allocation2 + $0x20] sm:$0xff] %vm915, 0.0
          %921 = vst.msk [vmem:[#allocation2 + $0x28] sm:$0xff] %vm915, 0.0
          %922 = vst.msk [vmem:[#allocation2 + $0x30] sm:$0xff] %vm915, 0.0
          %923 = vst.msk [vmem:[#allocation2 + $0x38] sm:$0xff] %vm915, 0.0
          %924 = vst.msk [vmem:[#allocation2 + $0x40] sm:$0xff] %vm915, 0.0
          %vm925 = vcmask 254976
          %926 = vst.msk [vmem:[#allocation2 + $0x48] sm:$0x3] %vm925, 0.0
          %vm927 = vcmask 523264
          %928 = vst.msk [vmem:[#allocation3] sm:$0xff] %vm927, 0.0
          %929 = vst.msk [vmem:[#allocation3 + $0x8] sm:$0xff] %vm927, 0.0
          %930 = vst.msk [vmem:[#allocation3 + $0x10] sm:$0xff] %vm927, 0.0
          %931 = vst.msk [vmem:[#allocation3 + $0x18] sm:$0xff] %vm927, 0.0
          %932 = vst.msk [vmem:[#allocation3 + $0x20] sm:$0xff] %vm927, 0.0
          %933 = vst.msk [vmem:[#allocation3 + $0x28] sm:$0xff] %vm927, 0.0
          %934 = vst.msk [vmem:[#allocation3 + $0x30] sm:$0xff] %vm927, 0.0
          %935 = vst.msk [vmem:[#allocation3 + $0x38] sm:$0xff] %vm927, 0.0
          %936 = vst.msk [vmem:[#allocation3 + $0x40] sm:$0xff] %vm927, 0.0
          %vm937 = vcmask 517120
          %938 = vst.msk [vmem:[#allocation3 + $0x48] sm:$0x3] %vm937, 0.0
          %939 = vst.msk [vmem:[#allocation4] sm:$0xff] %vm927, 0.0
          %940 = vst.msk [vmem:[#allocation4 + $0x8] sm:$0xff] %vm927, 0.0
          %941 = vst.msk [vmem:[#allocation4 + $0x10] sm:$0xff] %vm927, 0.0
          %942 = vst.msk [vmem:[#allocation4 + $0x18] sm:$0xff] %vm927, 0.0
          %943 = vst.msk [vmem:[#allocation4 + $0x20] sm:$0xff] %vm927, 0.0
          %944 = vst.msk [vmem:[#allocation4 + $0x28] sm:$0xff] %vm927, 0.0
          %945 = vst.msk [vmem:[#allocation4 + $0x30] sm:$0xff] %vm927, 0.0
          %946 = vst.msk [vmem:[#allocation4 + $0x38] sm:$0xff] %vm927, 0.0
          %947 = vst.msk [vmem:[#allocation4 + $0x40] sm:$0xff] %vm927, 0.0
          %vm948 = vcmask 516096
          %949 = vst.msk [vmem:[#allocation4 + $0x48] sm:$0x1] %vm948, 0.0
          %950 = vst.msk [vmem:[#allocation6] sm:$0xff] %vm915, 0.0
          %951 = vst.msk [vmem:[#allocation6 + $0x8] sm:$0xff] %vm915, 0.0
          %952 = vst.msk [vmem:[#allocation6 + $0x10] sm:$0xff] %vm915, 0.0
          %953 = vst.msk [vmem:[#allocation6 + $0x18] sm:$0xff] %vm915, 0.0
          %954 = vst.msk [vmem:[#allocation6 + $0x20] sm:$0xff] %vm915, 0.0
          %vm955 = vcmask 253952
          %956 = vst.msk [vmem:[#allocation6 + $0x28] sm:$0x1] %vm955, 0.0
          %957 = vst.msk [vmem:[#allocation8] sm:$0xff] %vm927, 0.0
          %958 = vst.msk [vmem:[#allocation8 + $0x8] sm:$0xff] %vm927, 0.0
          %959 = vst.msk [vmem:[#allocation8 + $0x10] sm:$0xff] %vm927, 0.0
          %960 = vst.msk [vmem:[#allocation8 + $0x18] sm:$0x1] %vm948, 0.0
          %961 = vst [vmem:[#allocation10] sm:$0xff] 0.0
          %962 = vst [vmem:[#allocation10 + $0x8] sm:$0xff] 0.0
          %963 = vst [vmem:[#allocation10 + $0x10] sm:$0x1] 0.0
        $region140: #{tpu_custom_call.1} parent=135 // pred_fallthru
          _
        %v964 = vld [vmem:[%s909] sm:$0xff]
        %v965 = vld [vmem:[%s909 + $0x8] sm:$0xff]
        %v966 = vld [vmem:[%s909 + $0x10] sm:$0xff]
        %v967 = vld [vmem:[%s909 + $0x18] sm:$0xff]
        %v968 = vld [vmem:[%s909 + $0x20] sm:$0xff]
        %v969 = vld [vmem:[%s909 + $0x28] sm:$0xff]
        %v970 = vld [vmem:[%s909 + $0x30] sm:$0xff]
        %v971 = vld [vmem:[%s909 + $0x38] sm:$0xff]
        %vm972 = vcmask 261120
        %973 = vst.msk [vmem:[#allocation2 + $0x8] sm:$0xff] %vm972, %v964
        %974 = vst.msk [vmem:[#allocation2 + $0x10] sm:$0xff] %vm972, %v965
        %975 = vst.msk [vmem:[#allocation2 + $0x18] sm:$0xff] %vm972, %v966
        %976 = vst.msk [vmem:[#allocation2 + $0x20] sm:$0xff] %vm972, %v967
        %977 = vst.msk [vmem:[#allocation2 + $0x28] sm:$0xff] %vm972, %v968
        %978 = vst.msk [vmem:[#allocation2 + $0x30] sm:$0xff] %vm972, %v969
        %979 = vst.msk [vmem:[#allocation2 + $0x38] sm:$0xff] %vm972, %v970
        %980 = vst.msk [vmem:[#allocation2 + $0x40] sm:$0xff] %vm972, %v971
        %v981 = vld [vmem:[#allocation2] sm:$0xff]
        %v982 = vld [vmem:[#allocation2 + $0x8] sm:$0xff]
        %v983 = vld [vmem:[#allocation2 + $0x10] sm:$0xff]
        %v984 = vld [vmem:[#allocation2 + $0x18] sm:$0xff]
        %v985 = vld [vmem:[#allocation2 + $0x20] sm:$0xff]
        %v986 = vld [vmem:[#allocation2 + $0x28] sm:$0xff]
        %v987 = vld [vmem:[#allocation2 + $0x30] sm:$0xff]
        %v988 = vld [vmem:[#allocation2 + $0x38] sm:$0xff]
        %v989 = vld [vmem:[#allocation2 + $0x40] sm:$0xff]
        %v990 = vld [vmem:[#allocation2 + $0x48] sm:$0x3]
        %v991 = vpack.c.bf16 %v981, %v981
        %v992 = vpack.c.bf16 %v982, %v982
        %v993 = vpack.c.bf16 %v983, %v983
        %v994 = vpack.c.bf16 %v984, %v984
        %v995 = vpack.c.bf16 %v985, %v985
        %v996 = vpack.c.bf16 %v986, %v986
        %v997 = vpack.c.bf16 %v987, %v987
        %v998 = vpack.c.bf16 %v988, %v988
        %v999 = vpack.c.bf16 %v989, %v989
        %v1000 = vpack.c.bf16 %v990, %v990
        %v1010 = vunpack.c.l.b16 %v991
        %v1011 = vunpack.c.l.b16 %v992
        %v1012 = vunpack.c.l.b16 %v993
        %v1013 = vunpack.c.l.b16 %v994
        %v1014 = vunpack.c.l.b16 %v995
        %v1015 = vunpack.c.l.b16 %v996
        %v1016 = vunpack.c.l.b16 %v997
        %v1017 = vunpack.c.l.b16 %v998
        %v1018 = vunpack.c.l.b16 %v999
        %v1019 = vpack.c.b16 %v1011, %v1010
        %v1020 = vpack.c.b16 %v1013, %v1012
        %v1021 = vpack.c.b16 %v1015, %v1014
        %v1022 = vpack.c.b16 %v1017, %v1016
        %v1023 = vpack.c.b16 %v1018, %v1018
        %vm1024 = vsmask.f32 7424
        %v1026 = vshrl.u32 %v1019, 16
        %v1028 = vshll.u32 %v1019, 16
        %v1030 = vrot.slane %v1028, 1
        %v1031 = vor.u32 %v1026, %v1030
        %v1033 = vshll.u32 %v1020, 16
        %v1035 = vrot.slane %v1033, 1
        %v1036 = vsel %vm1024, %v1031, %v1035
        %v1037 = vshrl.u32 %v1020, 16
        %v1039 = vor.u32 %v1037, %v1035
        %v1041 = vshll.u32 %v1021, 16
        %v1043 = vrot.slane %v1041, 1
        %v1044 = vsel %vm1024, %v1039, %v1043
        %v1045 = vshrl.u32 %v1021, 16
        %v1047 = vor.u32 %v1045, %v1043
        %v1049 = vshll.u32 %v1022, 16
        %v1051 = vrot.slane %v1049, 1
        %v1052 = vsel %vm1024, %v1047, %v1051
        %v1053 = vshrl.u32 %v1022, 16
        %v1055 = vor.u32 %v1053, %v1051
        %v1057 = vshll.u32 %v1023, 16
        %v1059 = vrot.slane %v1057, 1
        %v1060 = vsel %vm1024, %v1055, %v1059
        %v1061 = vshrl.u32 %v1023, 16
        %v1063 = vor.u32 %v1061, %v1059
        %1064 = vrot.lane.b32.xlu0 %v1036, 32
        %v1065 = vpop.permute.xlu0 %1064
        %1066 = vrot.lane.b32.xlu0 %v1044, 32
        %v1067 = vpop.permute.xlu0 %1066
        %1068 = vrot.lane.b32.xlu0 %v1052, 32
        %v1069 = vpop.permute.xlu0 %1068
        %1070 = vrot.lane.b32.xlu0 %v1060, 32
        %v1071 = vpop.permute.xlu0 %1070
        %1072 = vrot.lane.b32.xlu0 %v1063, 32
        %v1073 = vpop.permute.xlu0 %1072
        %v1074 = vpack.c.b16 %v1012, %v1011
        %v1075 = vpack.c.b16 %v1014, %v1013
        %v1076 = vpack.c.b16 %v1016, %v1015
        %v1077 = vpack.c.b16 %v1018, %v1017
        %vm1078 = vcmask 1042432
        %v1079 = vrot.slane %v1074, 5
        %v1080 = vrot.slane %v1075, 5
        %v1081 = vsel %vm1078, %v1079, %v1080
        %v1082 = vrot.slane %v1076, 5
        %v1083 = vsel %vm1078, %v1080, %v1082
        %v1084 = vrot.slane %v1077, 5
        %v1085 = vsel %vm1078, %v1082, %v1084
        %1086 = vrot.lane.b32.xlu0 %v1079, 64
        %v1087 = vpop.permute.xlu0 %1086
        %1088 = vrot.lane.b32.xlu0 %v1081, 64
        %v1089 = vpop.permute.xlu0 %1088
        %1090 = vrot.lane.b32.xlu0 %v1083, 64
        %v1091 = vpop.permute.xlu0 %1090
        %1092 = vrot.lane.b32.xlu0 %v1085, 64
        %v1093 = vpop.permute.xlu0 %1092
        %1094 = vrot.lane.b32.xlu0 %v1084, 64
        %v1095 = vpop.permute.xlu0 %1094
        %v1097 = vunpack.c.l.b16 %v1000
        %v1098 = vpack.c.b16 %v1097, %v1097
        %vm1099 = vsmask.f32 2304
        %v1101 = vshrl.u32 %v1074, 16
        %v1103 = vrot.slane %v1101, 5
        %v1104 = vshll.u32 %v1074, 16
        %v1106 = vrot.slane %v1104, 6
        %v1107 = vor.u32 %v1103, %v1106
        %v1109 = vshrl.u32 %v1075, 16
        %v1111 = vrot.slane %v1109, 5
        %v1112 = vshll.u32 %v1075, 16
        %v1114 = vrot.slane %v1112, 6
        %v1115 = vor.u32 %v1111, %v1114
        %v1116 = vsel %vm1099, %v1107, %v1115
        %v1118 = vshrl.u32 %v1076, 16
        %v1120 = vrot.slane %v1118, 5
        %v1121 = vshll.u32 %v1076, 16
        %v1123 = vrot.slane %v1121, 6
        %v1124 = vor.u32 %v1120, %v1123
        %v1125 = vsel %vm1099, %v1115, %v1124
        %v1127 = vshrl.u32 %v1077, 16
        %v1129 = vrot.slane %v1127, 5
        %v1130 = vshll.u32 %v1077, 16
        %v1132 = vrot.slane %v1130, 6
        %v1133 = vor.u32 %v1129, %v1132
        %v1134 = vsel %vm1099, %v1124, %v1133
        %v1136 = vshll.u32 %v1098, 16
        %v1138 = vrot.slane %v1136, 6
        %v1139 = vsel %vm1099, %v1133, %v1138
        %1140 = vrot.lane.b32.xlu0 %v1107, 96
        %v1141 = vpop.permute.xlu0 %1140
        %1142 = vrot.lane.b32.xlu0 %v1116, 96
        %v1143 = vpop.permute.xlu0 %1142
        %1144 = vrot.lane.b32.xlu0 %v1125, 96
        %v1145 = vpop.permute.xlu0 %1144
        %1146 = vrot.lane.b32.xlu0 %v1134, 96
        %v1147 = vpop.permute.xlu0 %1146
        %1148 = vrot.lane.b32.xlu0 %v1139, 96
        %v1149 = vpop.permute.xlu0 %1148
        %vm1150 = vcmask 1041408
        %v1151 = vrot.slane %v1074, 6
        %v1152 = vrot.slane %v1075, 6
        %v1153 = vsel %vm1150, %v1151, %v1152
        %v1154 = vrot.slane %v1076, 6
        %v1155 = vsel %vm1150, %v1152, %v1154
        %v1156 = vrot.slane %v1077, 6
        %v1157 = vsel %vm1150, %v1154, %v1156
        %v1158 = vrot.slane %v1098, 6
        %v1159 = vsel %vm1150, %v1156, %v1158
        %v1161 = vsel %vm972, %v1019, %v1065
        %v1163 = vsel %vm972, %v1020, %v1067
        %v1165 = vsel %vm972, %v1021, %v1069
        %v1167 = vsel %vm972, %v1022, %v1071
        %v1169 = vsel %vm972, %v1023, %v1073
        %vm1170 = vcmask 523264
        %v1172 = vsel %vm1170, %v1161, %v1087
        %v1174 = vsel %vm1170, %v1163, %v1089
        %v1176 = vsel %vm1170, %v1165, %v1091
        %v1178 = vsel %vm1170, %v1167, %v1093
        %v1180 = vsel %vm1170, %v1169, %v1095
        %vm1181 = vcmask 785408
        %v1183 = vsel %vm1181, %v1172, %v1141
        %v1185 = vsel %vm1181, %v1174, %v1143
        %v1187 = vsel %vm1181, %v1176, %v1145
        %v1189 = vsel %vm1181, %v1178, %v1147
        %v1191 = vsel %vm1181, %v1180, %v1149
        %v1192 = vld [vmem:[%s5] sm:$0xf]
        %v1193 = vld [vmem:[%s5 + $0x4] sm:$0xf]
        %v1194 = vld [vmem:[%s5 + $0x8] sm:$0xf]
        %v1195 = vld [vmem:[%s5 + $0xc] sm:$0xf]
        %v1196 = vld [vmem:[%s5 + $0x10] sm:$0xf]
        %v1197 = vld [vmem:[%s5 + $0x14] sm:$0xf]
        %v1198 = vld [vmem:[%s5 + $0x18] sm:$0xf]
        %v1199 = vld [vmem:[%s5 + $0x1c] sm:$0xf]
        %v1200 = vld [vmem:[%s5 + $0x20] sm:$0xf]
        %v1201 = vld [vmem:[%s5 + $0x24] sm:$0xf]
        %v1202 = vld [vmem:[%s5 + $0x28] sm:$0xf]
        %v1203 = vld [vmem:[%s5 + $0x2c] sm:$0xf]
        %v1204 = vld [vmem:[%s5 + $0x30] sm:$0xf]
        %v1205 = vld [vmem:[%s5 + $0x34] sm:$0xf]
        %v1206 = vld [vmem:[%s5 + $0x38] sm:$0xf]
        %v1207 = vld [vmem:[%s5 + $0x3c] sm:$0xf]
        %v1208 = vld [vmem:[%s5 + $0x40] sm:$0xf]
        %v1209 = vld [vmem:[%s5 + $0x44] sm:$0xf]
        %v1210 = vld [vmem:[%s5 + $0x48] sm:$0xf]
        %v1211 = vld [vmem:[%s5 + $0x4c] sm:$0xf]
        %v1212 = vld [vmem:[%s7] sm:$0x1]
        %v1214 = vperm.slane %v1212, 0
        %vm1221 = vcmask 1044480
        %v1222 = vrot.slane %v1183, 3
        %v1223 = vrot.slane %v1185, 3
        %v1224 = vsel %vm1221, %v1222, %v1223
        %v1225 = vrot.slane %v1151, 3
        %v1226 = vrot.slane %v1153, 3
        %v1227 = vsel %vm1221, %v1225, %v1226
        %v1228 = vrot.slane %v1187, 3
        %v1229 = vsel %vm1221, %v1223, %v1228
        %v1230 = vrot.slane %v1155, 3
        %v1231 = vsel %vm1221, %v1226, %v1230
        %v1232 = vrot.slane %v1189, 3
        %v1233 = vsel %vm1221, %v1228, %v1232
        %v1234 = vrot.slane %v1157, 3
        %v1235 = vsel %vm1221, %v1230, %v1234
        %v1236 = vrot.slane %v1191, 3
        %v1237 = vsel %vm1221, %v1232, %v1236
        %v1238 = vrot.slane %v1159, 3
        %v1239 = vsel %vm1221, %v1234, %v1238
        %v1264 = vunpack.c.l.b16 %v1192
        %v1265 = vunpack.c.l.b16 %v1193
        %v1266 = vunpack.c.l.b16 %v1194
        %v1267 = vunpack.c.l.b16 %v1195
        %v1268 = vunpack.c.l.b16 %v1196
        %v1269 = vunpack.c.l.b16 %v1197
        %v1270 = vunpack.c.l.b16 %v1198
        %v1271 = vunpack.c.l.b16 %v1199
        %v1272 = vunpack.c.l.b16 %v1200
        %v1273 = vunpack.c.l.b16 %v1201
        %v1274 = vunpack.c.l.b16 %v1202
        %v1275 = vunpack.c.l.b16 %v1203
        %v1276 = vunpack.c.l.b16 %v1204
        %v1277 = vunpack.c.l.b16 %v1205
        %v1278 = vunpack.c.l.b16 %v1206
        %v1279 = vunpack.c.l.b16 %v1207
        %v1280 = vunpack.c.l.b16 %v1208
        %v1281 = vunpack.c.l.b16 %v1209
        %v1282 = vunpack.c.l.b16 %v1210
        %v1283 = vunpack.c.l.b16 %v1211
        %v1284 = vpack.c.b16 %v1265, %v1264
        %v1285 = vpack.c.b16 %v1267, %v1266
        %v1286 = vpack.c.b16 %v1269, %v1268
        %v1287 = vpack.c.b16 %v1271, %v1270
        %v1288 = vpack.c.b16 %v1273, %v1272
        %v1289 = vpack.c.b16 %v1275, %v1274
        %v1290 = vpack.c.b16 %v1277, %v1276
        %v1291 = vpack.c.b16 %v1279, %v1278
        %v1292 = vpack.c.b16 %v1281, %v1280
        %v1293 = vpack.c.b16 %v1283, %v1282
        %v1305 = vsel %vm972, %v1227, 0
        %v1308 = vsel %vm972, %v1231, 0
        %v1311 = vsel %vm972, %v1235, 0
        %v1314 = vsel %vm972, %v1239, 0
        %1316 = vmatpush.bf16.msra.mxu0 %v1291
        %1317 = vmatpush.bf16.msra.mxu0 %v1290
        %1318 = vmatpush.bf16.msra.mxu0 %v1289
        %1319 = vmatpush.bf16.msra.mxu0 %v1288
        %1320 = vmatpush.bf16.msra.mxu0 %v1287
        %1321 = vmatpush.bf16.msra.mxu0 %v1286
        %1322 = vmatpush.bf16.msra.mxu0 %v1285
        %1323 = vmatpush.bf16.msra.mxu0 %v1284
        %1324 = vmatmul.bf16.gmra.mxu0 %v1224
        %v1325 = vpop.f32.mrf.mxu0
        %v1326 = vadd.f32 %v1214, %v1325
        %v1327 = vpop.f32.mrf.mxu0
        %v1328 = vadd.f32 %v1214, %v1327
        %1329 = vmatmul.bf16.gmra.mxu0 %v1229
        %v1330 = vpop.f32.mrf.mxu0
        %v1331 = vadd.f32 %v1214, %v1330
        %v1332 = vpop.f32.mrf.mxu0
        %v1333 = vadd.f32 %v1214, %v1332
        %1334 = vmatmul.bf16.gmra.mxu0 %v1233
        %v1335 = vpop.f32.mrf.mxu0
        %v1336 = vadd.f32 %v1214, %v1335
        %v1337 = vpop.f32.mrf.mxu0
        %v1338 = vadd.f32 %v1214, %v1337
        %1339 = vmatmul.bf16.gmra.mxu0 %v1237
        %v1340 = vpop.f32.mrf.mxu0
        %v1341 = vadd.f32 %v1214, %v1340
        %v1342 = vpop.f32.mrf.mxu0
        %v1343 = vadd.f32 %v1214, %v1342
        %1344 = vdwg.mxu0
        %1345 = vmatpush.bf16.msra.mxu0 0
        %1346 = vmatpush.bf16.msra.mxu0 0
        %1347 = vmatpush.bf16.msra.mxu0 0
        %1348 = vmatpush.bf16.msra.mxu0 0
        %1349 = vmatpush.bf16.msra.mxu0 0
        %1350 = vmatpush.bf16.msra.mxu0 0
        %1351 = vmatpush.bf16.msra.mxu0 %v1293
        %1352 = vmatpush.bf16.msra.mxu0 %v1292
        %1353 = vmatmul.bf16.gmra.mxu0 %v1305
        %v1354 = vpop.f32.mrf.mxu0
        %v1355 = vadd.f32 %v1326, %v1354
        %v1356 = vpop.f32.mrf.mxu0
        %v1357 = vadd.f32 %v1328, %v1356
        %1358 = vmatmul.bf16.gmra.mxu0 %v1308
        %v1359 = vpop.f32.mrf.mxu0
        %v1360 = vadd.f32 %v1331, %v1359
        %v1361 = vpop.f32.mrf.mxu0
        %v1362 = vadd.f32 %v1333, %v1361
        %1363 = vmatmul.bf16.gmra.mxu0 %v1311
        %v1364 = vpop.f32.mrf.mxu0
        %v1365 = vadd.f32 %v1336, %v1364
        %v1366 = vpop.f32.mrf.mxu0
        %v1367 = vadd.f32 %v1338, %v1366
        %1368 = vmatmul.bf16.gmra.mxu0 %v1314
        %v1369 = vpop.f32.mrf.mxu0
        %v1370 = vadd.f32 %v1341, %v1369
        %v1371 = vpop.f32.mrf.mxu0
        %v1372 = vadd.f32 %v1343, %v1371
        %1373 = vdwg.mxu0
        %v1374 = vmax.f32 %v1355, 0.0
        %v1375 = vmax.f32 %v1357, 0.0
        %v1376 = vmax.f32 %v1360, 0.0
        %v1377 = vmax.f32 %v1362, 0.0
        %v1378 = vmax.f32 %v1365, 0.0
        %v1379 = vmax.f32 %v1367, 0.0
        %v1380 = vmax.f32 %v1370, 0.0
        %v1381 = vmax.f32 %v1372, 0.0
        %v1382 = vld [vmem:[%s9] sm:$0x1]
        %v1384 = vperm.slane %v1382, 0
        %v1386 = vmul.f32 %v1374, %v1384
        %v1387 = vmul.f32 %v1375, %v1384
        %v1388 = vmul.f32 %v1376, %v1384
        %v1389 = vmul.f32 %v1377, %v1384
        %v1390 = vmul.f32 %v1378, %v1384
        %v1391 = vmul.f32 %v1379, %v1384
        %v1392 = vmul.f32 %v1380, %v1384
        %v1393 = vmul.f32 %v1381, %v1384
        %v1394 = vld [vmem:[%s11] sm:$0x1]
        %v1396 = vperm.slane %v1394, 0
        %v1398 = vadd.f32 %v1386, %v1396
        %v1399 = vadd.f32 %v1387, %v1396
        %v1400 = vadd.f32 %v1388, %v1396
        %v1401 = vadd.f32 %v1389, %v1396
        %v1402 = vadd.f32 %v1390, %v1396
        %v1403 = vadd.f32 %v1391, %v1396
        %v1404 = vadd.f32 %v1392, %v1396
        %v1405 = vadd.f32 %v1393, %v1396
        %1406 = vst.msk [vmem:[#allocation3 + $0x8] sm:$0xff] %vm1170, %v1398
        %1407 = vst.msk [vmem:[#allocation3 + $0x10] sm:$0xff] %vm1170, %v1399
        %1408 = vst.msk [vmem:[#allocation3 + $0x18] sm:$0xff] %vm1170, %v1400
        %1409 = vst.msk [vmem:[#allocation3 + $0x20] sm:$0xff] %vm1170, %v1401
        %1410 = vst.msk [vmem:[#allocation3 + $0x28] sm:$0xff] %vm1170, %v1402
        %1411 = vst.msk [vmem:[#allocation3 + $0x30] sm:$0xff] %vm1170, %v1403
        %1412 = vst.msk [vmem:[#allocation3 + $0x38] sm:$0xff] %vm1170, %v1404
        %1413 = vst.msk [vmem:[#allocation3 + $0x40] sm:$0xff] %vm1170, %v1405
        %v1414 = vld [vmem:[#allocation3] sm:$0xff]
        %v1415 = vld [vmem:[#allocation3 + $0x8] sm:$0xff]
        %v1416 = vld [vmem:[#allocation3 + $0x10] sm:$0xff]
        %v1417 = vld [vmem:[#allocation3 + $0x18] sm:$0xff]
        %v1418 = vld [vmem:[#allocation3 + $0x20] sm:$0xff]
        %v1419 = vld [vmem:[#allocation3 + $0x28] sm:$0xff]
        %v1420 = vld [vmem:[#allocation3 + $0x30] sm:$0xff]
        %v1421 = vld [vmem:[#allocation3 + $0x38] sm:$0xff]
        %v1422 = vld [vmem:[#allocation3 + $0x40] sm:$0xff]
        %v1423 = vld [vmem:[#allocation3 + $0x48] sm:$0x3]
        %v1424 = vpack.c.bf16 %v1414, %v1414
        %v1425 = vpack.c.bf16 %v1415, %v1415
        %v1426 = vpack.c.bf16 %v1416, %v1416
        %v1427 = vpack.c.bf16 %v1417, %v1417
        %v1428 = vpack.c.bf16 %v1418, %v1418
        %v1429 = vpack.c.bf16 %v1419, %v1419
        %v1430 = vpack.c.bf16 %v1420, %v1420
        %v1431 = vpack.c.bf16 %v1421, %v1421
        %v1432 = vpack.c.bf16 %v1422, %v1422
        %v1433 = vpack.c.bf16 %v1423, %v1423
        %v1443 = vunpack.c.l.b16 %v1424
        %v1444 = vunpack.c.l.b16 %v1425
        %v1445 = vunpack.c.l.b16 %v1426
        %v1446 = vunpack.c.l.b16 %v1427
        %v1447 = vunpack.c.l.b16 %v1428
        %v1448 = vunpack.c.l.b16 %v1429
        %v1449 = vunpack.c.l.b16 %v1430
        %v1450 = vunpack.c.l.b16 %v1431
        %v1451 = vunpack.c.l.b16 %v1432
        %v1452 = vpack.c.b16 %v1444, %v1443
        %v1453 = vpack.c.b16 %v1446, %v1445
        %v1454 = vpack.c.b16 %v1448, %v1447
        %v1455 = vpack.c.b16 %v1450, %v1449
        %v1456 = vpack.c.b16 %v1451, %v1451
        %v1458 = vshrl.u32 %v1452, 16
        %v1460 = vshll.u32 %v1452, 16
        %v1462 = vrot.slane %v1460, 1
        %v1463 = vor.u32 %v1458, %v1462
        %v1465 = vshll.u32 %v1453, 16
        %v1467 = vrot.slane %v1465, 1
        %v1468 = vsel %vm1024, %v1463, %v1467
        %v1469 = vshrl.u32 %v1453, 16
        %v1471 = vor.u32 %v1469, %v1467
        %v1473 = vshll.u32 %v1454, 16
        %v1475 = vrot.slane %v1473, 1
        %v1476 = vsel %vm1024, %v1471, %v1475
        %v1477 = vshrl.u32 %v1454, 16
        %v1479 = vor.u32 %v1477, %v1475
        %v1481 = vshll.u32 %v1455, 16
        %v1483 = vrot.slane %v1481, 1
        %v1484 = vsel %vm1024, %v1479, %v1483
        %v1485 = vshrl.u32 %v1455, 16
        %v1487 = vor.u32 %v1485, %v1483
        %v1489 = vshll.u32 %v1456, 16
        %v1491 = vrot.slane %v1489, 1
        %v1492 = vsel %vm1024, %v1487, %v1491
        %v1493 = vshrl.u32 %v1456, 16
        %v1495 = vor.u32 %v1493, %v1491
        %1496 = vrot.lane.b32.xlu0 %v1468, 64
        %v1497 = vpop.permute.xlu0 %1496
        %1498 = vrot.lane.b32.xlu0 %v1476, 64
        %v1499 = vpop.permute.xlu0 %1498
        %1500 = vrot.lane.b32.xlu0 %v1484, 64
        %v1501 = vpop.permute.xlu0 %1500
        %1502 = vrot.lane.b32.xlu0 %v1492, 64
        %v1503 = vpop.permute.xlu0 %1502
        %1504 = vrot.lane.b32.xlu0 %v1495, 64
        %v1505 = vpop.permute.xlu0 %1504
        %v1506 = vpack.c.b16 %v1445, %v1444
        %v1507 = vpack.c.b16 %v1447, %v1446
        %v1508 = vpack.c.b16 %v1449, %v1448
        %v1509 = vpack.c.b16 %v1451, %v1450
        %v1510 = vrot.slane %v1506, 5
        %v1511 = vrot.slane %v1507, 5
        %v1512 = vsel %vm1078, %v1510, %v1511
        %v1513 = vrot.slane %v1508, 5
        %v1514 = vsel %vm1078, %v1511, %v1513
        %v1515 = vrot.slane %v1509, 5
        %v1516 = vsel %vm1078, %v1513, %v1515
        %v1518 = vunpack.c.l.b16 %v1433
        %v1519 = vpack.c.b16 %v1518, %v1518
        %v1521 = vshrl.u32 %v1506, 16
        %v1523 = vrot.slane %v1521, 5
        %v1524 = vshll.u32 %v1506, 16
        %v1526 = vrot.slane %v1524, 6
        %v1527 = vor.u32 %v1523, %v1526
        %v1529 = vshrl.u32 %v1507, 16
        %v1531 = vrot.slane %v1529, 5
        %v1532 = vshll.u32 %v1507, 16
        %v1534 = vrot.slane %v1532, 6
        %v1535 = vor.u32 %v1531, %v1534
        %v1536 = vsel %vm1099, %v1527, %v1535
        %v1538 = vshrl.u32 %v1508, 16
        %v1540 = vrot.slane %v1538, 5
        %v1541 = vshll.u32 %v1508, 16
        %v1543 = vrot.slane %v1541, 6
        %v1544 = vor.u32 %v1540, %v1543
        %v1545 = vsel %vm1099, %v1535, %v1544
        %v1547 = vshrl.u32 %v1509, 16
        %v1549 = vrot.slane %v1547, 5
        %v1550 = vshll.u32 %v1509, 16
        %v1552 = vrot.slane %v1550, 6
        %v1553 = vor.u32 %v1549, %v1552
        %v1554 = vsel %vm1099, %v1544, %v1553
        %v1556 = vshll.u32 %v1519, 16
        %v1558 = vrot.slane %v1556, 6
        %v1559 = vsel %vm1099, %v1553, %v1558
        %1560 = vrot.lane.b32.xlu0 %v1527, 64
        %v1561 = vpop.permute.xlu0 %1560
        %1562 = vrot.lane.b32.xlu0 %v1536, 64
        %v1563 = vpop.permute.xlu0 %1562
        %1564 = vrot.lane.b32.xlu0 %v1545, 64
        %v1565 = vpop.permute.xlu0 %1564
        %1566 = vrot.lane.b32.xlu0 %v1554, 64
        %v1567 = vpop.permute.xlu0 %1566
        %1568 = vrot.lane.b32.xlu0 %v1559, 64
        %v1569 = vpop.permute.xlu0 %1568
        %v1570 = vrot.slane %v1506, 6
        %v1571 = vrot.slane %v1507, 6
        %v1572 = vsel %vm1150, %v1570, %v1571
        %v1573 = vrot.slane %v1508, 6
        %v1574 = vsel %vm1150, %v1571, %v1573
        %v1575 = vrot.slane %v1509, 6
        %v1576 = vsel %vm1150, %v1573, %v1575
        %v1577 = vrot.slane %v1519, 6
        %v1578 = vsel %vm1150, %v1575, %v1577
        %v1580 = vsel %vm1170, %v1452, %v1497
        %v1582 = vsel %vm1170, %v1453, %v1499
        %v1584 = vsel %vm1170, %v1454, %v1501
        %v1586 = vsel %vm1170, %v1455, %v1503
        %v1588 = vsel %vm1170, %v1456, %v1505
        %v1591 = vsel %vm1170, %v1510, %v1561
        %v1594 = vsel %vm1170, %v1512, %v1563
        %v1597 = vsel %vm1170, %v1514, %v1565
        %v1600 = vsel %vm1170, %v1516, %v1567
        %v1603 = vsel %vm1170, %v1515, %v1569
        %v1604 = vld [vmem:[%s13] sm:$0xf]
        %v1605 = vld [vmem:[%s13 + $0x4] sm:$0xf]
        %v1606 = vld [vmem:[%s13 + $0x8] sm:$0xf]
        %v1607 = vld [vmem:[%s13 + $0xc] sm:$0xf]
        %v1608 = vld [vmem:[%s13 + $0x10] sm:$0xf]
        %v1609 = vld [vmem:[%s13 + $0x14] sm:$0xf]
        %v1610 = vld [vmem:[%s13 + $0x18] sm:$0xf]
        %v1611 = vld [vmem:[%s13 + $0x1c] sm:$0xf]
        %v1612 = vld [vmem:[%s13 + $0x20] sm:$0xf]
        %v1613 = vld [vmem:[%s13 + $0x24] sm:$0xf]
        %v1614 = vld [vmem:[%s13 + $0x28] sm:$0xf]
        %v1615 = vld [vmem:[%s13 + $0x2c] sm:$0xf]
        %v1616 = vld [vmem:[%s13 + $0x30] sm:$0xf]
        %v1617 = vld [vmem:[%s13 + $0x34] sm:$0xf]
        %v1618 = vld [vmem:[%s13 + $0x38] sm:$0xf]
        %v1619 = vld [vmem:[%s13 + $0x3c] sm:$0xf]
        %v1620 = vld [vmem:[%s13 + $0x40] sm:$0xf]
        %v1621 = vld [vmem:[%s13 + $0x44] sm:$0xf]
        %v1622 = vld [vmem:[%s13 + $0x48] sm:$0xf]
        %v1623 = vld [vmem:[%s13 + $0x4c] sm:$0xf]
        %v1624 = vld [vmem:[%s13 + $0x50] sm:$0xf]
        %v1625 = vld [vmem:[%s13 + $0x54] sm:$0xf]
        %v1626 = vld [vmem:[%s13 + $0x58] sm:$0xf]
        %v1627 = vld [vmem:[%s13 + $0x5c] sm:$0xf]
        %v1628 = vld [vmem:[%s13 + $0x60] sm:$0xf]
        %v1629 = vld [vmem:[%s13 + $0x64] sm:$0xf]
        %v1630 = vld [vmem:[%s13 + $0x68] sm:$0xf]
        %v1631 = vld [vmem:[%s13 + $0x6c] sm:$0xf]
        %v1632 = vld [vmem:[%s13 + $0x70] sm:$0xf]
        %v1633 = vld [vmem:[%s13 + $0x74] sm:$0xf]
        %v1634 = vld [vmem:[%s13 + $0x78] sm:$0xf]
        %v1635 = vld [vmem:[%s13 + $0x7c] sm:$0xf]
        %v1636 = vld [vmem:[%s13 + $0x80] sm:$0xf]
        %v1637 = vld [vmem:[%s13 + $0x84] sm:$0xf]
        %v1638 = vld [vmem:[%s13 + $0x88] sm:$0xf]
        %v1639 = vld [vmem:[%s13 + $0x8c] sm:$0xf]
        %v1640 = vld [vmem:[%s13 + $0x90] sm:$0xf]
        %v1641 = vld [vmem:[%s13 + $0x94] sm:$0xf]
        %v1642 = vld [vmem:[%s13 + $0x98] sm:$0xf]
        %v1643 = vld [vmem:[%s13 + $0x9c] sm:$0xf]
        %v1644 = vld [vmem:[%s15] sm:$0x1]
        %v1646 = vperm.slane %v1644, 0
        %v1658 = vrot.slane %v1580, 3
        %v1659 = vrot.slane %v1582, 3
        %v1660 = vsel %vm1221, %v1658, %v1659
        %v1661 = vrot.slane %v1591, 3
        %v1662 = vrot.slane %v1594, 3
        %v1663 = vsel %vm1221, %v1661, %v1662
        %v1664 = vrot.slane %v1570, 3
        %v1665 = vrot.slane %v1572, 3
        %v1666 = vsel %vm1221, %v1664, %v1665
        %v1667 = vrot.slane %v1584, 3
        %v1668 = vsel %vm1221, %v1659, %v1667
        %v1669 = vrot.slane %v1597, 3
        %v1670 = vsel %vm1221, %v1662, %v1669
        %v1671 = vrot.slane %v1574, 3
        %v1672 = vsel %vm1221, %v1665, %v1671
        %v1673 = vrot.slane %v1586, 3
        %v1674 = vsel %vm1221, %v1667, %v1673
        %v1675 = vrot.slane %v1600, 3
        %v1676 = vsel %vm1221, %v1669, %v1675
        %v1677 = vrot.slane %v1576, 3
        %v1678 = vsel %vm1221, %v1671, %v1677
        %v1679 = vrot.slane %v1588, 3
        %v1680 = vsel %vm1221, %v1673, %v1679
        %v1681 = vrot.slane %v1603, 3
        %v1682 = vsel %vm1221, %v1675, %v1681
        %v1683 = vrot.slane %v1578, 3
        %v1684 = vsel %vm1221, %v1677, %v1683
        %v1733 = vunpack.c.l.b16 %v1604
        %v1734 = vunpack.c.l.b16 %v1605
        %v1735 = vunpack.c.l.b16 %v1606
        %v1736 = vunpack.c.l.b16 %v1607
        %v1737 = vunpack.c.l.b16 %v1608
        %v1738 = vunpack.c.l.b16 %v1609
        %v1739 = vunpack.c.l.b16 %v1610
        %v1740 = vunpack.c.l.b16 %v1611
        %v1741 = vunpack.c.l.b16 %v1612
        %v1742 = vunpack.c.l.b16 %v1613
        %v1743 = vunpack.c.l.b16 %v1614
        %v1744 = vunpack.c.l.b16 %v1615
        %v1745 = vunpack.c.l.b16 %v1616
        %v1746 = vunpack.c.l.b16 %v1617
        %v1747 = vunpack.c.l.b16 %v1618
        %v1748 = vunpack.c.l.b16 %v1619
        %v1749 = vunpack.c.l.b16 %v1620
        %v1750 = vunpack.c.l.b16 %v1621
        %v1751 = vunpack.c.l.b16 %v1622
        %v1752 = vunpack.c.l.b16 %v1623
        %v1753 = vunpack.c.l.b16 %v1624
        %v1754 = vunpack.c.l.b16 %v1625
        %v1755 = vunpack.c.l.b16 %v1626
        %v1756 = vunpack.c.l.b16 %v1627
        %v1757 = vunpack.c.l.b16 %v1628
        %v1758 = vunpack.c.l.b16 %v1629
        %v1759 = vunpack.c.l.b16 %v1630
        %v1760 = vunpack.c.l.b16 %v1631
        %v1761 = vunpack.c.l.b16 %v1632
        %v1762 = vunpack.c.l.b16 %v1633
        %v1763 = vunpack.c.l.b16 %v1634
        %v1764 = vunpack.c.l.b16 %v1635
        %v1765 = vunpack.c.l.b16 %v1636
        %v1766 = vunpack.c.l.b16 %v1637
        %v1767 = vunpack.c.l.b16 %v1638
        %v1768 = vunpack.c.l.b16 %v1639
        %v1769 = vunpack.c.l.b16 %v1640
        %v1770 = vunpack.c.l.b16 %v1641
        %v1771 = vunpack.c.l.b16 %v1642
        %v1772 = vunpack.c.l.b16 %v1643
        %v1773 = vpack.c.b16 %v1734, %v1733
        %v1774 = vpack.c.b16 %v1736, %v1735
        %v1775 = vpack.c.b16 %v1738, %v1737
        %v1776 = vpack.c.b16 %v1740, %v1739
        %v1777 = vpack.c.b16 %v1742, %v1741
        %v1778 = vpack.c.b16 %v1744, %v1743
        %v1779 = vpack.c.b16 %v1746, %v1745
        %v1780 = vpack.c.b16 %v1748, %v1747
        %v1781 = vpack.c.b16 %v1750, %v1749
        %v1782 = vpack.c.b16 %v1752, %v1751
        %v1783 = vpack.c.b16 %v1754, %v1753
        %v1784 = vpack.c.b16 %v1756, %v1755
        %v1785 = vpack.c.b16 %v1758, %v1757
        %v1786 = vpack.c.b16 %v1760, %v1759
        %v1787 = vpack.c.b16 %v1762, %v1761
        %v1788 = vpack.c.b16 %v1764, %v1763
        %v1789 = vpack.c.b16 %v1766, %v1765
        %v1790 = vpack.c.b16 %v1768, %v1767
        %v1791 = vpack.c.b16 %v1770, %v1769
        %v1792 = vpack.c.b16 %v1772, %v1771
        %v1814 = vsel %vm1170, %v1666, 0
        %v1817 = vsel %vm1170, %v1672, 0
        %v1820 = vsel %vm1170, %v1678, 0
        %v1823 = vsel %vm1170, %v1684, 0
        %1825 = vmatpush.bf16.msra.mxu0 %v1780
        %1826 = vmatpush.bf16.msra.mxu0 %v1779
        %1827 = vmatpush.bf16.msra.mxu0 %v1778
        %1828 = vmatpush.bf16.msra.mxu0 %v1777
        %1829 = vmatpush.bf16.msra.mxu0 %v1776
        %1830 = vmatpush.bf16.msra.mxu0 %v1775
        %1831 = vmatpush.bf16.msra.mxu0 %v1774
        %1832 = vmatpush.bf16.msra.mxu0 %v1773
        %1833 = vmatmul.bf16.gmra.mxu0 %v1660
        %v1834 = vpop.f32.mrf.mxu0
        %v1835 = vadd.f32 %v1646, %v1834
        %v1836 = vpop.f32.mrf.mxu0
        %v1837 = vadd.f32 %v1646, %v1836
        %1838 = vmatmul.bf16.gmra.mxu0 %v1668
        %v1839 = vpop.f32.mrf.mxu0
        %v1840 = vadd.f32 %v1646, %v1839
        %v1841 = vpop.f32.mrf.mxu0
        %v1842 = vadd.f32 %v1646, %v1841
        %1843 = vmatmul.bf16.gmra.mxu0 %v1674
        %v1844 = vpop.f32.mrf.mxu0
        %v1845 = vadd.f32 %v1646, %v1844
        %v1846 = vpop.f32.mrf.mxu0
        %v1847 = vadd.f32 %v1646, %v1846
        %1848 = vmatmul.bf16.gmra.mxu0 %v1680
        %v1849 = vpop.f32.mrf.mxu0
        %v1850 = vadd.f32 %v1646, %v1849
        %v1851 = vpop.f32.mrf.mxu0
        %v1852 = vadd.f32 %v1646, %v1851
        %1853 = vdwg.mxu0
        %1854 = vmatpush.bf16.msra.mxu0 %v1788
        %1855 = vmatpush.bf16.msra.mxu0 %v1787
        %1856 = vmatpush.bf16.msra.mxu0 %v1786
        %1857 = vmatpush.bf16.msra.mxu0 %v1785
        %1858 = vmatpush.bf16.msra.mxu0 %v1784
        %1859 = vmatpush.bf16.msra.mxu0 %v1783
        %1860 = vmatpush.bf16.msra.mxu0 %v1782
        %1861 = vmatpush.bf16.msra.mxu0 %v1781
        %1862 = vmatmul.bf16.gmra.mxu0 %v1663
        %v1863 = vpop.f32.mrf.mxu0
        %v1864 = vadd.f32 %v1835, %v1863
        %v1865 = vpop.f32.mrf.mxu0
        %v1866 = vadd.f32 %v1837, %v1865
        %1867 = vmatmul.bf16.gmra.mxu0 %v1670
        %v1868 = vpop.f32.mrf.mxu0
        %v1869 = vadd.f32 %v1840, %v1868
        %v1870 = vpop.f32.mrf.mxu0
        %v1871 = vadd.f32 %v1842, %v1870
        %1872 = vmatmul.bf16.gmra.mxu0 %v1676
        %v1873 = vpop.f32.mrf.mxu0
        %v1874 = vadd.f32 %v1845, %v1873
        %v1875 = vpop.f32.mrf.mxu0
        %v1876 = vadd.f32 %v1847, %v1875
        %1877 = vmatmul.bf16.gmra.mxu0 %v1682
        %v1878 = vpop.f32.mrf.mxu0
        %v1879 = vadd.f32 %v1850, %v1878
        %v1880 = vpop.f32.mrf.mxu0
        %v1881 = vadd.f32 %v1852, %v1880
        %1882 = vdwg.mxu0
        %1883 = vmatpush.bf16.msra.mxu0 0
        %1884 = vmatpush.bf16.msra.mxu0 0
        %1885 = vmatpush.bf16.msra.mxu0 0
        %1886 = vmatpush.bf16.msra.mxu0 0
        %1887 = vmatpush.bf16.msra.mxu0 %v1792
        %1888 = vmatpush.bf16.msra.mxu0 %v1791
        %1889 = vmatpush.bf16.msra.mxu0 %v1790
        %1890 = vmatpush.bf16.msra.mxu0 %v1789
        %1891 = vmatmul.bf16.gmra.mxu0 %v1814
        %v1892 = vpop.f32.mrf.mxu0
        %v1893 = vadd.f32 %v1864, %v1892
        %v1894 = vpop.f32.mrf.mxu0
        %v1895 = vadd.f32 %v1866, %v1894
        %1896 = vmatmul.bf16.gmra.mxu0 %v1817
        %v1897 = vpop.f32.mrf.mxu0
        %v1898 = vadd.f32 %v1869, %v1897
        %v1899 = vpop.f32.mrf.mxu0
        %v1900 = vadd.f32 %v1871, %v1899
        %1901 = vmatmul.bf16.gmra.mxu0 %v1820
        %v1902 = vpop.f32.mrf.mxu0
        %v1903 = vadd.f32 %v1874, %v1902
        %v1904 = vpop.f32.mrf.mxu0
        %v1905 = vadd.f32 %v1876, %v1904
        %1906 = vmatmul.bf16.gmra.mxu0 %v1823
        %v1907 = vpop.f32.mrf.mxu0
        %v1908 = vadd.f32 %v1879, %v1907
        %v1909 = vpop.f32.mrf.mxu0
        %v1910 = vadd.f32 %v1881, %v1909
        %1911 = vdwg.mxu0
        %v1912 = vmax.f32 %v1893, 0.0
        %v1913 = vmax.f32 %v1895, 0.0
        %v1914 = vmax.f32 %v1898, 0.0
        %v1915 = vmax.f32 %v1900, 0.0
        %v1916 = vmax.f32 %v1903, 0.0
        %v1917 = vmax.f32 %v1905, 0.0
        %v1918 = vmax.f32 %v1908, 0.0
        %v1919 = vmax.f32 %v1910, 0.0
        %v1920 = vld [vmem:[%s17] sm:$0x1]
        %v1922 = vperm.slane %v1920, 0
        %v1924 = vmul.f32 %v1912, %v1922
        %v1925 = vmul.f32 %v1913, %v1922
        %v1926 = vmul.f32 %v1914, %v1922
        %v1927 = vmul.f32 %v1915, %v1922
        %v1928 = vmul.f32 %v1916, %v1922
        %v1929 = vmul.f32 %v1917, %v1922
        %v1930 = vmul.f32 %v1918, %v1922
        %v1931 = vmul.f32 %v1919, %v1922
        %v1932 = vld [vmem:[%s19] sm:$0x1]
        %v1934 = vperm.slane %v1932, 0
        %v1936 = vadd.f32 %v1924, %v1934
        %v1937 = vadd.f32 %v1925, %v1934
        %v1938 = vadd.f32 %v1926, %v1934
        %v1939 = vadd.f32 %v1927, %v1934
        %v1940 = vadd.f32 %v1928, %v1934
        %v1941 = vadd.f32 %v1929, %v1934
        %v1942 = vadd.f32 %v1930, %v1934
        %v1943 = vadd.f32 %v1931, %v1934
        %v1944 = vpack.c.bf16 %v1937, %v1936
        %v1945 = vpack.c.bf16 %v1939, %v1938
        %v1946 = vpack.c.bf16 %v1941, %v1940
        %v1947 = vpack.c.bf16 %v1943, %v1942
        %v1948 = vld [vmem:[%s53] sm:$0xf]
        %v1949 = vld [vmem:[%s53 + $0x4] sm:$0xf]
        %v1950 = vld [vmem:[%s53 + $0x8] sm:$0xf]
        %v1951 = vld [vmem:[%s53 + $0xc] sm:$0xf]
        %v1952 = vld [vmem:[%s53 + $0x10] sm:$0xf]
        %v1953 = vld [vmem:[%s53 + $0x14] sm:$0xf]
        %v1954 = vld [vmem:[%s53 + $0x18] sm:$0xf]
        %v1955 = vld [vmem:[%s53 + $0x1c] sm:$0xf]
        %v1956 = vld [vmem:[%s55] sm:$0x1]
        %v1958 = vperm.slane %v1956, 0
        %v1968 = vunpack.c.l.b16 %v1948
        %v1969 = vunpack.c.l.b16 %v1949
        %v1970 = vunpack.c.l.b16 %v1950
        %v1971 = vunpack.c.l.b16 %v1951
        %v1972 = vunpack.c.l.b16 %v1952
        %v1973 = vunpack.c.l.b16 %v1953
        %v1974 = vunpack.c.l.b16 %v1954
        %v1975 = vunpack.c.l.b16 %v1955
        %v1976 = vpack.c.b16 %v1969, %v1968
        %v1977 = vpack.c.b16 %v1971, %v1970
        %v1978 = vpack.c.b16 %v1973, %v1972
        %v1979 = vpack.c.b16 %v1975, %v1974
        %v1985 = vsel %vm1170, %v1944, 0
        %v1988 = vsel %vm1170, %v1945, 0
        %v1991 = vsel %vm1170, %v1946, 0
        %v1994 = vsel %vm1170, %v1947, 0
        %1996 = vmatpush.bf16.msra.mxu0 0
        %1997 = vmatpush.bf16.msra.mxu0 0
        %1998 = vmatpush.bf16.msra.mxu0 0
        %1999 = vmatpush.bf16.msra.mxu0 0
        %2000 = vmatpush.bf16.msra.mxu0 %v1979
        %2001 = vmatpush.bf16.msra.mxu0 %v1978
        %2002 = vmatpush.bf16.msra.mxu0 %v1977
        %2003 = vmatpush.bf16.msra.mxu0 %v1976
        %2004 = vmatmul.bf16.gmra.mxu0 %v1985
        %v2005 = vpop.f32.mrf.mxu0
        %v2006 = vadd.f32 %v1958, %v2005
        %v2007 = vpop.f32.mrf.mxu0
        %v2008 = vadd.f32 %v1958, %v2007
        %2009 = vmatmul.bf16.gmra.mxu0 %v1988
        %v2010 = vpop.f32.mrf.mxu0
        %v2011 = vadd.f32 %v1958, %v2010
        %v2012 = vpop.f32.mrf.mxu0
        %v2013 = vadd.f32 %v1958, %v2012
        %2014 = vmatmul.bf16.gmra.mxu0 %v1991
        %v2015 = vpop.f32.mrf.mxu0
        %v2016 = vadd.f32 %v1958, %v2015
        %v2017 = vpop.f32.mrf.mxu0
        %v2018 = vadd.f32 %v1958, %v2017
        %2019 = vmatmul.bf16.gmra.mxu0 %v1994
        %v2020 = vpop.f32.mrf.mxu0
        %v2021 = vadd.f32 %v1958, %v2020
        %v2022 = vpop.f32.mrf.mxu0
        %v2023 = vadd.f32 %v1958, %v2022
        %2024 = vdwg.mxu0
        %2025 = vst.msk [vmem:[#allocation4 + $0x8] sm:$0xff] %vm1170, %v2006
        %2026 = vst.msk [vmem:[#allocation4 + $0x10] sm:$0xff] %vm1170, %v2008
        %2027 = vst.msk [vmem:[#allocation4 + $0x18] sm:$0xff] %vm1170, %v2011
        %2028 = vst.msk [vmem:[#allocation4 + $0x20] sm:$0xff] %vm1170, %v2013
        %2029 = vst.msk [vmem:[#allocation4 + $0x28] sm:$0xff] %vm1170, %v2016
        %2030 = vst.msk [vmem:[#allocation4 + $0x30] sm:$0xff] %vm1170, %v2018
        %2031 = vst.msk [vmem:[#allocation4 + $0x38] sm:$0xff] %vm1170, %v2021
        %2032 = vst.msk [vmem:[#allocation4 + $0x40] sm:$0xff] %vm1170, %v2023
        %v2033 = vld [vmem:[#allocation4] sm:$0xff]
        %v2034 = vld [vmem:[#allocation4 + $0x8] sm:$0xff]
        %v2035 = vld [vmem:[#allocation4 + $0x10] sm:$0xff]
        %v2036 = vld [vmem:[#allocation4 + $0x18] sm:$0xff]
        %v2037 = vld [vmem:[#allocation4 + $0x20] sm:$0xff]
        %v2038 = vld [vmem:[#allocation4 + $0x28] sm:$0xff]
        %v2039 = vld [vmem:[#allocation4 + $0x30] sm:$0xff]
        %v2040 = vld [vmem:[#allocation4 + $0x38] sm:$0xff]
        %v2041 = vld [vmem:[#allocation4 + $0x40] sm:$0xff]
        %v2042 = vld [vmem:[#allocation4 + $0x48] sm:$0x1]
        %v2043 = vpack.c.bf16 %v2033, %v2033
        %v2044 = vpack.c.bf16 %v2034, %v2034
        %v2045 = vpack.c.bf16 %v2035, %v2035
        %v2046 = vpack.c.bf16 %v2036, %v2036
        %v2047 = vpack.c.bf16 %v2037, %v2037
        %v2048 = vpack.c.bf16 %v2038, %v2038
        %v2049 = vpack.c.bf16 %v2039, %v2039
        %v2050 = vpack.c.bf16 %v2040, %v2040
        %v2051 = vpack.c.bf16 %v2041, %v2041
        %v2052 = vpack.c.bf16 %v2042, %v2042
        %v2062 = vunpack.c.l.b16 %v2043
        %v2063 = vunpack.c.l.b16 %v2044
        %v2064 = vunpack.c.l.b16 %v2045
        %v2065 = vunpack.c.l.b16 %v2046
        %v2066 = vunpack.c.l.b16 %v2047
        %v2067 = vunpack.c.l.b16 %v2048
        %v2068 = vunpack.c.l.b16 %v2049
        %v2069 = vunpack.c.l.b16 %v2050
        %v2070 = vunpack.c.l.b16 %v2051
        %v2071 = vpack.c.b16 %v2063, %v2062
        %v2072 = vpack.c.b16 %v2065, %v2064
        %v2073 = vpack.c.b16 %v2067, %v2066
        %v2074 = vpack.c.b16 %v2069, %v2068
        %v2075 = vpack.c.b16 %v2070, %v2070
        %v2076 = vpack.c.b16 %v2064, %v2063
        %v2077 = vpack.c.b16 %v2066, %v2065
        %v2078 = vpack.c.b16 %v2068, %v2067
        %v2079 = vpack.c.b16 %v2070, %v2069
        %vm2080 = vsmask.f32 3328
        %v2082 = vshrl.u32 %v2076, 16
        %v2084 = vrot.slane %v2082, 4
        %v2085 = vshll.u32 %v2076, 16
        %v2087 = vrot.slane %v2085, 5
        %v2088 = vor.u32 %v2084, %v2087
        %v2090 = vshrl.u32 %v2077, 16
        %v2092 = vrot.slane %v2090, 4
        %v2093 = vshll.u32 %v2077, 16
        %v2095 = vrot.slane %v2093, 5
        %v2096 = vor.u32 %v2092, %v2095
        %v2097 = vsel %vm2080, %v2088, %v2096
        %v2099 = vshrl.u32 %v2078, 16
        %v2101 = vrot.slane %v2099, 4
        %v2102 = vshll.u32 %v2078, 16
        %v2104 = vrot.slane %v2102, 5
        %v2105 = vor.u32 %v2101, %v2104
        %v2106 = vsel %vm2080, %v2096, %v2105
        %v2108 = vshrl.u32 %v2079, 16
        %v2110 = vrot.slane %v2108, 4
        %v2111 = vshll.u32 %v2079, 16
        %v2113 = vrot.slane %v2111, 5
        %v2114 = vor.u32 %v2110, %v2113
        %v2115 = vsel %vm2080, %v2105, %v2114
        %2116 = vrot.lane.b32.xlu0 %v2088, 64
        %v2117 = vpop.permute.xlu0 %2116
        %2118 = vrot.lane.b32.xlu0 %v2097, 64
        %v2119 = vpop.permute.xlu0 %2118
        %2120 = vrot.lane.b32.xlu0 %v2106, 64
        %v2121 = vpop.permute.xlu0 %2120
        %2122 = vrot.lane.b32.xlu0 %v2115, 64
        %v2123 = vpop.permute.xlu0 %2122
        %2124 = vrot.lane.b32.xlu0 %v2114, 64
        %v2125 = vpop.permute.xlu0 %2124
        %v2127 = vunpack.c.l.b16 %v2052
        %v2128 = vpack.c.b16 %v2127, %v2127
        %v2129 = vrot.slane %v2076, 5
        %v2130 = vrot.slane %v2077, 5
        %v2131 = vsel %vm1078, %v2129, %v2130
        %v2132 = vrot.slane %v2078, 5
        %v2133 = vsel %vm1078, %v2130, %v2132
        %v2134 = vrot.slane %v2079, 5
        %v2135 = vsel %vm1078, %v2132, %v2134
        %v2136 = vrot.slane %v2128, 5
        %v2137 = vsel %vm1078, %v2134, %v2136
        %v2140 = vsel %vm1170, %v2071, %v2117
        %v2143 = vsel %vm1170, %v2072, %v2119
        %v2146 = vsel %vm1170, %v2073, %v2121
        %v2149 = vsel %vm1170, %v2074, %v2123
        %v2152 = vsel %vm1170, %v2075, %v2125
        %v2153 = vld [vmem:[%s21] sm:$0xf]
        %v2154 = vld [vmem:[%s21 + $0x4] sm:$0xf]
        %v2155 = vld [vmem:[%s21 + $0x8] sm:$0xf]
        %v2156 = vld [vmem:[%s21 + $0xc] sm:$0xf]
        %v2157 = vld [vmem:[%s21 + $0x10] sm:$0xf]
        %v2158 = vld [vmem:[%s21 + $0x14] sm:$0xf]
        %v2159 = vld [vmem:[%s21 + $0x18] sm:$0xf]
        %v2160 = vld [vmem:[%s21 + $0x1c] sm:$0xf]
        %v2161 = vld [vmem:[%s21 + $0x20] sm:$0xf]
        %v2162 = vld [vmem:[%s21 + $0x24] sm:$0xf]
        %v2163 = vld [vmem:[%s21 + $0x28] sm:$0xf]
        %v2164 = vld [vmem:[%s21 + $0x2c] sm:$0xf]
        %v2165 = vld [vmem:[%s21 + $0x30] sm:$0xf]
        %v2166 = vld [vmem:[%s21 + $0x34] sm:$0xf]
        %v2167 = vld [vmem:[%s21 + $0x38] sm:$0xf]
        %v2168 = vld [vmem:[%s21 + $0x3c] sm:$0xf]
        %v2169 = vld [vmem:[%s21 + $0x40] sm:$0xf]
        %v2170 = vld [vmem:[%s21 + $0x44] sm:$0xf]
        %v2171 = vld [vmem:[%s21 + $0x48] sm:$0xf]
        %v2172 = vld [vmem:[%s21 + $0x4c] sm:$0xf]
        %v2173 = vld [vmem:[%s21 + $0x50] sm:$0xf]
        %v2174 = vld [vmem:[%s21 + $0x54] sm:$0xf]
        %v2175 = vld [vmem:[%s21 + $0x58] sm:$0xf]
        %v2176 = vld [vmem:[%s21 + $0x5c] sm:$0xf]
        %v2177 = vld [vmem:[%s23] sm:$0x1]
        %v2179 = vperm.slane %v2177, 0
        %vm2181 = vsmask.f32 4352
        %v2182 = vshrl.u32 %v2140, 16
        %v2184 = vrot.slane %v2182, 3
        %v2185 = vshll.u32 %v2140, 16
        %v2187 = vrot.slane %v2185, 4
        %v2188 = vor.u32 %v2184, %v2187
        %v2189 = vshrl.u32 %v2143, 16
        %v2191 = vrot.slane %v2189, 3
        %v2192 = vshll.u32 %v2143, 16
        %v2194 = vrot.slane %v2192, 4
        %v2195 = vor.u32 %v2191, %v2194
        %v2196 = vsel %vm2181, %v2188, %v2195
        %v2198 = vshrl.u32 %v2129, 16
        %v2200 = vrot.slane %v2198, 3
        %v2201 = vshll.u32 %v2129, 16
        %v2203 = vrot.slane %v2201, 4
        %v2204 = vor.u32 %v2200, %v2203
        %v2206 = vshrl.u32 %v2131, 16
        %v2208 = vrot.slane %v2206, 3
        %v2209 = vshll.u32 %v2131, 16
        %v2211 = vrot.slane %v2209, 4
        %v2212 = vor.u32 %v2208, %v2211
        %v2213 = vsel %vm2181, %v2204, %v2212
        %v2214 = vshrl.u32 %v2146, 16
        %v2216 = vrot.slane %v2214, 3
        %v2217 = vshll.u32 %v2146, 16
        %v2219 = vrot.slane %v2217, 4
        %v2220 = vor.u32 %v2216, %v2219
        %v2221 = vsel %vm2181, %v2195, %v2220
        %v2223 = vshrl.u32 %v2133, 16
        %v2225 = vrot.slane %v2223, 3
        %v2226 = vshll.u32 %v2133, 16
        %v2228 = vrot.slane %v2226, 4
        %v2229 = vor.u32 %v2225, %v2228
        %v2230 = vsel %vm2181, %v2212, %v2229
        %v2231 = vshrl.u32 %v2149, 16
        %v2233 = vrot.slane %v2231, 3
        %v2234 = vshll.u32 %v2149, 16
        %v2236 = vrot.slane %v2234, 4
        %v2237 = vor.u32 %v2233, %v2236
        %v2238 = vsel %vm2181, %v2220, %v2237
        %v2240 = vshrl.u32 %v2135, 16
        %v2242 = vrot.slane %v2240, 3
        %v2243 = vshll.u32 %v2135, 16
        %v2245 = vrot.slane %v2243, 4
        %v2246 = vor.u32 %v2242, %v2245
        %v2247 = vsel %vm2181, %v2229, %v2246
        %v2248 = vshrl.u32 %v2152, 16
        %v2250 = vrot.slane %v2248, 3
        %v2251 = vshll.u32 %v2152, 16
        %v2253 = vrot.slane %v2251, 4
        %v2254 = vor.u32 %v2250, %v2253
        %v2255 = vsel %vm2181, %v2237, %v2254
        %v2257 = vshrl.u32 %v2137, 16
        %v2259 = vrot.slane %v2257, 3
        %v2260 = vshll.u32 %v2137, 16
        %v2262 = vrot.slane %v2260, 4
        %v2263 = vor.u32 %v2259, %v2262
        %v2264 = vsel %vm2181, %v2246, %v2263
        %v2293 = vunpack.c.l.b16 %v2153
        %v2294 = vunpack.c.l.b16 %v2154
        %v2295 = vunpack.c.l.b16 %v2155
        %v2296 = vunpack.c.l.b16 %v2156
        %v2297 = vunpack.c.l.b16 %v2157
        %v2298 = vunpack.c.l.b16 %v2158
        %v2299 = vunpack.c.l.b16 %v2159
        %v2300 = vunpack.c.l.b16 %v2160
        %v2301 = vunpack.c.l.b16 %v2161
        %v2302 = vunpack.c.l.b16 %v2162
        %v2303 = vunpack.c.l.b16 %v2163
        %v2304 = vunpack.c.l.b16 %v2164
        %v2305 = vunpack.c.l.b16 %v2165
        %v2306 = vunpack.c.l.b16 %v2166
        %v2307 = vunpack.c.l.b16 %v2167
        %v2308 = vunpack.c.l.b16 %v2168
        %v2309 = vunpack.c.l.b16 %v2169
        %v2310 = vunpack.c.l.b16 %v2170
        %v2311 = vunpack.c.l.b16 %v2171
        %v2312 = vunpack.c.l.b16 %v2172
        %v2313 = vunpack.c.l.b16 %v2173
        %v2314 = vunpack.c.l.b16 %v2174
        %v2315 = vunpack.c.l.b16 %v2175
        %v2316 = vunpack.c.l.b16 %v2176
        %v2317 = vpack.c.b16 %v2294, %v2293
        %v2318 = vpack.c.b16 %v2296, %v2295
        %v2319 = vpack.c.b16 %v2298, %v2297
        %v2320 = vpack.c.b16 %v2300, %v2299
        %v2321 = vpack.c.b16 %v2302, %v2301
        %v2322 = vpack.c.b16 %v2304, %v2303
        %v2323 = vpack.c.b16 %v2306, %v2305
        %v2324 = vpack.c.b16 %v2308, %v2307
        %v2325 = vpack.c.b16 %v2310, %v2309
        %v2326 = vpack.c.b16 %v2312, %v2311
        %v2327 = vpack.c.b16 %v2314, %v2313
        %v2328 = vpack.c.b16 %v2316, %v2315
        %v2342 = vsel %vm1170, %v2213, 0
        %v2345 = vsel %vm1170, %v2230, 0
        %v2348 = vsel %vm1170, %v2247, 0
        %v2351 = vsel %vm1170, %v2264, 0
        %2353 = vmatpush.bf16.msra.mxu0 %v2324
        %2354 = vmatpush.bf16.msra.mxu0 %v2323
        %2355 = vmatpush.bf16.msra.mxu0 %v2322
        %2356 = vmatpush.bf16.msra.mxu0 %v2321
        %2357 = vmatpush.bf16.msra.mxu0 %v2320
        %2358 = vmatpush.bf16.msra.mxu0 %v2319
        %2359 = vmatpush.bf16.msra.mxu0 %v2318
        %2360 = vmatpush.bf16.msra.mxu0 %v2317
        %2361 = vmatmul.bf16.gmra.mxu0 %v2196
        %v2362 = vpop.f32.mrf.mxu0
        %v2363 = vadd.f32 %v2179, %v2362
        %v2364 = vpop.f32.mrf.mxu0
        %v2365 = vadd.f32 %v2179, %v2364
        %2366 = vmatmul.bf16.gmra.mxu0 %v2221
        %v2367 = vpop.f32.mrf.mxu0
        %v2368 = vadd.f32 %v2179, %v2367
        %v2369 = vpop.f32.mrf.mxu0
        %v2370 = vadd.f32 %v2179, %v2369
        %2371 = vmatmul.bf16.gmra.mxu0 %v2238
        %v2372 = vpop.f32.mrf.mxu0
        %v2373 = vadd.f32 %v2179, %v2372
        %v2374 = vpop.f32.mrf.mxu0
        %v2375 = vadd.f32 %v2179, %v2374
        %2376 = vmatmul.bf16.gmra.mxu0 %v2255
        %v2377 = vpop.f32.mrf.mxu0
        %v2378 = vadd.f32 %v2179, %v2377
        %v2379 = vpop.f32.mrf.mxu0
        %v2380 = vadd.f32 %v2179, %v2379
        %2381 = vdwg.mxu0
        %2382 = vmatpush.bf16.msra.mxu0 0
        %2383 = vmatpush.bf16.msra.mxu0 0
        %2384 = vmatpush.bf16.msra.mxu0 0
        %2385 = vmatpush.bf16.msra.mxu0 0
        %2386 = vmatpush.bf16.msra.mxu0 %v2328
        %2387 = vmatpush.bf16.msra.mxu0 %v2327
        %2388 = vmatpush.bf16.msra.mxu0 %v2326
        %2389 = vmatpush.bf16.msra.mxu0 %v2325
        %2390 = vmatmul.bf16.gmra.mxu0 %v2342
        %v2391 = vpop.f32.mrf.mxu0
        %v2392 = vadd.f32 %v2363, %v2391
        %v2393 = vpop.f32.mrf.mxu0
        %v2394 = vadd.f32 %v2365, %v2393
        %2395 = vmatmul.bf16.gmra.mxu0 %v2345
        %v2396 = vpop.f32.mrf.mxu0
        %v2397 = vadd.f32 %v2368, %v2396
        %v2398 = vpop.f32.mrf.mxu0
        %v2399 = vadd.f32 %v2370, %v2398
        %2400 = vmatmul.bf16.gmra.mxu0 %v2348
        %v2401 = vpop.f32.mrf.mxu0
        %v2402 = vadd.f32 %v2373, %v2401
        %v2403 = vpop.f32.mrf.mxu0
        %v2404 = vadd.f32 %v2375, %v2403
        %2405 = vmatmul.bf16.gmra.mxu0 %v2351
        %v2406 = vpop.f32.mrf.mxu0
        %v2407 = vadd.f32 %v2378, %v2406
        %v2408 = vpop.f32.mrf.mxu0
        %v2409 = vadd.f32 %v2380, %v2408
        %2410 = vdwg.mxu0
        %v2411 = vmax.f32 %v2392, 0.0
        %v2412 = vmax.f32 %v2394, 0.0
        %v2413 = vmax.f32 %v2397, 0.0
        %v2414 = vmax.f32 %v2399, 0.0
        %v2415 = vmax.f32 %v2402, 0.0
        %v2416 = vmax.f32 %v2404, 0.0
        %v2417 = vmax.f32 %v2407, 0.0
        %v2418 = vmax.f32 %v2409, 0.0
        %v2419 = vld [vmem:[%s25] sm:$0x1]
        %v2421 = vperm.slane %v2419, 0
        %v2423 = vmul.f32 %v2411, %v2421
        %v2424 = vmul.f32 %v2412, %v2421
        %v2425 = vmul.f32 %v2413, %v2421
        %v2426 = vmul.f32 %v2414, %v2421
        %v2427 = vmul.f32 %v2415, %v2421
        %v2428 = vmul.f32 %v2416, %v2421
        %v2429 = vmul.f32 %v2417, %v2421
        %v2430 = vmul.f32 %v2418, %v2421
        %v2431 = vld [vmem:[%s27] sm:$0x1]
        %v2433 = vperm.slane %v2431, 0
        %v2435 = vadd.f32 %v2423, %v2433
        %v2436 = vadd.f32 %v2424, %v2433
        %v2437 = vadd.f32 %v2425, %v2433
        %v2438 = vadd.f32 %v2426, %v2433
        %v2439 = vadd.f32 %v2427, %v2433
        %v2440 = vadd.f32 %v2428, %v2433
        %v2441 = vadd.f32 %v2429, %v2433
        %v2442 = vadd.f32 %v2430, %v2433
        %2443 = vst.msk [vmem:[#allocation5] sm:$0xff] %vm972, %v2435
        %2444 = vst.msk [vmem:[#allocation5 + $0x8] sm:$0xff] %vm972, %v2436
        %2445 = vst.msk [vmem:[#allocation5 + $0x10] sm:$0xff] %vm972, %v2437
        %2446 = vst.msk [vmem:[#allocation5 + $0x18] sm:$0xff] %vm972, %v2438
        %2447 = vst.msk [vmem:[#allocation5 + $0x20] sm:$0xff] %vm972, %v2439
        %2448 = vst.msk [vmem:[#allocation5 + $0x28] sm:$0xff] %vm972, %v2440
        %2449 = vst.msk [vmem:[#allocation5 + $0x30] sm:$0xff] %vm972, %v2441
        %2450 = vst.msk [vmem:[#allocation5 + $0x38] sm:$0xff] %vm972, %v2442
        %v2451 = vld [vmem:[#allocation5] ss:$2 sm:$0xff]
        %s2452 = scalar_lea.vmem [#allocation5], 16
        %v2453 = vld [vmem:[%s2452] ss:$2 sm:$0xff]
        %s2454 = scalar_lea.vmem [#allocation5], 32
        %v2455 = vld [vmem:[%s2454] ss:$2 sm:$0xff]
        %s2456 = scalar_lea.vmem [#allocation5], 48
        %v2457 = vld [vmem:[%s2456] ss:$2 sm:$0xff]
        %s2458 = scalar_lea.vmem [#allocation5], 1
        %v2459 = vld [vmem:[%s2458] ss:$2 sm:$0xff]
        %s2460 = scalar_lea.vmem [#allocation5], 17
        %v2461 = vld [vmem:[%s2460] ss:$2 sm:$0xff]
        %s2462 = scalar_lea.vmem [#allocation5], 33
        %v2463 = vld [vmem:[%s2462] ss:$2 sm:$0xff]
        %s2464 = scalar_lea.vmem [#allocation5], 49
        %v2465 = vld [vmem:[%s2464] ss:$2 sm:$0xff]
        %v2466 = vadd.f32 %v2451, %v2459
        %v2467 = vadd.f32 %v2453, %v2461
        %v2468 = vadd.f32 %v2455, %v2463
        %v2469 = vadd.f32 %v2457, %v2465
        %v2470 = vmul.f32 %v2466, 0.5
        %v2471 = vmul.f32 %v2467, 0.5
        %v2472 = vmul.f32 %v2468, 0.5
        %v2473 = vmul.f32 %v2469, 0.5
        %2474 = vst.msk [vmem:[#allocation6 + $0x8] sm:$0xff] %vm972, %v2470
        %2475 = vst.msk [vmem:[#allocation6 + $0x10] sm:$0xff] %vm972, %v2471
        %2476 = vst.msk [vmem:[#allocation6 + $0x18] sm:$0xff] %vm972, %v2472
        %2477 = vst.msk [vmem:[#allocation6 + $0x20] sm:$0xff] %vm972, %v2473
        %v2478 = vld [vmem:[#allocation6] sm:$0xff]
        %v2479 = vld [vmem:[#allocation6 + $0x8] sm:$0xff]
        %v2480 = vld [vmem:[#allocation6 + $0x10] sm:$0xff]
        %v2481 = vld [vmem:[#allocation6 + $0x18] sm:$0xff]
        %v2482 = vld [vmem:[#allocation6 + $0x20] sm:$0xff]
        %v2483 = vld [vmem:[#allocation6 + $0x28] sm:$0x1]
        %v2484 = vpack.c.bf16 %v2478, %v2478
        %v2485 = vpack.c.bf16 %v2479, %v2479
        %v2486 = vpack.c.bf16 %v2480, %v2480
        %v2487 = vpack.c.bf16 %v2481, %v2481
        %v2488 = vpack.c.bf16 %v2482, %v2482
        %v2489 = vpack.c.bf16 %v2483, %v2483
        %v2495 = vunpack.c.l.b16 %v2484
        %v2496 = vunpack.c.l.b16 %v2485
        %v2497 = vunpack.c.l.b16 %v2486
        %v2498 = vunpack.c.l.b16 %v2487
        %v2499 = vunpack.c.l.b16 %v2488
        %v2500 = vpack.c.b16 %v2496, %v2495
        %v2501 = vpack.c.b16 %v2498, %v2497
        %v2502 = vpack.c.b16 %v2499, %v2499
        %v2503 = vpack.c.b16 %v2497, %v2496
        %v2504 = vpack.c.b16 %v2499, %v2498
        %v2506 = vshrl.u32 %v2503, 16
        %v2508 = vrot.slane %v2506, 4
        %v2509 = vshll.u32 %v2503, 16
        %v2511 = vrot.slane %v2509, 5
        %v2512 = vor.u32 %v2508, %v2511
        %v2514 = vshrl.u32 %v2504, 16
        %v2516 = vrot.slane %v2514, 4
        %v2517 = vshll.u32 %v2504, 16
        %v2519 = vrot.slane %v2517, 5
        %v2520 = vor.u32 %v2516, %v2519
        %v2521 = vsel %vm2080, %v2512, %v2520
        %2522 = vrot.lane.b32.xlu0 %v2512, 32
        %v2523 = vpop.permute.xlu0 %2522
        %2524 = vrot.lane.b32.xlu0 %v2521, 32
        %v2525 = vpop.permute.xlu0 %2524
        %2526 = vrot.lane.b32.xlu0 %v2520, 32
        %v2527 = vpop.permute.xlu0 %2526
        %v2529 = vunpack.c.l.b16 %v2489
        %v2530 = vpack.c.b16 %v2529, %v2529
        %v2531 = vrot.slane %v2503, 5
        %v2532 = vrot.slane %v2504, 5
        %v2533 = vsel %vm1078, %v2531, %v2532
        %v2534 = vrot.slane %v2530, 5
        %v2535 = vsel %vm1078, %v2532, %v2534
        %2536 = vrot.lane.b32.xlu0 %v2531, 64
        %v2537 = vpop.permute.xlu0 %2536
        %2538 = vrot.lane.b32.xlu0 %v2533, 64
        %v2539 = vpop.permute.xlu0 %2538
        %2540 = vrot.lane.b32.xlu0 %v2535, 64
        %v2541 = vpop.permute.xlu0 %2540
        %v2544 = vsel %vm972, %v2500, %v2523
        %v2547 = vsel %vm972, %v2501, %v2525
        %v2550 = vsel %vm972, %v2502, %v2527
        %v2552 = vsel %vm1170, %v2544, %v2537
        %v2554 = vsel %vm1170, %v2547, %v2539
        %v2556 = vsel %vm1170, %v2550, %v2541
        %v2557 = vld [vmem:[%s29] sm:$0xf]
        %v2558 = vld [vmem:[%s29 + $0x4] sm:$0xf]
        %v2559 = vld [vmem:[%s29 + $0x8] sm:$0xf]
        %v2560 = vld [vmem:[%s29 + $0xc] sm:$0xf]
        %v2561 = vld [vmem:[%s29 + $0x10] sm:$0xf]
        %v2562 = vld [vmem:[%s29 + $0x14] sm:$0xf]
        %v2563 = vld [vmem:[%s29 + $0x18] sm:$0xf]
        %v2564 = vld [vmem:[%s29 + $0x1c] sm:$0xf]
        %v2565 = vld [vmem:[%s29 + $0x20] sm:$0xf]
        %v2566 = vld [vmem:[%s29 + $0x24] sm:$0xf]
        %v2567 = vld [vmem:[%s29 + $0x28] sm:$0xf]
        %v2568 = vld [vmem:[%s29 + $0x2c] sm:$0xf]
        %v2569 = vld [vmem:[%s31] sm:$0x1]
        %v2571 = vperm.slane %v2569, 0
        %v2573 = vshrl.u32 %v2552, 16
        %v2575 = vrot.slane %v2573, 3
        %v2576 = vshll.u32 %v2552, 16
        %v2578 = vrot.slane %v2576, 4
        %v2579 = vor.u32 %v2575, %v2578
        %v2580 = vshrl.u32 %v2554, 16
        %v2582 = vrot.slane %v2580, 3
        %v2583 = vshll.u32 %v2554, 16
        %v2585 = vrot.slane %v2583, 4
        %v2586 = vor.u32 %v2582, %v2585
        %v2587 = vsel %vm2181, %v2579, %v2586
        %v2588 = vshrl.u32 %v2556, 16
        %v2590 = vrot.slane %v2588, 3
        %v2591 = vshll.u32 %v2556, 16
        %v2593 = vrot.slane %v2591, 4
        %v2594 = vor.u32 %v2590, %v2593
        %v2595 = vsel %vm2181, %v2586, %v2594
        %v2608 = vunpack.c.l.b16 %v2557
        %v2609 = vunpack.c.l.b16 %v2558
        %v2610 = vunpack.c.l.b16 %v2559
        %v2611 = vunpack.c.l.b16 %v2560
        %v2612 = vunpack.c.l.b16 %v2561
        %v2613 = vunpack.c.l.b16 %v2562
        %v2614 = vunpack.c.l.b16 %v2563
        %v2615 = vunpack.c.l.b16 %v2564
        %v2616 = vunpack.c.l.b16 %v2565
        %v2617 = vunpack.c.l.b16 %v2566
        %v2618 = vunpack.c.l.b16 %v2567
        %v2619 = vunpack.c.l.b16 %v2568
        %v2620 = vpack.c.b16 %v2609, %v2608
        %v2621 = vpack.c.b16 %v2611, %v2610
        %v2622 = vpack.c.b16 %v2613, %v2612
        %v2623 = vpack.c.b16 %v2615, %v2614
        %v2624 = vpack.c.b16 %v2617, %v2616
        %v2625 = vpack.c.b16 %v2619, %v2618
        %v2633 = vsel %vm1181, %v2587, 0
        %v2636 = vsel %vm1181, %v2595, 0
        %2638 = vmatpush.bf16.msra.mxu0 0
        %2639 = vmatpush.bf16.msra.mxu0 0
        %2640 = vmatpush.bf16.msra.mxu0 %v2625
        %2641 = vmatpush.bf16.msra.mxu0 %v2624
        %2642 = vmatpush.bf16.msra.mxu0 %v2623
        %2643 = vmatpush.bf16.msra.mxu0 %v2622
        %2644 = vmatpush.bf16.msra.mxu0 %v2621
        %2645 = vmatpush.bf16.msra.mxu0 %v2620
        %2646 = vmatmul.bf16.gmra.mxu0 %v2633
        %v2647 = vpop.f32.mrf.mxu0
        %v2648 = vadd.f32 %v2571, %v2647
        %v2649 = vpop.f32.mrf.mxu0
        %v2650 = vadd.f32 %v2571, %v2649
        %2651 = vmatmul.bf16.gmra.mxu0 %v2636
        %v2652 = vpop.f32.mrf.mxu0
        %v2653 = vadd.f32 %v2571, %v2652
        %v2654 = vpop.f32.mrf.mxu0
        %v2655 = vadd.f32 %v2571, %v2654
        %2656 = vdwg.mxu0
        %v2657 = vmax.f32 %v2648, 0.0
        %v2658 = vmax.f32 %v2650, 0.0
        %v2659 = vmax.f32 %v2653, 0.0
        %v2660 = vmax.f32 %v2655, 0.0
        %v2661 = vld [vmem:[%s33] sm:$0x1]
        %v2663 = vperm.slane %v2661, 0
        %v2665 = vmul.f32 %v2657, %v2663
        %v2666 = vmul.f32 %v2658, %v2663
        %v2667 = vmul.f32 %v2659, %v2663
        %v2668 = vmul.f32 %v2660, %v2663
        %v2669 = vld [vmem:[%s35] sm:$0x1]
        %v2671 = vperm.slane %v2669, 0
        %v2673 = vadd.f32 %v2665, %v2671
        %v2674 = vadd.f32 %v2666, %v2671
        %v2675 = vadd.f32 %v2667, %v2671
        %v2676 = vadd.f32 %v2668, %v2671
        %2677 = vst.msk [vmem:[#allocation7] sm:$0xff] %vm1170, %v2673
        %2678 = vst.msk [vmem:[#allocation7 + $0x8] sm:$0xff] %vm1170, %v2674
        %2679 = vst.msk [vmem:[#allocation7 + $0x10] sm:$0xff] %vm1170, %v2675
        %2680 = vst.msk [vmem:[#allocation7 + $0x18] sm:$0xff] %vm1170, %v2676
        %v2681 = vld [vmem:[#allocation7] ss:$2 sm:$0xff]
        %s2682 = scalar_lea.vmem [#allocation7], 16
        %v2683 = vld [vmem:[%s2682] ss:$2 sm:$0xff]
        %s2684 = scalar_lea.vmem [#allocation7], 1
        %v2685 = vld [vmem:[%s2684] ss:$2 sm:$0xff]
        %s2686 = scalar_lea.vmem [#allocation7], 17
        %v2687 = vld [vmem:[%s2686] ss:$2 sm:$0xff]
        %v2688 = vadd.f32 %v2681, %v2685
        %v2689 = vadd.f32 %v2683, %v2687
        %v2690 = vmul.f32 %v2688, 0.5
        %v2691 = vmul.f32 %v2689, 0.5
        %2692 = vst.msk [vmem:[#allocation8 + $0x8] sm:$0xff] %vm1170, %v2690
        %2693 = vst.msk [vmem:[#allocation8 + $0x10] sm:$0xff] %vm1170, %v2691
        %v2694 = vld [vmem:[#allocation8] sm:$0xff]
        %v2695 = vld [vmem:[#allocation8 + $0x8] sm:$0xff]
        %v2696 = vld [vmem:[#allocation8 + $0x10] sm:$0xff]
        %v2697 = vld [vmem:[#allocation8 + $0x18] sm:$0x1]
        %v2698 = vpack.c.bf16 %v2694, %v2694
        %v2699 = vpack.c.bf16 %v2695, %v2695
        %v2700 = vpack.c.bf16 %v2696, %v2696
        %v2701 = vpack.c.bf16 %v2697, %v2697
        %v2705 = vunpack.c.l.b16 %v2698
        %v2706 = vunpack.c.l.b16 %v2699
        %v2707 = vunpack.c.l.b16 %v2700
        %v2708 = vpack.c.b16 %v2706, %v2705
        %v2709 = vpack.c.b16 %v2707, %v2707
        %v2710 = vpack.c.b16 %v2707, %v2706
        %v2712 = vshrl.u32 %v2710, 16
        %v2714 = vrot.slane %v2712, 4
        %v2715 = vshll.u32 %v2710, 16
        %v2717 = vrot.slane %v2715, 5
        %v2718 = vor.u32 %v2714, %v2717
        %2719 = vrot.lane.b32.xlu0 %v2718, 64
        %v2720 = vpop.permute.xlu0 %2719
        %v2722 = vunpack.c.l.b16 %v2701
        %v2723 = vpack.c.b16 %v2722, %v2722
        %v2724 = vrot.slane %v2710, 5
        %v2725 = vrot.slane %v2723, 5
        %v2726 = vsel %vm1078, %v2724, %v2725
        %v2729 = vsel %vm1170, %v2708, %v2720
        %v2731 = vsel %vm1170, %v2709, %v2720
        %v2732 = vld [vmem:[%s37] sm:$0xf]
        %v2733 = vld [vmem:[%s37 + $0x4] sm:$0xf]
        %v2734 = vld [vmem:[%s37 + $0x8] sm:$0xf]
        %v2735 = vld [vmem:[%s37 + $0xc] sm:$0xf]
        %v2736 = vld [vmem:[%s37 + $0x10] sm:$0xf]
        %v2737 = vld [vmem:[%s37 + $0x14] sm:$0xf]
        %v2738 = vld [vmem:[%s37 + $0x18] sm:$0xf]
        %v2739 = vld [vmem:[%s37 + $0x1c] sm:$0xf]
        %v2740 = vld [vmem:[%s37 + $0x20] sm:$0xf]
        %v2741 = vld [vmem:[%s37 + $0x24] sm:$0xf]
        %v2742 = vld [vmem:[%s37 + $0x28] sm:$0xf]
        %v2743 = vld [vmem:[%s37 + $0x2c] sm:$0xf]
        %v2744 = vld [vmem:[%s37 + $0x30] sm:$0xf]
        %v2745 = vld [vmem:[%s37 + $0x34] sm:$0xf]
        %v2746 = vld [vmem:[%s37 + $0x38] sm:$0xf]
        %v2747 = vld [vmem:[%s37 + $0x3c] sm:$0xf]
        %v2748 = vld [vmem:[%s37 + $0x40] sm:$0xf]
        %v2749 = vld [vmem:[%s37 + $0x44] sm:$0xf]
        %v2750 = vld [vmem:[%s37 + $0x48] sm:$0xf]
        %v2751 = vld [vmem:[%s37 + $0x4c] sm:$0xf]
        %v2752 = vld [vmem:[%s37 + $0x50] sm:$0xf]
        %v2753 = vld [vmem:[%s37 + $0x54] sm:$0xf]
        %v2754 = vld [vmem:[%s37 + $0x58] sm:$0xf]
        %v2755 = vld [vmem:[%s37 + $0x5c] sm:$0xf]
        %v2756 = vld [vmem:[%s39] sm:$0x1]
        %v2758 = vperm.slane %v2756, 0
        %v2760 = vshrl.u32 %v2729, 16
        %v2762 = vrot.slane %v2760, 3
        %v2763 = vshll.u32 %v2729, 16
        %v2765 = vrot.slane %v2763, 4
        %v2766 = vor.u32 %v2762, %v2765
        %v2767 = vshrl.u32 %v2731, 16
        %v2769 = vrot.slane %v2767, 3
        %v2770 = vshll.u32 %v2731, 16
        %v2772 = vrot.slane %v2770, 4
        %v2773 = vor.u32 %v2769, %v2772
        %v2774 = vsel %vm2181, %v2766, %v2773
        %v2776 = vshrl.u32 %v2724, 16
        %v2778 = vrot.slane %v2776, 3
        %v2779 = vshll.u32 %v2724, 16
        %v2781 = vrot.slane %v2779, 4
        %v2782 = vor.u32 %v2778, %v2781
        %v2784 = vshrl.u32 %v2726, 16
        %v2786 = vrot.slane %v2784, 3
        %v2787 = vshll.u32 %v2726, 16
        %v2789 = vrot.slane %v2787, 4
        %v2790 = vor.u32 %v2786, %v2789
        %v2791 = vsel %vm2181, %v2782, %v2790
        %v2817 = vunpack.c.l.b16 %v2732
        %v2818 = vunpack.c.l.b16 %v2733
        %v2819 = vunpack.c.l.b16 %v2734
        %v2820 = vunpack.c.l.b16 %v2735
        %v2821 = vunpack.c.l.b16 %v2736
        %v2822 = vunpack.c.l.b16 %v2737
        %v2823 = vunpack.c.l.b16 %v2738
        %v2824 = vunpack.c.l.b16 %v2739
        %v2825 = vunpack.c.l.b16 %v2740
        %v2826 = vunpack.c.l.b16 %v2741
        %v2827 = vunpack.c.l.b16 %v2742
        %v2828 = vunpack.c.l.b16 %v2743
        %v2829 = vunpack.c.l.b16 %v2744
        %v2830 = vunpack.c.l.b16 %v2745
        %v2831 = vunpack.c.l.b16 %v2746
        %v2832 = vunpack.c.l.b16 %v2747
        %v2833 = vunpack.c.l.b16 %v2748
        %v2834 = vunpack.c.l.b16 %v2749
        %v2835 = vunpack.c.l.b16 %v2750
        %v2836 = vunpack.c.l.b16 %v2751
        %v2837 = vunpack.c.l.b16 %v2752
        %v2838 = vunpack.c.l.b16 %v2753
        %v2839 = vunpack.c.l.b16 %v2754
        %v2840 = vunpack.c.l.b16 %v2755
        %v2841 = vpack.c.b16 %v2818, %v2817
        %v2842 = vpack.c.b16 %v2820, %v2819
        %v2843 = vpack.c.b16 %v2822, %v2821
        %v2844 = vpack.c.b16 %v2824, %v2823
        %v2845 = vpack.c.b16 %v2826, %v2825
        %v2846 = vpack.c.b16 %v2828, %v2827
        %v2847 = vpack.c.b16 %v2830, %v2829
        %v2848 = vpack.c.b16 %v2832, %v2831
        %v2849 = vpack.c.b16 %v2834, %v2833
        %v2850 = vpack.c.b16 %v2836, %v2835
        %v2851 = vpack.c.b16 %v2838, %v2837
        %v2852 = vpack.c.b16 %v2840, %v2839
        %v2866 = vsel %vm1170, %v2791, 0
        %2868 = vmatpush.bf16.msra.mxu0 %v2848
        %2869 = vmatpush.bf16.msra.mxu0 %v2847
        %2870 = vmatpush.bf16.msra.mxu0 %v2846
        %2871 = vmatpush.bf16.msra.mxu0 %v2845
        %2872 = vmatpush.bf16.msra.mxu0 %v2844
        %2873 = vmatpush.bf16.msra.mxu0 %v2843
        %2874 = vmatpush.bf16.msra.mxu0 %v2842
        %2875 = vmatpush.bf16.msra.mxu0 %v2841
        %2876 = vmatmul.bf16.gmra.mxu0 %v2774
        %v2877 = vpop.f32.mrf.mxu0
        %v2878 = vadd.f32 %v2758, %v2877
        %v2879 = vpop.f32.mrf.mxu0
        %v2880 = vadd.f32 %v2758, %v2879
        %2881 = vdwg.mxu0
        %2882 = vmatpush.bf16.msra.mxu0 0
        %2883 = vmatpush.bf16.msra.mxu0 0
        %2884 = vmatpush.bf16.msra.mxu0 0
        %2885 = vmatpush.bf16.msra.mxu0 0
        %2886 = vmatpush.bf16.msra.mxu0 %v2852
        %2887 = vmatpush.bf16.msra.mxu0 %v2851
        %2888 = vmatpush.bf16.msra.mxu0 %v2850
        %2889 = vmatpush.bf16.msra.mxu0 %v2849
        %2890 = vmatmul.bf16.gmra.mxu0 %v2866
        %v2891 = vpop.f32.mrf.mxu0
        %v2892 = vadd.f32 %v2878, %v2891
        %v2893 = vpop.f32.mrf.mxu0
        %v2894 = vadd.f32 %v2880, %v2893
        %2895 = vdwg.mxu0
        %v2896 = vmax.f32 %v2892, 0.0
        %v2897 = vmax.f32 %v2894, 0.0
        %v2898 = vld [vmem:[%s41] sm:$0x1]
        %v2900 = vperm.slane %v2898, 0
        %v2902 = vmul.f32 %v2896, %v2900
        %v2903 = vmul.f32 %v2897, %v2900
        %v2904 = vld [vmem:[%s43] sm:$0x1]
        %v2906 = vperm.slane %v2904, 0
        %v2908 = vadd.f32 %v2902, %v2906
        %v2909 = vadd.f32 %v2903, %v2906
        %2910 = vst [vmem:[#allocation9] sm:$0xff] %v2908
        %2911 = vst [vmem:[#allocation9 + $0x8] sm:$0xff] %v2909
        %v2912 = vld [vmem:[#allocation9] ss:$2 sm:$0xff]
        %s2913 = scalar_lea.vmem [#allocation9], 1
        %v2914 = vld [vmem:[%s2913] ss:$2 sm:$0xff]
        %v2915 = vadd.f32 %v2912, %v2914
        %v2916 = vmul.f32 %v2915, 0.5
        %2917 = vst [vmem:[#allocation10 + $0x8] sm:$0xff] %v2916
        %v2918 = vld [vmem:[#allocation10] sm:$0xff]
        %v2919 = vld [vmem:[#allocation10 + $0x8] sm:$0xff]
        %v2920 = vld [vmem:[#allocation10 + $0x10] sm:$0x1]
        %v2921 = vpack.c.bf16 %v2918, %v2918
        %v2922 = vpack.c.bf16 %v2919, %v2919
        %v2923 = vpack.c.bf16 %v2920, %v2920
        %v2926 = vunpack.c.l.b16 %v2921
        %v2927 = vunpack.c.l.b16 %v2922
        %v2928 = vpack.c.b16 %v2927, %v2926
        %v2929 = vpack.c.b16 %v2927, %v2927
        %v2931 = vshrl.u32 %v2929, 16
        %v2933 = vrot.slane %v2931, 4
        %v2934 = vshll.u32 %v2929, 16
        %v2936 = vrot.slane %v2934, 5
        %v2937 = vor.u32 %v2933, %v2936
        %v2939 = vunpack.c.l.b16 %v2923
        %v2940 = vpack.c.b16 %v2939, %v2927
        %v2941 = vrot.slane %v2940, 5
        %v2942 = vld [vmem:[%s45] sm:$0xf]
        %v2943 = vld [vmem:[%s45 + $0x4] sm:$0xf]
        %v2944 = vld [vmem:[%s45 + $0x8] sm:$0xf]
        %v2945 = vld [vmem:[%s45 + $0xc] sm:$0xf]
        %v2946 = vld [vmem:[%s45 + $0x10] sm:$0xf]
        %v2947 = vld [vmem:[%s45 + $0x14] sm:$0xf]
        %v2948 = vld [vmem:[%s45 + $0x18] sm:$0xf]
        %v2949 = vld [vmem:[%s45 + $0x1c] sm:$0xf]
        %v2950 = vld [vmem:[%s45 + $0x20] sm:$0xf]
        %v2951 = vld [vmem:[%s45 + $0x24] sm:$0xf]
        %v2952 = vld [vmem:[%s45 + $0x28] sm:$0xf]
        %v2953 = vld [vmem:[%s45 + $0x2c] sm:$0xf]
        %v2954 = vld [vmem:[%s45 + $0x30] sm:$0xf]
        %v2955 = vld [vmem:[%s45 + $0x34] sm:$0xf]
        %v2956 = vld [vmem:[%s45 + $0x38] sm:$0xf]
        %v2957 = vld [vmem:[%s45 + $0x3c] sm:$0xf]
        %v2958 = vld [vmem:[%s45 + $0x40] sm:$0xf]
        %v2959 = vld [vmem:[%s45 + $0x44] sm:$0xf]
        %v2960 = vld [vmem:[%s45 + $0x48] sm:$0xf]
        %v2961 = vld [vmem:[%s45 + $0x4c] sm:$0xf]
        %v2962 = vld [vmem:[%s45 + $0x50] sm:$0xf]
        %v2963 = vld [vmem:[%s45 + $0x54] sm:$0xf]
        %v2964 = vld [vmem:[%s45 + $0x58] sm:$0xf]
        %v2965 = vld [vmem:[%s45 + $0x5c] sm:$0xf]
        %v2966 = vld [vmem:[%s45 + $0x60] sm:$0xf]
        %v2967 = vld [vmem:[%s45 + $0x64] sm:$0xf]
        %v2968 = vld [vmem:[%s45 + $0x68] sm:$0xf]
        %v2969 = vld [vmem:[%s45 + $0x6c] sm:$0xf]
        %v2970 = vld [vmem:[%s45 + $0x70] sm:$0xf]
        %v2971 = vld [vmem:[%s45 + $0x74] sm:$0xf]
        %v2972 = vld [vmem:[%s45 + $0x78] sm:$0xf]
        %v2973 = vld [vmem:[%s45 + $0x7c] sm:$0xf]
        %v2974 = vld [vmem:[%s45 + $0x80] sm:$0xf]
        %v2975 = vld [vmem:[%s45 + $0x84] sm:$0xf]
        %v2976 = vld [vmem:[%s45 + $0x88] sm:$0xf]
        %v2977 = vld [vmem:[%s45 + $0x8c] sm:$0xf]
        %v2978 = vld [vmem:[%s45 + $0x90] sm:$0xf]
        %v2979 = vld [vmem:[%s45 + $0x94] sm:$0xf]
        %v2980 = vld [vmem:[%s45 + $0x98] sm:$0xf]
        %v2981 = vld [vmem:[%s45 + $0x9c] sm:$0xf]
        %v2982 = vld [vmem:[%s45 + $0xa0] sm:$0xf]
        %v2983 = vld [vmem:[%s45 + $0xa4] sm:$0xf]
        %v2984 = vld [vmem:[%s45 + $0xa8] sm:$0xf]
        %v2985 = vld [vmem:[%s45 + $0xac] sm:$0xf]
        %v2986 = vld [vmem:[%s45 + $0xb0] sm:$0xf]
        %v2987 = vld [vmem:[%s45 + $0xb4] sm:$0xf]
        %v2988 = vld [vmem:[%s45 + $0xb8] sm:$0xf]
        %v2989 = vld [vmem:[%s45 + $0xbc] sm:$0xf]
        %v2990 = vld [vmem:[%s47] sm:$0x1]
        %v2992 = vperm.slane %v2990, 0
        %v2995 = vshrl.u32 %v2928, 16
        %v2997 = vrot.slane %v2995, 3
        %v2998 = vshll.u32 %v2928, 16
        %v3000 = vrot.slane %v2998, 4
        %v3001 = vor.u32 %v2997, %v3000
        %v3003 = vshrl.u32 %v2937, 16
        %v3005 = vrot.slane %v3003, 3
        %v3006 = vshll.u32 %v2937, 16
        %v3008 = vrot.slane %v3006, 4
        %v3009 = vor.u32 %v3005, %v3008
        %v3011 = vshrl.u32 %v2941, 16
        %v3013 = vrot.slane %v3011, 3
        %v3014 = vshll.u32 %v2941, 16
        %v3016 = vrot.slane %v3014, 4
        %v3017 = vor.u32 %v3013, %v3016
        %v3069 = vunpack.c.l.b16 %v2942
        %v3070 = vunpack.c.l.b16 %v2943
        %v3071 = vunpack.c.l.b16 %v2944
        %v3072 = vunpack.c.l.b16 %v2945
        %v3073 = vunpack.c.l.b16 %v2946
        %v3074 = vunpack.c.l.b16 %v2947
        %v3075 = vunpack.c.l.b16 %v2948
        %v3076 = vunpack.c.l.b16 %v2949
        %v3077 = vunpack.c.l.b16 %v2950
        %v3078 = vunpack.c.l.b16 %v2951
        %v3079 = vunpack.c.l.b16 %v2952
        %v3080 = vunpack.c.l.b16 %v2953
        %v3081 = vunpack.c.l.b16 %v2954
        %v3082 = vunpack.c.l.b16 %v2955
        %v3083 = vunpack.c.l.b16 %v2956
        %v3084 = vunpack.c.l.b16 %v2957
        %v3085 = vunpack.c.l.b16 %v2958
        %v3086 = vunpack.c.l.b16 %v2959
        %v3087 = vunpack.c.l.b16 %v2960
        %v3088 = vunpack.c.l.b16 %v2961
        %v3089 = vunpack.c.l.b16 %v2962
        %v3090 = vunpack.c.l.b16 %v2963
        %v3091 = vunpack.c.l.b16 %v2964
        %v3092 = vunpack.c.l.b16 %v2965
        %v3093 = vunpack.c.l.b16 %v2966
        %v3094 = vunpack.c.l.b16 %v2967
        %v3095 = vunpack.c.l.b16 %v2968
        %v3096 = vunpack.c.l.b16 %v2969
        %v3097 = vunpack.c.l.b16 %v2970
        %v3098 = vunpack.c.l.b16 %v2971
        %v3099 = vunpack.c.l.b16 %v2972
        %v3100 = vunpack.c.l.b16 %v2973
        %v3101 = vunpack.c.l.b16 %v2974
        %v3102 = vunpack.c.l.b16 %v2975
        %v3103 = vunpack.c.l.b16 %v2976
        %v3104 = vunpack.c.l.b16 %v2977
        %v3105 = vunpack.c.l.b16 %v2978
        %v3106 = vunpack.c.l.b16 %v2979
        %v3107 = vunpack.c.l.b16 %v2980
        %v3108 = vunpack.c.l.b16 %v2981
        %v3109 = vunpack.c.l.b16 %v2982
        %v3110 = vunpack.c.l.b16 %v2983
        %v3111 = vunpack.c.l.b16 %v2984
        %v3112 = vunpack.c.l.b16 %v2985
        %v3113 = vunpack.c.l.b16 %v2986
        %v3114 = vunpack.c.l.b16 %v2987
        %v3115 = vunpack.c.l.b16 %v2988
        %v3116 = vunpack.c.l.b16 %v2989
        %v3117 = vpack.c.b16 %v3070, %v3069
        %v3118 = vpack.c.b16 %v3072, %v3071
        %v3119 = vpack.c.b16 %v3074, %v3073
        %v3120 = vpack.c.b16 %v3076, %v3075
        %v3121 = vpack.c.b16 %v3078, %v3077
        %v3122 = vpack.c.b16 %v3080, %v3079
        %v3123 = vpack.c.b16 %v3082, %v3081
        %v3124 = vpack.c.b16 %v3084, %v3083
        %v3125 = vpack.c.b16 %v3086, %v3085
        %v3126 = vpack.c.b16 %v3088, %v3087
        %v3127 = vpack.c.b16 %v3090, %v3089
        %v3128 = vpack.c.b16 %v3092, %v3091
        %v3129 = vpack.c.b16 %v3094, %v3093
        %v3130 = vpack.c.b16 %v3096, %v3095
        %v3131 = vpack.c.b16 %v3098, %v3097
        %v3132 = vpack.c.b16 %v3100, %v3099
        %v3133 = vpack.c.b16 %v3102, %v3101
        %v3134 = vpack.c.b16 %v3104, %v3103
        %v3135 = vpack.c.b16 %v3106, %v3105
        %v3136 = vpack.c.b16 %v3108, %v3107
        %v3137 = vpack.c.b16 %v3110, %v3109
        %v3138 = vpack.c.b16 %v3112, %v3111
        %v3139 = vpack.c.b16 %v3114, %v3113
        %v3140 = vpack.c.b16 %v3116, %v3115
        %3165 = vmatpush.bf16.msra.mxu0 %v3124
        %3166 = vmatpush.bf16.msra.mxu0 %v3123
        %3167 = vmatpush.bf16.msra.mxu0 %v3122
        %3168 = vmatpush.bf16.msra.mxu0 %v3121
        %3169 = vmatpush.bf16.msra.mxu0 %v3120
        %3170 = vmatpush.bf16.msra.mxu0 %v3119
        %3171 = vmatpush.bf16.msra.mxu0 %v3118
        %3172 = vmatpush.bf16.msra.mxu0 %v3117
        %3173 = vmatmul.bf16.gmra.mxu0 %v3001
        %v3174 = vpop.f32.mrf.mxu0
        %v3175 = vadd.f32 %v2992, %v3174
        %v3176 = vpop.f32.mrf.mxu0
        %3177 = vdwg.mxu0
        %3178 = vmatpush.bf16.msra.mxu0 %v3132
        %3179 = vmatpush.bf16.msra.mxu0 %v3131
        %3180 = vmatpush.bf16.msra.mxu0 %v3130
        %3181 = vmatpush.bf16.msra.mxu0 %v3129
        %3182 = vmatpush.bf16.msra.mxu0 %v3128
        %3183 = vmatpush.bf16.msra.mxu0 %v3127
        %3184 = vmatpush.bf16.msra.mxu0 %v3126
        %3185 = vmatpush.bf16.msra.mxu0 %v3125
        %3186 = vmatmul.bf16.gmra.mxu0 %v3009
        %v3187 = vpop.f32.mrf.mxu0
        %v3188 = vadd.f32 %v3175, %v3187
        %v3189 = vpop.f32.mrf.mxu0
        %3190 = vdwg.mxu0
        %3191 = vmatpush.bf16.msra.mxu0 %v3140
        %3192 = vmatpush.bf16.msra.mxu0 %v3139
        %3193 = vmatpush.bf16.msra.mxu0 %v3138
        %3194 = vmatpush.bf16.msra.mxu0 %v3137
        %3195 = vmatpush.bf16.msra.mxu0 %v3136
        %3196 = vmatpush.bf16.msra.mxu0 %v3135
        %3197 = vmatpush.bf16.msra.mxu0 %v3134
        %3198 = vmatpush.bf16.msra.mxu0 %v3133
        %3199 = vmatmul.bf16.gmra.mxu0 %v3017
        %v3200 = vpop.f32.mrf.mxu0
        %v3201 = vadd.f32 %v3188, %v3200
        %v3202 = vpop.f32.mrf.mxu0
        %3203 = vdwg.mxu0
        %v3204 = vmax.f32 %v3201, 0.0
        %v3205 = vld [vmem:[%s49] sm:$0x1]
        %v3207 = vperm.slane %v3205, 0
        %v3209 = vmul.f32 %v3204, %v3207
        %v3210 = vld [vmem:[%s51] sm:$0x1]
        %v3212 = vperm.slane %v3210, 0
        %v3214 = vadd.f32 %v3209, %v3212
        %3215 = vst [vmem:[#allocation11] sm:$0xff] %v3214
        %v3216 = vld [vmem:[#allocation11] ss:$2 sm:$0xf]
        %s3217 = scalar_lea.vmem [#allocation11], 1
        %v3218 = vld [vmem:[%s3217] ss:$2 sm:$0xf]
        %v3219 = vadd.f32 %v3216, %v3218
        %v3220 = vmul.f32 %v3219, 0.5
        %v3221 = vpack.c.bf16 %v3220, %v3220
        %v3222 = vld [vmem:[%s57] sm:$0xf]
        %v3223 = vld [vmem:[%s57 + $0x4] sm:$0xf]
        %v3224 = vld [vmem:[%s57 + $0x8] sm:$0xf]
        %v3225 = vld [vmem:[%s57 + $0xc] sm:$0xf]
        %v3226 = vld [vmem:[%s57 + $0x10] sm:$0xf]
        %v3227 = vld [vmem:[%s57 + $0x14] sm:$0xf]
        %v3228 = vld [vmem:[%s57 + $0x18] sm:$0xf]
        %v3229 = vld [vmem:[%s57 + $0x1c] sm:$0xf]
        %v3230 = vld [vmem:[%s57 + $0x20] sm:$0xf]
        %v3231 = vld [vmem:[%s57 + $0x24] sm:$0xf]
        %v3232 = vld [vmem:[%s57 + $0x28] sm:$0xf]
        %v3233 = vld [vmem:[%s57 + $0x2c] sm:$0xf]
        %v3234 = vld [vmem:[%s57 + $0x30] sm:$0xf]
        %v3235 = vld [vmem:[%s57 + $0x34] sm:$0xf]
        %v3236 = vld [vmem:[%s57 + $0x38] sm:$0xf]
        %v3237 = vld [vmem:[%s57 + $0x3c] sm:$0xf]
        %v3238 = vld [vmem:[%s59] sm:$0x1]
        %v3240 = vperm.slane %v3238, 0
        %v3258 = vunpack.c.l.b16 %v3222
        %v3259 = vunpack.c.l.b16 %v3223
        %v3260 = vunpack.c.l.b16 %v3224
        %v3261 = vunpack.c.l.b16 %v3225
        %v3262 = vunpack.c.l.b16 %v3226
        %v3263 = vunpack.c.l.b16 %v3227
        %v3264 = vunpack.c.l.b16 %v3228
        %v3265 = vunpack.c.l.b16 %v3229
        %v3266 = vunpack.c.l.b16 %v3230
        %v3267 = vunpack.c.l.b16 %v3231
        %v3268 = vunpack.c.l.b16 %v3232
        %v3269 = vunpack.c.l.b16 %v3233
        %v3270 = vunpack.c.l.b16 %v3234
        %v3271 = vunpack.c.l.b16 %v3235
        %v3272 = vunpack.c.l.b16 %v3236
        %v3273 = vunpack.c.l.b16 %v3237
        %v3274 = vpack.c.b16 %v3259, %v3258
        %v3275 = vpack.c.b16 %v3261, %v3260
        %v3276 = vpack.c.b16 %v3263, %v3262
        %v3277 = vpack.c.b16 %v3265, %v3264
        %v3278 = vpack.c.b16 %v3267, %v3266
        %v3279 = vpack.c.b16 %v3269, %v3268
        %v3280 = vpack.c.b16 %v3271, %v3270
        %v3281 = vpack.c.b16 %v3273, %v3272
        %3290 = vmatpush.bf16.msra.mxu0 %v3281
        %3291 = vmatpush.bf16.msra.mxu0 %v3280
        %3292 = vmatpush.bf16.msra.mxu0 %v3279
        %3293 = vmatpush.bf16.msra.mxu0 %v3278
        %3294 = vmatpush.bf16.msra.mxu0 %v3277
        %3295 = vmatpush.bf16.msra.mxu0 %v3276
        %3296 = vmatpush.bf16.msra.mxu0 %v3275
        %3297 = vmatpush.bf16.msra.mxu0 %v3274
        %3298 = vmatmul.bf16.gmra.mxu0 %v3221
        %v3299 = vpop.f32.mrf.mxu0
        %v3300 = vadd.f32 %v3240, %v3299
        %v3301 = vpop.f32.mrf.mxu0
        %3302 = vdwg.mxu0
        %v3303 = vtanh.pop %v3300
        %s3304 = sld [smem:[#allocation13 + %s83]]
        %v3305 = vlaneseq
        %v3306 = vshrl.u32 %v3305, 7
        %v3307 = vstv %s3304
        %vm3308 = vcmp.lt.s32.totalorder %v3306, %v3307
        %v3309 = vsel %vm3308, 1, 0
        %v3310 = vcvt.s32.f32 %v3309
        %v3311 = vmul.f32 %v3303, %v3310
        %vm3312 = vcmask 519168
        %v3313 = vsel %vm3312, %v3311, 0.0
        %v3314 = vrot.slane %v3313, 4
        %v3315 = vadd.f32 %v3313, %v3314
        %v3316 = vrot.slane %v3315, 2
        %v3317 = vadd.f32 %v3315, %v3316
        %v3318 = vrot.slane %v3317, 1
        %v3319 = vadd.f32 %v3317, %v3318
        %s3320 = scvt.s32.f32 %s3304
        %v3321 = vstv %s3320
        %v3322 = vrcp.pop %v3321
        %v3323 = vmul.f32 %v3321, %v3322
        %v3324 = vsub.f32 1.0, %v3323
        %v3325 = vmul.f32 %v3322, %v3324
        %v3326 = vadd.f32 %v3322, %v3325
        %vm3327 = vweird.f32 %v3321
        %vm3328 = vweird.f32 %v3322
        %vm3329 = vmor %vm3327, %vm3328
        %v3330 = vsel %vm3329, %v3322, %v3326
        %v3331 = vand.u32 2147483647, %v3321
        %vm3332 = vcmp.eq.f32.partialorder %v3331, 8.507059e+37
        %v3333 = vand.u32 %v3321, 2147483648
        %v3334 = vor.u32 1.1754944e-38, %v3333
        %v3335 = vsel %vm3332, %v3334, %v3330
        %v3336 = vmul.f32 %v3319, %v3335
        %vm3337 = vcmask 516096
        %3338 = vst.msk [vmem:[%s904] sm:$0x1] %vm3337, %v3336
        %s3339 = sand.u32 %s705, 1
        %s3340 = scalar_lea.sflag [#allocation15], %s3339
        %s3341 = sand.u32 %s705, 1
        %s3342 = scalar_lea.vmem [#allocation14], %s3341
        // Predicated region
        $region141: #{tpu_custom_call.1} parent=135 // pred_check
          %p3343 = pneg %p715
        $region142: #{tpu_custom_call.1} parent=135 // pred_check_branch
          %3345 = sbr.rel (%p3343) target = $region144
        $region143: #{tpu_custom_call.1} parent=135 // pred_region
          %3347 = vsyncadd %s3340, 0
          %s3348 = scalar_lea.hbm %s61, %s83
          %s3350 = sshll.u32 %s3342, 4
          %s3351 = int_to_ptr.vmem [resolvable:$true] %s3350
          %s3352 = sshll.u32 %s3348, 4
          %s3353 = int_to_ptr.hbm [resolvable:$true] %s3352
          %3355 = dma.vmem_to_hbm [thread:$0]  %s3351, 16, %s3353, %s3340
        $region144: #{tpu_custom_call.1} parent=135 // pred_fallthru
          _
      $region136: #{tpu_custom_call.1} parent=5 // pred_fallthru
        _
      %p3356 = scmp.le.s32.totalorder 2, %s78
      // Predicated region
      $region145: #{tpu_custom_call.1} parent=5 // pred_check
        %p3357 = pneg %p3356
      $region146: #{tpu_custom_call.1} parent=5 // pred_check_branch
        %3359 = sbr.rel (%p3357) target = $region148
      $region147: #{tpu_custom_call.1} parent=5 // pred_region
        %s3360 = ssub.s32 %s78, 2
        // Predicated region
        $region149: #{tpu_custom_call.1} parent=147 // pred_check
          %p3361 = pneg %p721
        $region150: #{tpu_custom_call.1} parent=147 // pred_check_branch
          %3363 = sbr.rel (%p3361) target = $region152
        $region151: #{tpu_custom_call.1} parent=147 // pred_region
          %s3364 = sand.u32 %s706, 1
          %s3365 = scalar_lea.sflag [#allocation15], %s3364
          %s3366 = sand.u32 %s706, 1
          %s3367 = scalar_lea.vmem [#allocation14], %s3366
          %3369 = dma.done %s3365, 16
        $region152: #{tpu_custom_call.1} parent=147 // pred_fallthru
          _
      $region148: #{tpu_custom_call.1} parent=5 // pred_fallthru
        _
    $region6: #{tpu_custom_call.1} parent=1 // loop_footer
      %s82 = sadd.s32 1, %s78
    $region7: #{tpu_custom_call.1} parent=1 // loop_footer_branch
      %77 = sbr.rel target = $region3
    $region8: #{tpu_custom_call.1} parent=1 // loop_exit
      _
    %3370 = vsyncpa [#allocation15], 1
    %s3371 = scalar_lea.sflag [#allocation15], 1
    %3372 = vsyncpa %s3371, 1

</llo_original>
